<compile_context>
chip_gen: v7x
topology: tpu7x:2x2x1
jax: 0.10.0
libtpu: 0.0.40
codegen_flags: <defaults>
</compile_context>

<pallas_src>
import jax
import jax.numpy as jnp
from jax.experimental import pallas as pl
from jax.experimental.pallas import tpu as pltpu

EPS = 1e-5
HI = jax.lax.Precision.HIGHEST

# Static GenSimple dims (channel=3, input_size=8, ngf=64).
D_IN = 8
C1, C2, C3, NC = 256, 128, 64, 3
H1, H2 = 6, 7                 # spatial size after layer 1 / layer 2
R1, R2 = H1 * H1, H2 * H2     # pixels per sample after layer 1 / layer 2
OBLK = 128                    # lane-dense output block per (kh3,kw3) tap (first 12 cols valid)


# ------------------------------ fused kernel --------------------------------

def _gen_simple_kernel(xa_ref, w1_ref, g1_ref, b1_ref,
                       s_ref, w2_ref, g2_ref, b2_ref,
                       w3_ref, g3_ref, b3_ref, fold_ref, tile_ref,
                       w4_ref, o_ref):
    rows1 = xa_ref.shape[0]       # B * 36
    rows2 = s_ref.shape[1]        # B * 49

    def bn_relu(h, g, b, n_rows):
        # training-mode BatchNorm (biased variance, single-pass stats) + ReLU
        s = jnp.sum(h, axis=0, keepdims=True)
        ss = jnp.sum(h * h, axis=0, keepdims=True)
        mean = s * (1.0 / n_rows)
        var = ss * (1.0 / n_rows) - mean * mean
        scale = g * jax.lax.rsqrt(var + EPS)
        shift = b - mean * scale
        return jnp.maximum(h * scale + shift, 0.0)

    # ---- layer 1: ConvT(8->256, k6, s6) on a 1x1 input; rows already (b,h,w) ----
    h1 = jnp.dot(xa_ref[...], w1_ref[...], preferred_element_type=jnp.float32)   # (B*36,256)
    a1 = bn_relu(h1, g1_ref[...], b1_ref[...], rows1)

    # ---- layer 2: ConvT(256->128, k2, s1) = 4 per-tap matmuls + row-scatter matmuls ----
    h2 = None
    for t in range(4):
        tap = jnp.dot(a1, w2_ref[t], preferred_element_type=jnp.float32)         # (B*36,128)
        c = jnp.dot(s_ref[t], tap, preferred_element_type=jnp.float32)           # (B*49,128)
        h2 = c if h2 is None else h2 + c
    a2 = bn_relu(h2, g2_ref[...], b2_ref[...], rows2)

    # ---- layer 3: ConvT(128->64, k2, s2) = per-pixel matmul, cols = (kh,kw,oc) ----
    h3 = jnp.dot(a2, w3_ref[...], preferred_element_type=jnp.float32)            # (B*49,256)

    # BN3: per-oc stats pooled over rows and the 4 (kh,kw) column groups (fold matrix)
    n3 = 4.0 * rows2
    s1 = jnp.dot(jnp.sum(h3, axis=0, keepdims=True), fold_ref[...],
                 preferred_element_type=jnp.float32)                             # (1,64)
    s2 = jnp.dot(jnp.sum(h3 * h3, axis=0, keepdims=True), fold_ref[...],
                 preferred_element_type=jnp.float32)                             # (1,64)
    mean = s1 * (1.0 / n3)
    var = s2 * (1.0 / n3) - mean * mean
    scale = g3_ref[...] * jax.lax.rsqrt(var + EPS)                               # (1,64)
    shift = b3_ref[...] - mean * scale
    scale_t = jnp.dot(scale, tile_ref[...], preferred_element_type=jnp.float32)  # (1,256)
    shift_t = jnp.dot(shift, tile_ref[...], preferred_element_type=jnp.float32)
    a3 = jnp.maximum(h3 * scale_t + shift_t, 0.0)                                # (B*49,256)

    # ---- layer 4: ConvT(64->3, k2, s2) + Tanh; block-diag weight -> lane-dense store ----
    o_ref[...] = jnp.tanh(jnp.dot(a3, w4_ref[...], preferred_element_type=jnp.float32))


# --------------------------- one-time weight packing -------------------------

def pack_params(params, batch_size):
    (W1, W2, W3, W4, g1, b1, g2, b2, g3, b3) = params
    B = batch_size
    f32 = jnp.float32

    # layer-1 RHS: rows = (h, w, d), cols = oc      -> (288, 256)
    w1p = jnp.transpose(W1, (2, 3, 0, 1)).reshape(R1 * D_IN, C1).astype(f32)

    # conv2 per-tap weights, t = kh*2+kw            -> (4, 256, 128)
    w2p = jnp.transpose(W2, (2, 3, 0, 1)).reshape(4, C1, C2).astype(f32)

    # 0/1 row-scatter matrices for the k2,s1 transposed conv: (b,i,j) -> (b,i+kh,j+kw)
    eye_b = jnp.eye(B, dtype=f32)
    s_taps = jnp.stack([
        jnp.kron(eye_b, jnp.kron(jnp.eye(H2, H1, k=-kh, dtype=f32),
                                 jnp.eye(H2, H1, k=-kw, dtype=f32)))
        for kh in range(2) for kw in range(2)], axis=0)            # (4, B*49, B*36)

    # conv3 per-pixel weight: cols = (kh, kw, oc)   -> (128, 256)
    w3p = jnp.transpose(W3, (0, 2, 3, 1)).reshape(C2, 4 * C3).astype(f32)

    # BN3 fold (sum the 4 column groups) / tile (broadcast back) helpers
    fold = jnp.tile(jnp.eye(C3, dtype=f32), (4, 1))                # (256, 64)
    tile = jnp.tile(jnp.eye(C3, dtype=f32), (1, 4))                # (64, 256)

    # conv4 weight: (64,12) zero-padded to 128-wide blocks, block-diag over the 4 taps
    w4p = jnp.transpose(W4, (0, 2, 3, 1)).reshape(C3, 4 * NC).astype(f32)
    w4pad = jnp.pad(w4p, ((0, 0), (0, OBLK - 4 * NC)))
    w4big = jnp.einsum('tu,cm->tcum', jnp.eye(4, dtype=f32), w4pad,
                       precision=HI).reshape(4 * C3, 4 * OBLK)     # (256, 512)

    return dict(
        w1=w1p, g1=g1.reshape(1, C1).astype(f32), b1=b1.reshape(1, C1).astype(f32),
        s_taps=s_taps, w2=w2p,
        g2=g2.reshape(1, C2).astype(f32), b2=b2.reshape(1, C2).astype(f32),
        w3=w3p, g3=g3.reshape(1, C3).astype(f32), b3=b3.reshape(1, C3).astype(f32),
        fold=fold, tile=tile, w4=w4big,
    )


# ------------------------------- forward pass --------------------------------

def gen_simple_forward(x, packed):
    B = x.shape[0]

    # layer-1 LHS: rows = (b,h,w), cols = (h',w',d), nonzero only when (h,w)==(h',w')
    xa = (jnp.eye(R1, dtype=jnp.float32)[None, :, :, None]
          * x.astype(jnp.float32)[:, None, None, :]).reshape(B * R1, R1 * D_IN)

    args = (xa, packed['w1'], packed['g1'], packed['b1'],
            packed['s_taps'], packed['w2'], packed['g2'], packed['b2'],
            packed['w3'], packed['g3'], packed['b3'],
            packed['fold'], packed['tile'], packed['w4'])
    vmem_spec = pl.BlockSpec(memory_space=pltpu.MemorySpace.VMEM)

    # NOTE: at large batch a row-tiled grid with dimension_semantics=('parallel',)
    # would let v7x's 2 TensorCores split the work; at B=2 it would be pure overhead.
    out = pl.pallas_call(
        _gen_simple_kernel,
        out_shape=jax.ShapeDtypeStruct((B * R2, 4 * OBLK), jnp.float32),
        in_specs=[vmem_spec] * len(args),
        out_specs=vmem_spec,
    )(*args)

    # reassemble to NCHW: row = (b,p,q); col = (kh3*2+kw3)*128 + kh4*6 + kw4*3 + nc
    o = out.reshape(B, H2, H2, 4, OBLK)[..., :4 * NC]
    o = o.reshape(B, H2, H2, 2, 2, 2, 2, NC)
    o = jnp.transpose(o, (0, 7, 1, 3, 5, 2, 4, 6))     # (B, nc, p, kh3, kh4, q, kw3, kw4)
    return o.reshape(B, NC, 4 * H2, 4 * H2)


# ------------------------- pure-JAX reference check --------------------------

def _conv_transpose_ref(x, w, stride):
    B, IC, H, W = x.shape
    _, OC, KH, KW = w.shape
    OH, OW = (H - 1) * stride + KH, (W - 1) * stride + KW
    contrib = jnp.einsum('bihw,iokl->bohwkl', x, w, precision=HI)
    out = jnp.zeros((B, OC, OH, OW), jnp.float32)
    for kh in range(KH):
        for kw in range(KW):
            out = out.at[:, :,
                         kh:kh + (H - 1) * stride + 1:stride,
                         kw:kw + (W - 1) * stride + 1:stride].add(contrib[..., kh, kw])
    return out


def _bn_relu_ref(x, g, b):
    mean = x.mean(axis=(0, 2, 3), keepdims=True)
    var = ((x - mean) ** 2).mean(axis=(0, 2, 3), keepdims=True)
    y = (x - mean) * jax.lax.rsqrt(var + EPS) * g.reshape(1, -1, 1, 1) + b.reshape(1, -1, 1, 1)
    return jnp.maximum(y, 0.0)


def _reference(x, params):
    (W1, W2, W3, W4, g1, b1, g2, b2, g3, b3) = params
    B, D = x.shape
    h = x.reshape(B, D, 1, 1)
    h = _bn_relu_ref(_conv_transpose_ref(h, W1, 6), g1, b1)
    h = _bn_relu_ref(_conv_transpose_ref(h, W2, 1), g2, b2)
    h = _bn_relu_ref(_conv_transpose_ref(h, W3, 2), g3, b3)
    return jnp.tanh(_conv_transpose_ref(h, W4, 2))


# ----------------------------------- main ------------------------------------

if __name__ == "__main__":
    key = jax.random.PRNGKey(0)
    kx, k1, k2, k3, k4 = jax.random.split(key, 5)

    B, NGF = 2, 64                      # GenSimple(channel=3, input_size=8), ngf=64
    x = jax.random.normal(kx, (B, D_IN), jnp.float32)
    W1 = jax.random.normal(k1, (D_IN, NGF * 4, 6, 6), jnp.float32) * 0.05
    W2 = jax.random.normal(k2, (NGF * 4, NGF * 2, 2, 2), jnp.float32) * 0.05
    W3 = jax.random.normal(k3, (NGF * 2, NGF, 2, 2), jnp.float32) * 0.05
    W4 = jax.random.normal(k4, (NGF, NC, 2, 2), jnp.float32) * 0.05
    g1, b1 = jnp.ones(NGF * 4, jnp.float32), jnp.zeros(NGF * 4, jnp.float32)  # BN defaults
    g2, b2 = jnp.ones(NGF * 2, jnp.float32), jnp.zeros(NGF * 2, jnp.float32)
    g3, b3 = jnp.ones(NGF, jnp.float32), jnp.zeros(NGF, jnp.float32)
    params = (W1, W2, W3, W4, g1, b1, g2, b2, g3, b3)

    # Weight repacking hoisted out of the per-call forward (done once).
    packed = jax.tree_util.tree_map(jax.block_until_ready, pack_params(params, batch_size=B))

    fwd = jax.jit(gen_simple_forward)
    out = jax.block_until_ready(fwd(x, packed))
    assert out.shape == (B, NC, 28, 28), out.shape

    ref = jax.block_until_ready(_reference(x, params))
    err = float(jnp.max(jnp.abs(out - ref)))
    assert err < 2e-2, f"max abs err vs reference: {err}"

    # TODO(synk): BatchNorm running-stat updates (training-mode side effect) are not
    # reproduced; they do not affect the forward output.
    print("KERNEL_OK")
</pallas_src>

<mosaic_0001>
module attributes {stable_mosaic.version = 11 : i64} {
  func.func @_gen_simple_kernel(%arg0: memref<72x288xf32, #tpu.memory_space<vmem>>, %arg1: memref<288x256xf32, #tpu.memory_space<vmem>>, %arg2: memref<1x256xf32, #tpu.memory_space<vmem>>, %arg3: memref<1x256xf32, #tpu.memory_space<vmem>>, %arg4: memref<4x98x72xf32, #tpu.memory_space<vmem>>, %arg5: memref<4x256x128xf32, #tpu.memory_space<vmem>>, %arg6: memref<1x128xf32, #tpu.memory_space<vmem>>, %arg7: memref<1x128xf32, #tpu.memory_space<vmem>>, %arg8: memref<128x256xf32, #tpu.memory_space<vmem>>, %arg9: memref<1x64xf32, #tpu.memory_space<vmem>>, %arg10: memref<1x64xf32, #tpu.memory_space<vmem>>, %arg11: memref<256x64xf32, #tpu.memory_space<vmem>>, %arg12: memref<64x256xf32, #tpu.memory_space<vmem>>, %arg13: memref<256x512xf32, #tpu.memory_space<vmem>>, %arg14: memref<98x512xf32, #tpu.memory_space<vmem>>) attributes {dimension_semantics = [], scalar_prefetch = 0 : i64, scratch_operands = 0 : i64, tpu.core_type = #tpu.core_type<tc>} {
    %c0 = arith.constant 0 : index
    %c0_0 = arith.constant 0 : index
    %0 = vector.load %arg0[%c0, %c0_0] : memref<72x288xf32, #tpu.memory_space<vmem>>, vector<72x288xf32>
    %c0_1 = arith.constant 0 : index
    %c0_2 = arith.constant 0 : index
    %1 = vector.load %arg1[%c0_1, %c0_2] : memref<288x256xf32, #tpu.memory_space<vmem>>, vector<288x256xf32>
    %cst = arith.constant dense<0.000000e+00> : vector<72x256xf32>
    %2 = tpu.matmul %0, %1, %cst {dimension_numbers = #tpu.dot_dimension_numbers<[1], [0], [0], [1], [0, 0, 1, 1], [], []>} : vector<72x288xf32>, vector<288x256xf32>, vector<72x256xf32> -> vector<72x256xf32>
    %c0_3 = arith.constant 0 : index
    %c0_4 = arith.constant 0 : index
    %3 = vector.load %arg2[%c0_3, %c0_4] : memref<1x256xf32, #tpu.memory_space<vmem>>, vector<1x256xf32>
    %c0_5 = arith.constant 0 : index
    %c0_6 = arith.constant 0 : index
    %4 = vector.load %arg3[%c0_5, %c0_6] : memref<1x256xf32, #tpu.memory_space<vmem>>, vector<1x256xf32>
    %cst_7 = arith.constant dense<0.000000e+00> : vector<256xf32>
    %5 = vector.multi_reduction <add>, %2, %cst_7 [0] : vector<72x256xf32> to vector<256xf32>
    %6 = vector.shape_cast %5 : vector<256xf32> to vector<1x256xf32>
    %7 = arith.mulf %2, %2 : vector<72x256xf32>
    %cst_8 = arith.constant dense<0.000000e+00> : vector<256xf32>
    %8 = vector.multi_reduction <add>, %7, %cst_8 [0] : vector<72x256xf32> to vector<256xf32>
    %9 = vector.shape_cast %8 : vector<256xf32> to vector<1x256xf32>
    %cst_9 = arith.constant 0.013888889 : f32
    %10 = vector.broadcast %cst_9 : f32 to vector<1x256xf32>
    %11 = arith.mulf %6, %10 : vector<1x256xf32>
    %cst_10 = arith.constant 0.013888889 : f32
    %12 = vector.broadcast %cst_10 : f32 to vector<1x256xf32>
    %13 = arith.mulf %9, %12 : vector<1x256xf32>
    %14 = arith.mulf %11, %11 : vector<1x256xf32>
    %15 = arith.subf %13, %14 : vector<1x256xf32>
    %cst_11 = arith.constant 9.99999974E-6 : f32
    %16 = vector.broadcast %cst_11 : f32 to vector<1x256xf32>
    %17 = arith.addf %15, %16 : vector<1x256xf32>
    %18 = math.rsqrt %17 : vector<1x256xf32>
    %19 = arith.mulf %3, %18 : vector<1x256xf32>
    %20 = arith.mulf %11, %19 : vector<1x256xf32>
    %21 = arith.subf %4, %20 : vector<1x256xf32>
    %22 = vector.broadcast %19 : vector<1x256xf32> to vector<72x256xf32>
    %23 = arith.mulf %2, %22 : vector<72x256xf32>
    %24 = vector.broadcast %21 : vector<1x256xf32> to vector<72x256xf32>
    %25 = arith.addf %23, %24 : vector<72x256xf32>
    %cst_12 = arith.constant 0.000000e+00 : f32
    %26 = vector.broadcast %cst_12 : f32 to vector<72x256xf32>
    %27 = arith.maximumf %25, %26 : vector<72x256xf32>
    %c0_13 = arith.constant 0 : index
    %c0_14 = arith.constant 0 : index
    %c0_15 = arith.constant 0 : index
    %28 = vector.load %arg5[%c0_13, %c0_14, %c0_15] : memref<4x256x128xf32, #tpu.memory_space<vmem>>, vector<1x256x128xf32>
    %29 = vector.shape_cast %28 : vector<1x256x128xf32> to vector<256x128xf32>
    %cst_16 = arith.constant dense<0.000000e+00> : vector<72x128xf32>
    %30 = tpu.matmul %27, %29, %cst_16 {dimension_numbers = #tpu.dot_dimension_numbers<[1], [0], [0], [1], [0, 0, 1, 1], [], []>} : vector<72x256xf32>, vector<256x128xf32>, vector<72x128xf32> -> vector<72x128xf32>
    %c0_17 = arith.constant 0 : index
    %c0_18 = arith.constant 0 : index
    %c0_19 = arith.constant 0 : index
    %31 = vector.load %arg4[%c0_17, %c0_18, %c0_19] : memref<4x98x72xf32, #tpu.memory_space<vmem>>, vector<1x98x72xf32>
    %32 = vector.shape_cast %31 : vector<1x98x72xf32> to vector<98x72xf32>
    %cst_20 = arith.constant dense<0.000000e+00> : vector<98x128xf32>
    %33 = tpu.matmul %32, %30, %cst_20 {dimension_numbers = #tpu.dot_dimension_numbers<[1], [0], [0], [1], [0, 0, 1, 1], [], []>} : vector<98x72xf32>, vector<72x128xf32>, vector<98x128xf32> -> vector<98x128xf32>
    %c1 = arith.constant 1 : index
    %c0_21 = arith.constant 0 : index
    %c0_22 = arith.constant 0 : index
    %34 = vector.load %arg5[%c1, %c0_21, %c0_22] : memref<4x256x128xf32, #tpu.memory_space<vmem>>, vector<1x256x128xf32>
    %35 = vector.shape_cast %34 : vector<1x256x128xf32> to vector<256x128xf32>
    %cst_23 = arith.constant dense<0.000000e+00> : vector<72x128xf32>
    %36 = tpu.matmul %27, %35, %cst_23 {dimension_numbers = #tpu.dot_dimension_numbers<[1], [0], [0], [1], [0, 0, 1, 1], [], []>} : vector<72x256xf32>, vector<256x128xf32>, vector<72x128xf32> -> vector<72x128xf32>
    %c1_24 = arith.constant 1 : index
    %c0_25 = arith.constant 0 : index
    %c0_26 = arith.constant 0 : index
    %37 = vector.load %arg4[%c1_24, %c0_25, %c0_26] : memref<4x98x72xf32, #tpu.memory_space<vmem>>, vector<1x98x72xf32>
    %38 = vector.shape_cast %37 : vector<1x98x72xf32> to vector<98x72xf32>
    %cst_27 = arith.constant dense<0.000000e+00> : vector<98x128xf32>
    %39 = tpu.matmul %38, %36, %cst_27 {dimension_numbers = #tpu.dot_dimension_numbers<[1], [0], [0], [1], [0, 0, 1, 1], [], []>} : vector<98x72xf32>, vector<72x128xf32>, vector<98x128xf32> -> vector<98x128xf32>
    %40 = arith.addf %33, %39 : vector<98x128xf32>
    %c2 = arith.constant 2 : index
    %c0_28 = arith.constant 0 : index
    %c0_29 = arith.constant 0 : index
    %41 = vector.load %arg5[%c2, %c0_28, %c0_29] : memref<4x256x128xf32, #tpu.memory_space<vmem>>, vector<1x256x128xf32>
    %42 = vector.shape_cast %41 : vector<1x256x128xf32> to vector<256x128xf32>
    %cst_30 = arith.constant dense<0.000000e+00> : vector<72x128xf32>
    %43 = tpu.matmul %27, %42, %cst_30 {dimension_numbers = #tpu.dot_dimension_numbers<[1], [0], [0], [1], [0, 0, 1, 1], [], []>} : vector<72x256xf32>, vector<256x128xf32>, vector<72x128xf32> -> vector<72x128xf32>
    %c2_31 = arith.constant 2 : index
    %c0_32 = arith.constant 0 : index
    %c0_33 = arith.constant 0 : index
    %44 = vector.load %arg4[%c2_31, %c0_32, %c0_33] : memref<4x98x72xf32, #tpu.memory_space<vmem>>, vector<1x98x72xf32>
    %45 = vector.shape_cast %44 : vector<1x98x72xf32> to vector<98x72xf32>
    %cst_34 = arith.constant dense<0.000000e+00> : vector<98x128xf32>
    %46 = tpu.matmul %45, %43, %cst_34 {dimension_numbers = #tpu.dot_dimension_numbers<[1], [0], [0], [1], [0, 0, 1, 1], [], []>} : vector<98x72xf32>, vector<72x128xf32>, vector<98x128xf32> -> vector<98x128xf32>
    %47 = arith.addf %40, %46 : vector<98x128xf32>
    %c3 = arith.constant 3 : index
    %c0_35 = arith.constant 0 : index
    %c0_36 = arith.constant 0 : index
    %48 = vector.load %arg5[%c3, %c0_35, %c0_36] : memref<4x256x128xf32, #tpu.memory_space<vmem>>, vector<1x256x128xf32>
    %49 = vector.shape_cast %48 : vector<1x256x128xf32> to vector<256x128xf32>
    %cst_37 = arith.constant dense<0.000000e+00> : vector<72x128xf32>
    %50 = tpu.matmul %27, %49, %cst_37 {dimension_numbers = #tpu.dot_dimension_numbers<[1], [0], [0], [1], [0, 0, 1, 1], [], []>} : vector<72x256xf32>, vector<256x128xf32>, vector<72x128xf32> -> vector<72x128xf32>
    %c3_38 = arith.constant 3 : index
    %c0_39 = arith.constant 0 : index
    %c0_40 = arith.constant 0 : index
    %51 = vector.load %arg4[%c3_38, %c0_39, %c0_40] : memref<4x98x72xf32, #tpu.memory_space<vmem>>, vector<1x98x72xf32>
    %52 = vector.shape_cast %51 : vector<1x98x72xf32> to vector<98x72xf32>
    %cst_41 = arith.constant dense<0.000000e+00> : vector<98x128xf32>
    %53 = tpu.matmul %52, %50, %cst_41 {dimension_numbers = #tpu.dot_dimension_numbers<[1], [0], [0], [1], [0, 0, 1, 1], [], []>} : vector<98x72xf32>, vector<72x128xf32>, vector<98x128xf32> -> vector<98x128xf32>
    %54 = arith.addf %47, %53 : vector<98x128xf32>
    %c0_42 = arith.constant 0 : index
    %c0_43 = arith.constant 0 : index
    %55 = vector.load %arg6[%c0_42, %c0_43] : memref<1x128xf32, #tpu.memory_space<vmem>>, vector<1x128xf32>
    %c0_44 = arith.constant 0 : index
    %c0_45 = arith.constant 0 : index
    %56 = vector.load %arg7[%c0_44, %c0_45] : memref<1x128xf32, #tpu.memory_space<vmem>>, vector<1x128xf32>
    %cst_46 = arith.constant dense<0.000000e+00> : vector<128xf32>
    %57 = vector.multi_reduction <add>, %54, %cst_46 [0] : vector<98x128xf32> to vector<128xf32>
    %58 = vector.shape_cast %57 : vector<128xf32> to vector<1x128xf32>
    %59 = arith.mulf %54, %54 : vector<98x128xf32>
    %cst_47 = arith.constant dense<0.000000e+00> : vector<128xf32>
    %60 = vector.multi_reduction <add>, %59, %cst_47 [0] : vector<98x128xf32> to vector<128xf32>
    %61 = vector.shape_cast %60 : vector<128xf32> to vector<1x128xf32>
    %cst_48 = arith.constant 0.0102040814 : f32
    %62 = vector.broadcast %cst_48 : f32 to vector<1x128xf32>
    %63 = arith.mulf %58, %62 : vector<1x128xf32>
    %cst_49 = arith.constant 0.0102040814 : f32
    %64 = vector.broadcast %cst_49 : f32 to vector<1x128xf32>
    %65 = arith.mulf %61, %64 : vector<1x128xf32>
    %66 = arith.mulf %63, %63 : vector<1x128xf32>
    %67 = arith.subf %65, %66 : vector<1x128xf32>
    %cst_50 = arith.constant 9.99999974E-6 : f32
    %68 = vector.broadcast %cst_50 : f32 to vector<1x128xf32>
    %69 = arith.addf %67, %68 : vector<1x128xf32>
    %70 = math.rsqrt %69 : vector<1x128xf32>
    %71 = arith.mulf %55, %70 : vector<1x128xf32>
    %72 = arith.mulf %63, %71 : vector<1x128xf32>
    %73 = arith.subf %56, %72 : vector<1x128xf32>
    %74 = vector.broadcast %71 : vector<1x128xf32> to vector<98x128xf32>
    %75 = arith.mulf %54, %74 : vector<98x128xf32>
    %76 = vector.broadcast %73 : vector<1x128xf32> to vector<98x128xf32>
    %77 = arith.addf %75, %76 : vector<98x128xf32>
    %cst_51 = arith.constant 0.000000e+00 : f32
    %78 = vector.broadcast %cst_51 : f32 to vector<98x128xf32>
    %79 = arith.maximumf %77, %78 : vector<98x128xf32>
    %c0_52 = arith.constant 0 : index
    %c0_53 = arith.constant 0 : index
    %80 = vector.load %arg8[%c0_52, %c0_53] : memref<128x256xf32, #tpu.memory_space<vmem>>, vector<128x256xf32>
    %cst_54 = arith.constant dense<0.000000e+00> : vector<98x256xf32>
    %81 = tpu.matmul %79, %80, %cst_54 {dimension_numbers = #tpu.dot_dimension_numbers<[1], [0], [0], [1], [0, 0, 1, 1], [], []>} : vector<98x128xf32>, vector<128x256xf32>, vector<98x256xf32> -> vector<98x256xf32>
    %cst_55 = arith.constant dense<0.000000e+00> : vector<256xf32>
    %82 = vector.multi_reduction <add>, %81, %cst_55 [0] : vector<98x256xf32> to vector<256xf32>
    %83 = vector.shape_cast %82 : vector<256xf32> to vector<1x256xf32>
    %c0_56 = arith.constant 0 : index
    %c0_57 = arith.constant 0 : index
    %84 = vector.load %arg11[%c0_56, %c0_57] : memref<256x64xf32, #tpu.memory_space<vmem>>, vector<256x64xf32>
    %cst_58 = arith.constant dense<0.000000e+00> : vector<1x64xf32>
    %85 = tpu.matmul %83, %84, %cst_58 {dimension_numbers = #tpu.dot_dimension_numbers<[1], [0], [0], [1], [0, 0, 1, 1], [], []>} : vector<1x256xf32>, vector<256x64xf32>, vector<1x64xf32> -> vector<1x64xf32>
    %86 = arith.mulf %81, %81 : vector<98x256xf32>
    %cst_59 = arith.constant dense<0.000000e+00> : vector<256xf32>
    %87 = vector.multi_reduction <add>, %86, %cst_59 [0] : vector<98x256xf32> to vector<256xf32>
    %88 = vector.shape_cast %87 : vector<256xf32> to vector<1x256xf32>
    %c0_60 = arith.constant 0 : index
    %c0_61 = arith.constant 0 : index
    %89 = vector.load %arg11[%c0_60, %c0_61] : memref<256x64xf32, #tpu.memory_space<vmem>>, vector<256x64xf32>
    %cst_62 = arith.constant dense<0.000000e+00> : vector<1x64xf32>
    %90 = tpu.matmul %88, %89, %cst_62 {dimension_numbers = #tpu.dot_dimension_numbers<[1], [0], [0], [1], [0, 0, 1, 1], [], []>} : vector<1x256xf32>, vector<256x64xf32>, vector<1x64xf32> -> vector<1x64xf32>
    %cst_63 = arith.constant 0.00255102036 : f32
    %91 = vector.broadcast %cst_63 : f32 to vector<1x64xf32>
    %92 = arith.mulf %85, %91 : vector<1x64xf32>
    %cst_64 = arith.constant 0.00255102036 : f32
    %93 = vector.broadcast %cst_64 : f32 to vector<1x64xf32>
    %94 = arith.mulf %90, %93 : vector<1x64xf32>
    %95 = arith.mulf %92, %92 : vector<1x64xf32>
    %96 = arith.subf %94, %95 : vector<1x64xf32>
    %c0_65 = arith.constant 0 : index
    %c0_66 = arith.constant 0 : index
    %97 = vector.load %arg9[%c0_65, %c0_66] : memref<1x64xf32, #tpu.memory_space<vmem>>, vector<1x64xf32>
    %cst_67 = arith.constant 9.99999974E-6 : f32
    %98 = vector.broadcast %cst_67 : f32 to vector<1x64xf32>
    %99 = arith.addf %96, %98 : vector<1x64xf32>
    %100 = math.rsqrt %99 : vector<1x64xf32>
    %101 = arith.mulf %97, %100 : vector<1x64xf32>
    %c0_68 = arith.constant 0 : index
    %c0_69 = arith.constant 0 : index
    %102 = vector.load %arg10[%c0_68, %c0_69] : memref<1x64xf32, #tpu.memory_space<vmem>>, vector<1x64xf32>
    %103 = arith.mulf %92, %101 : vector<1x64xf32>
    %104 = arith.subf %102, %103 : vector<1x64xf32>
    %c0_70 = arith.constant 0 : index
    %c0_71 = arith.constant 0 : index
    %105 = vector.load %arg12[%c0_70, %c0_71] : memref<64x256xf32, #tpu.memory_space<vmem>>, vector<64x256xf32>
    %cst_72 = arith.constant dense<0.000000e+00> : vector<1x256xf32>
    %106 = tpu.matmul %101, %105, %cst_72 {dimension_numbers = #tpu.dot_dimension_numbers<[1], [0], [0], [1], [0, 0, 1, 1], [], []>} : vector<1x64xf32>, vector<64x256xf32>, vector<1x256xf32> -> vector<1x256xf32>
    %c0_73 = arith.constant 0 : index
    %c0_74 = arith.constant 0 : index
    %107 = vector.load %arg12[%c0_73, %c0_74] : memref<64x256xf32, #tpu.memory_space<vmem>>, vector<64x256xf32>
    %cst_75 = arith.constant dense<0.000000e+00> : vector<1x256xf32>
    %108 = tpu.matmul %104, %107, %cst_75 {dimension_numbers = #tpu.dot_dimension_numbers<[1], [0], [0], [1], [0, 0, 1, 1], [], []>} : vector<1x64xf32>, vector<64x256xf32>, vector<1x256xf32> -> vector<1x256xf32>
    %109 = vector.broadcast %106 : vector<1x256xf32> to vector<98x256xf32>
    %110 = arith.mulf %81, %109 : vector<98x256xf32>
    %111 = vector.broadcast %108 : vector<1x256xf32> to vector<98x256xf32>
    %112 = arith.addf %110, %111 : vector<98x256xf32>
    %cst_76 = arith.constant 0.000000e+00 : f32
    %113 = vector.broadcast %cst_76 : f32 to vector<98x256xf32>
    %114 = arith.maximumf %112, %113 : vector<98x256xf32>
    %c0_77 = arith.constant 0 : index
    %c0_78 = arith.constant 0 : index
    %115 = vector.load %arg13[%c0_77, %c0_78] : memref<256x512xf32, #tpu.memory_space<vmem>>, vector<256x512xf32>
    %cst_79 = arith.constant dense<0.000000e+00> : vector<98x512xf32>
    %116 = tpu.matmul %114, %115, %cst_79 {dimension_numbers = #tpu.dot_dimension_numbers<[1], [0], [0], [1], [0, 0, 1, 1], [], []>} : vector<98x256xf32>, vector<256x512xf32>, vector<98x512xf32> -> vector<98x512xf32>
    %117 = math.tanh %116 : vector<98x512xf32>
    %c0_80 = arith.constant 0 : index
    %c0_81 = arith.constant 0 : index
    %118 = vector.load %arg14[%c0_80, %c0_81] : memref<98x512xf32, #tpu.memory_space<vmem>>, vector<98x512xf32>
    tpu.vector_store %arg14[%c0_80, %c0_81], %117 {strides = array<i32>} : memref<98x512xf32, #tpu.memory_space<vmem>>, vector<98x512xf32>,
    return
  }
}

</mosaic_0001>

<llo_original>
// kernel: gen_simple_forward.1
$region0: #{gen_simple_forward.1}
  #allocation0 [shape = 'u32[]', space=smem, size = 0x4, offset = 0x4, fixed_abs, tag = 'smem constant byte address 0x4 - core index']
  #allocation1 [shape = 'u32[144,128]{1,0:T(1,128)}', space=vmem, size = 0x12000, scoped, tag = 'internal scratch']
  %s0 = inlined_call_operand.vmem [shape: f32[72,288], index: 0, kind: input, shape index: {}]
  %s1 = inlined_call_operand.vmem [shape: f32[288,256], index: 1, kind: input, shape index: {}]
  %s2 = inlined_call_operand.vmem [shape: f32[1,256], index: 2, kind: input, shape index: {}]
  %s3 = inlined_call_operand.vmem [shape: f32[1,256], index: 3, kind: input, shape index: {}]
  %s4 = inlined_call_operand.vmem [shape: f32[4,98,72], index: 4, kind: input, shape index: {}]
  %s5 = inlined_call_operand.vmem [shape: f32[4,256,128], index: 5, kind: input, shape index: {}]
  %s6 = inlined_call_operand.vmem [shape: f32[1,128], index: 6, kind: input, shape index: {}]
  %s7 = inlined_call_operand.vmem [shape: f32[1,128], index: 7, kind: input, shape index: {}]
  %s8 = inlined_call_operand.vmem [shape: f32[128,256], index: 8, kind: input, shape index: {}]
  %s9 = inlined_call_operand.vmem [shape: f32[1,64], index: 9, kind: input, shape index: {}]
  %s10 = inlined_call_operand.vmem [shape: f32[1,64], index: 10, kind: input, shape index: {}]
  %s11 = inlined_call_operand.vmem [shape: f32[256,64], index: 11, kind: input, shape index: {}]
  %s12 = inlined_call_operand.vmem [shape: f32[64,256], index: 12, kind: input, shape index: {}]
  %s13 = inlined_call_operand.vmem [shape: f32[256,512], index: 13, kind: input, shape index: {}]
  %s14 = inlined_call_operand.vmem [shape: f32[98,512], index: 14, kind: output, shape index: {}]
  %s15 = sld [smem:[#allocation0]]
  $region66: #{gen_simple_forward.1} parent=0
    _
  %s17 = ssub.s32 1, %s15
  %s18 = scalar_select 0, %s17, %s15
  // Predicated region
  $region2: #{gen_simple_forward.1} parent=0 // pred_check
    _
  $region3: #{gen_simple_forward.1} parent=0 // pred_check_branch
    %20 = sbr.rel (0) target = $region5
  $region4: #{gen_simple_forward.1} parent=0 // pred_region
    _
  $region5: #{gen_simple_forward.1} parent=0 // pred_fallthru
    _
  // Predicated region
  $region6: #{gen_simple_forward.1} parent=0 // pred_check
    _
  $region7: #{gen_simple_forward.1} parent=0 // pred_check_branch
    %22 = sbr.rel (0) target = $region9
  $region8: #{gen_simple_forward.1} parent=0 // pred_region
    _
  $region9: #{gen_simple_forward.1} parent=0 // pred_fallthru
    _
  // Predicated region
  $region10: #{gen_simple_forward.1} parent=0 // pred_check
    _
  $region11: #{gen_simple_forward.1} parent=0 // pred_check_branch
    %24 = sbr.rel (0) target = $region13
  $region12: #{gen_simple_forward.1} parent=0 // pred_region
    _
  $region13: #{gen_simple_forward.1} parent=0 // pred_fallthru
    _
  // Predicated region
  $region14: #{gen_simple_forward.1} parent=0 // pred_check
    _
  $region15: #{gen_simple_forward.1} parent=0 // pred_check_branch
    %26 = sbr.rel (0) target = $region17
  $region16: #{gen_simple_forward.1} parent=0 // pred_region
    _
  $region17: #{gen_simple_forward.1} parent=0 // pred_fallthru
    _
  // Predicated region
  $region18: #{gen_simple_forward.1} parent=0 // pred_check
    _
  $region19: #{gen_simple_forward.1} parent=0 // pred_check_branch
    %28 = sbr.rel (0) target = $region21
  $region20: #{gen_simple_forward.1} parent=0 // pred_region
    _
  $region21: #{gen_simple_forward.1} parent=0 // pred_fallthru
    _
  // Predicated region
  $region22: #{gen_simple_forward.1} parent=0 // pred_check
    _
  $region23: #{gen_simple_forward.1} parent=0 // pred_check_branch
    %30 = sbr.rel (0) target = $region25
  $region24: #{gen_simple_forward.1} parent=0 // pred_region
    _
  $region25: #{gen_simple_forward.1} parent=0 // pred_fallthru
    _
  // Predicated region
  $region26: #{gen_simple_forward.1} parent=0 // pred_check
    _
  $region27: #{gen_simple_forward.1} parent=0 // pred_check_branch
    %32 = sbr.rel (0) target = $region29
  $region28: #{gen_simple_forward.1} parent=0 // pred_region
    _
  $region29: #{gen_simple_forward.1} parent=0 // pred_fallthru
    _
  // Predicated region
  $region30: #{gen_simple_forward.1} parent=0 // pred_check
    _
  $region31: #{gen_simple_forward.1} parent=0 // pred_check_branch
    %34 = sbr.rel (0) target = $region33
  $region32: #{gen_simple_forward.1} parent=0 // pred_region
    _
  $region33: #{gen_simple_forward.1} parent=0 // pred_fallthru
    _
  // Predicated region
  $region34: #{gen_simple_forward.1} parent=0 // pred_check
    _
  $region35: #{gen_simple_forward.1} parent=0 // pred_check_branch
    %36 = sbr.rel (0) target = $region37
  $region36: #{gen_simple_forward.1} parent=0 // pred_region
    _
  $region37: #{gen_simple_forward.1} parent=0 // pred_fallthru
    _
  // Predicated region
  $region38: #{gen_simple_forward.1} parent=0 // pred_check
    _
  $region39: #{gen_simple_forward.1} parent=0 // pred_check_branch
    %38 = sbr.rel (0) target = $region41
  $region40: #{gen_simple_forward.1} parent=0 // pred_region
    _
  $region41: #{gen_simple_forward.1} parent=0 // pred_fallthru
    _
  // Predicated region
  $region42: #{gen_simple_forward.1} parent=0 // pred_check
    _
  $region43: #{gen_simple_forward.1} parent=0 // pred_check_branch
    %40 = sbr.rel (0) target = $region45
  $region44: #{gen_simple_forward.1} parent=0 // pred_region
    _
  $region45: #{gen_simple_forward.1} parent=0 // pred_fallthru
    _
  // Predicated region
  $region46: #{gen_simple_forward.1} parent=0 // pred_check
    _
  $region47: #{gen_simple_forward.1} parent=0 // pred_check_branch
    %42 = sbr.rel (0) target = $region49
  $region48: #{gen_simple_forward.1} parent=0 // pred_region
    _
  $region49: #{gen_simple_forward.1} parent=0 // pred_fallthru
    _
  // Predicated region
  $region50: #{gen_simple_forward.1} parent=0 // pred_check
    _
  $region51: #{gen_simple_forward.1} parent=0 // pred_check_branch
    %44 = sbr.rel (0) target = $region53
  $region52: #{gen_simple_forward.1} parent=0 // pred_region
    _
  $region53: #{gen_simple_forward.1} parent=0 // pred_fallthru
    _
  // Predicated region
  $region54: #{gen_simple_forward.1} parent=0 // pred_check
    _
  $region55: #{gen_simple_forward.1} parent=0 // pred_check_branch
    %46 = sbr.rel (0) target = $region57
  $region56: #{gen_simple_forward.1} parent=0 // pred_region
    _
  $region57: #{gen_simple_forward.1} parent=0 // pred_fallthru
    _
  %v47 = vld [vmem:[%s0] sm:$0xff]
  %v48 = vld [vmem:[%s0 + $0x8] sm:$0xff]
  %v49 = vld [vmem:[%s0 + $0x10] sm:$0xff]
  %v50 = vld [vmem:[%s0 + $0x18] sm:$0xff]
  %v51 = vld [vmem:[%s0 + $0x20] sm:$0xff]
  %v52 = vld [vmem:[%s0 + $0x28] sm:$0xff]
  %v53 = vld [vmem:[%s0 + $0x30] sm:$0xff]
  %v54 = vld [vmem:[%s0 + $0x38] sm:$0xff]
  %v55 = vld [vmem:[%s0 + $0x40] sm:$0xff]
  %v56 = vld [vmem:[%s0 + $0x48] sm:$0xff]
  %v57 = vld [vmem:[%s0 + $0x50] sm:$0xff]
  %v58 = vld [vmem:[%s0 + $0x58] sm:$0xff]
  %v59 = vld [vmem:[%s0 + $0x60] sm:$0xff]
  %v60 = vld [vmem:[%s0 + $0x68] sm:$0xff]
  %v61 = vld [vmem:[%s0 + $0x70] sm:$0xff]
  %v62 = vld [vmem:[%s0 + $0x78] sm:$0xff]
  %v63 = vld [vmem:[%s0 + $0x80] sm:$0xff]
  %v64 = vld [vmem:[%s0 + $0x88] sm:$0xff]
  %v65 = vld [vmem:[%s0 + $0x90] sm:$0xff]
  %v66 = vld [vmem:[%s0 + $0x98] sm:$0xff]
  %v67 = vld [vmem:[%s0 + $0xa0] sm:$0xff]
  %v68 = vld [vmem:[%s0 + $0xa8] sm:$0xff]
  %v69 = vld [vmem:[%s0 + $0xb0] sm:$0xff]
  %v70 = vld [vmem:[%s0 + $0xb8] sm:$0xff]
  %v71 = vld [vmem:[%s0 + $0xc0] sm:$0xff]
  %v72 = vld [vmem:[%s0 + $0xc8] sm:$0xff]
  %v73 = vld [vmem:[%s0 + $0xd0] sm:$0xff]
  %v74 = vld [vmem:[%s1] sm:$0xff]
  %v75 = vld [vmem:[%s1 + $0x8] sm:$0xff]
  %v76 = vld [vmem:[%s1 + $0x10] sm:$0xff]
  %v77 = vld [vmem:[%s1 + $0x18] sm:$0xff]
  %v78 = vld [vmem:[%s1 + $0x20] sm:$0xff]
  %v79 = vld [vmem:[%s1 + $0x28] sm:$0xff]
  %v80 = vld [vmem:[%s1 + $0x30] sm:$0xff]
  %v81 = vld [vmem:[%s1 + $0x38] sm:$0xff]
  %v82 = vld [vmem:[%s1 + $0x40] sm:$0xff]
  %v83 = vld [vmem:[%s1 + $0x48] sm:$0xff]
  %v84 = vld [vmem:[%s1 + $0x50] sm:$0xff]
  %v85 = vld [vmem:[%s1 + $0x58] sm:$0xff]
  %v86 = vld [vmem:[%s1 + $0x60] sm:$0xff]
  %v87 = vld [vmem:[%s1 + $0x68] sm:$0xff]
  %v88 = vld [vmem:[%s1 + $0x70] sm:$0xff]
  %v89 = vld [vmem:[%s1 + $0x78] sm:$0xff]
  %v90 = vld [vmem:[%s1 + $0x80] sm:$0xff]
  %v91 = vld [vmem:[%s1 + $0x88] sm:$0xff]
  %v92 = vld [vmem:[%s1 + $0x90] sm:$0xff]
  %v93 = vld [vmem:[%s1 + $0x98] sm:$0xff]
  %v94 = vld [vmem:[%s1 + $0xa0] sm:$0xff]
  %v95 = vld [vmem:[%s1 + $0xa8] sm:$0xff]
  %v96 = vld [vmem:[%s1 + $0xb0] sm:$0xff]
  %v97 = vld [vmem:[%s1 + $0xb8] sm:$0xff]
  %v98 = vld [vmem:[%s1 + $0xc0] sm:$0xff]
  %v99 = vld [vmem:[%s1 + $0xc8] sm:$0xff]
  %v100 = vld [vmem:[%s1 + $0xd0] sm:$0xff]
  %v101 = vld [vmem:[%s1 + $0xd8] sm:$0xff]
  %v102 = vld [vmem:[%s1 + $0xe0] sm:$0xff]
  %v103 = vld [vmem:[%s1 + $0xe8] sm:$0xff]
  %v104 = vld [vmem:[%s1 + $0xf0] sm:$0xff]
  %v105 = vld [vmem:[%s1 + $0xf8] sm:$0xff]
  %v106 = vld [vmem:[%s1 + $0x100] sm:$0xff]
  %v107 = vld [vmem:[%s1 + $0x108] sm:$0xff]
  %v108 = vld [vmem:[%s1 + $0x110] sm:$0xff]
  %v109 = vld [vmem:[%s1 + $0x118] sm:$0xff]
  %v110 = vld [vmem:[%s1 + $0x120] sm:$0xff]
  %v111 = vld [vmem:[%s1 + $0x128] sm:$0xff]
  %v112 = vld [vmem:[%s1 + $0x130] sm:$0xff]
  %v113 = vld [vmem:[%s1 + $0x138] sm:$0xff]
  %v114 = vld [vmem:[%s1 + $0x140] sm:$0xff]
  %v115 = vld [vmem:[%s1 + $0x148] sm:$0xff]
  %v116 = vld [vmem:[%s1 + $0x150] sm:$0xff]
  %v117 = vld [vmem:[%s1 + $0x158] sm:$0xff]
  %v118 = vld [vmem:[%s1 + $0x160] sm:$0xff]
  %v119 = vld [vmem:[%s1 + $0x168] sm:$0xff]
  %v120 = vld [vmem:[%s1 + $0x170] sm:$0xff]
  %v121 = vld [vmem:[%s1 + $0x178] sm:$0xff]
  %v122 = vld [vmem:[%s1 + $0x180] sm:$0xff]
  %v123 = vld [vmem:[%s1 + $0x188] sm:$0xff]
  %v124 = vld [vmem:[%s1 + $0x190] sm:$0xff]
  %v125 = vld [vmem:[%s1 + $0x198] sm:$0xff]
  %v126 = vld [vmem:[%s1 + $0x1a0] sm:$0xff]
  %v127 = vld [vmem:[%s1 + $0x1a8] sm:$0xff]
  %v128 = vld [vmem:[%s1 + $0x1b0] sm:$0xff]
  %v129 = vld [vmem:[%s1 + $0x1b8] sm:$0xff]
  %v130 = vld [vmem:[%s1 + $0x1c0] sm:$0xff]
  %v131 = vld [vmem:[%s1 + $0x1c8] sm:$0xff]
  %v132 = vld [vmem:[%s1 + $0x1d0] sm:$0xff]
  %v133 = vld [vmem:[%s1 + $0x1d8] sm:$0xff]
  %v134 = vld [vmem:[%s1 + $0x1e0] sm:$0xff]
  %v135 = vld [vmem:[%s1 + $0x1e8] sm:$0xff]
  %v136 = vld [vmem:[%s1 + $0x1f0] sm:$0xff]
  %v137 = vld [vmem:[%s1 + $0x1f8] sm:$0xff]
  %v138 = vld [vmem:[%s1 + $0x200] sm:$0xff]
  %v139 = vld [vmem:[%s1 + $0x208] sm:$0xff]
  %v140 = vld [vmem:[%s1 + $0x210] sm:$0xff]
  %v141 = vld [vmem:[%s1 + $0x218] sm:$0xff]
  %v142 = vld [vmem:[%s1 + $0x220] sm:$0xff]
  %v143 = vld [vmem:[%s1 + $0x228] sm:$0xff]
  %v144 = vld [vmem:[%s1 + $0x230] sm:$0xff]
  %v145 = vld [vmem:[%s1 + $0x238] sm:$0xff]
  %vm146 = vcmask 261120
  %v148 = vsel %vm146, %v49, 0
  %v151 = vsel %vm146, %v52, 0
  %v154 = vsel %vm146, %v55, 0
  %v157 = vsel %vm146, %v58, 0
  %v160 = vsel %vm146, %v61, 0
  %v163 = vsel %vm146, %v64, 0
  %v166 = vsel %vm146, %v67, 0
  %v169 = vsel %vm146, %v70, 0
  %v172 = vsel %vm146, %v73, 0
  %174 = vmatprep.subr.mxu0 %v75
  %175 = vmatpush1.msra.mxu0 %v74
  %176 = vmatprep.subr.mxu0 %v77
  %177 = vmatpush1.msra.mxu0 %v76
  %178 = vmatprep.subr.mxu0 %v79
  %179 = vmatpush1.msra.mxu0 %v78
  %180 = vmatprep.subr.mxu0 %v81
  %181 = vmatpush1.msra.mxu0 %v80
  %182 = vmatprep.subr.mxu0 %v83
  %183 = vmatpush1.msra.mxu0 %v82
  %184 = vmatprep.subr.mxu0 %v85
  %185 = vmatpush1.msra.mxu0 %v84
  %186 = vmatprep.subr.mxu0 %v87
  %187 = vmatpush1.msra.mxu0 %v86
  %188 = vmatprep.subr.mxu0 %v89
  %189 = vmatpush1.msra.mxu0 %v88
  %190 = vmatprep.subr.mxu0 %v91
  %191 = vmatpush1.msra.mxu0 %v90
  %192 = vmatprep.subr.mxu0 %v93
  %193 = vmatpush1.msra.mxu0 %v92
  %194 = vmatprep.subr.mxu0 %v95
  %195 = vmatpush1.msra.mxu0 %v94
  %196 = vmatprep.subr.mxu0 %v97
  %197 = vmatpush1.msra.mxu0 %v96
  %198 = vmatprep.subr.mxu0 %v99
  %199 = vmatpush1.msra.mxu0 %v98
  %200 = vmatprep.subr.mxu0 %v101
  %201 = vmatpush1.msra.mxu0 %v100
  %202 = vmatprep.subr.mxu0 %v103
  %203 = vmatpush1.msra.mxu0 %v102
  %204 = vmatprep.subr.mxu0 %v105
  %205 = vmatpush1.msra.mxu0 %v104
  %206 = vmatprep.subr.mxu0 %v107
  %207 = vmatpush1.msra.mxu0 %v106
  %208 = vmatprep.subr.mxu0 %v109
  %209 = vmatpush1.msra.mxu0 %v108
  %210 = vmatprep.subr.mxu0 %v111
  %211 = vmatpush1.msra.mxu0 %v110
  %212 = vmatprep.subr.mxu0 %v113
  %213 = vmatpush1.msra.mxu0 %v112
  %214 = vmatprep.subr.mxu0 %v115
  %215 = vmatpush1.msra.mxu0 %v114
  %216 = vmatprep.subr.mxu0 %v117
  %217 = vmatpush1.msra.mxu0 %v116
  %218 = vmatprep.subr.mxu0 %v119
  %219 = vmatpush1.msra.mxu0 %v118
  %220 = vmatprep.subr.mxu0 %v121
  %221 = vmatpush1.msra.mxu0 %v120
  %222 = vmatprep.subr.mxu0 %v123
  %223 = vmatpush1.msra.mxu0 %v122
  %224 = vmatprep.subr.mxu0 %v125
  %225 = vmatpush1.msra.mxu0 %v124
  %226 = vmatprep.subr.mxu0 %v127
  %227 = vmatpush1.msra.mxu0 %v126
  %228 = vmatprep.subr.mxu0 %v129
  %229 = vmatpush1.msra.mxu0 %v128
  %230 = vmatprep.subr.mxu0 %v131
  %231 = vmatpush1.msra.mxu0 %v130
  %232 = vmatprep.subr.mxu0 %v133
  %233 = vmatpush1.msra.mxu0 %v132
  %234 = vmatprep.subr.mxu0 %v135
  %235 = vmatpush1.msra.mxu0 %v134
  %236 = vmatprep.subr.mxu0 %v137
  %237 = vmatpush1.msra.mxu0 %v136
  %238 = vmatprep.mubr.f32.mxu0 %v48
  %239 = vmatmul.mubr.f32.gmra.mrb[0].mxu0 %v47
  %v240 = vpop.f32.mrb[0].mxu0
  %v241 = vadd.f32 0.0, %v240
  %v242 = vpop.f32.mrb[0].mxu0
  %v243 = vadd.f32 0.0, %v242
  %244 = vmatprep.mubr.f32.mxu0 %v51
  %245 = vmatmul.mubr.f32.gmra.mrb[0].mxu0 %v50
  %v246 = vpop.f32.mrb[0].mxu0
  %v247 = vadd.f32 0.0, %v246
  %v248 = vpop.f32.mrb[0].mxu0
  %v249 = vadd.f32 0.0, %v248
  %250 = vmatprep.mubr.f32.mxu0 %v54
  %251 = vmatmul.mubr.f32.gmra.mrb[0].mxu0 %v53
  %v252 = vpop.f32.mrb[0].mxu0
  %v253 = vadd.f32 0.0, %v252
  %v254 = vpop.f32.mrb[0].mxu0
  %v255 = vadd.f32 0.0, %v254
  %256 = vmatprep.mubr.f32.mxu0 %v57
  %257 = vmatmul.mubr.f32.gmra.mrb[0].mxu0 %v56
  %v258 = vpop.f32.mrb[0].mxu0
  %v259 = vadd.f32 0.0, %v258
  %v260 = vpop.f32.mrb[0].mxu0
  %v261 = vadd.f32 0.0, %v260
  %262 = vmatprep.mubr.f32.mxu0 %v60
  %263 = vmatmul.mubr.f32.gmra.mrb[0].mxu0 %v59
  %v264 = vpop.f32.mrb[0].mxu0
  %v265 = vadd.f32 0.0, %v264
  %v266 = vpop.f32.mrb[0].mxu0
  %v267 = vadd.f32 0.0, %v266
  %268 = vmatprep.mubr.f32.mxu0 %v63
  %269 = vmatmul.mubr.f32.gmra.mrb[0].mxu0 %v62
  %v270 = vpop.f32.mrb[0].mxu0
  %v271 = vadd.f32 0.0, %v270
  %v272 = vpop.f32.mrb[0].mxu0
  %v273 = vadd.f32 0.0, %v272
  %274 = vmatprep.mubr.f32.mxu0 %v66
  %275 = vmatmul.mubr.f32.gmra.mrb[0].mxu0 %v65
  %v276 = vpop.f32.mrb[0].mxu0
  %v277 = vadd.f32 0.0, %v276
  %v278 = vpop.f32.mrb[0].mxu0
  %v279 = vadd.f32 0.0, %v278
  %280 = vmatprep.mubr.f32.mxu0 %v69
  %281 = vmatmul.mubr.f32.gmra.mrb[0].mxu0 %v68
  %v282 = vpop.f32.mrb[0].mxu0
  %v283 = vadd.f32 0.0, %v282
  %v284 = vpop.f32.mrb[0].mxu0
  %v285 = vadd.f32 0.0, %v284
  %286 = vmatprep.mubr.f32.mxu0 %v72
  %287 = vmatmul.mubr.f32.gmra.mrb[0].mxu0 %v71
  %v288 = vpop.f32.mrb[0].mxu0
  %v289 = vadd.f32 0.0, %v288
  %v290 = vpop.f32.mrb[0].mxu0
  %v291 = vadd.f32 0.0, %v290
  %292 = vdwg.mxu0
  %293 = vmatprep.subr.mxu0 %v139
  %294 = vmatpush1.msra.mxu0 %v138
  %295 = vmatprep.subr.mxu0 %v141
  %296 = vmatpush1.msra.mxu0 %v140
  %297 = vmatprep.subr.mxu0 %v143
  %298 = vmatpush1.msra.mxu0 %v142
  %299 = vmatprep.subr.mxu0 %v145
  %300 = vmatpush1.msra.mxu0 %v144
  %301 = vmatprep.subr.mxu0 0.0
  %302 = vmatpush1.msra.mxu0 0.0
  %303 = vmatprep.subr.mxu0 0.0
  %304 = vmatpush1.msra.mxu0 0.0
  %305 = vmatprep.subr.mxu0 0.0
  %306 = vmatpush1.msra.mxu0 0.0
  %307 = vmatprep.subr.mxu0 0.0
  %308 = vmatpush1.msra.mxu0 0.0
  %309 = vmatprep.subr.mxu0 0.0
  %310 = vmatpush1.msra.mxu0 0.0
  %311 = vmatprep.subr.mxu0 0.0
  %312 = vmatpush1.msra.mxu0 0.0
  %313 = vmatprep.subr.mxu0 0.0
  %314 = vmatpush1.msra.mxu0 0.0
  %315 = vmatprep.subr.mxu0 0.0
  %316 = vmatpush1.msra.mxu0 0.0
  %317 = vmatprep.subr.mxu0 0.0
  %318 = vmatpush1.msra.mxu0 0.0
  %319 = vmatprep.subr.mxu0 0.0
  %320 = vmatpush1.msra.mxu0 0.0
  %321 = vmatprep.subr.mxu0 0.0
  %322 = vmatpush1.msra.mxu0 0.0
  %323 = vmatprep.subr.mxu0 0.0
  %324 = vmatpush1.msra.mxu0 0.0
  %325 = vmatprep.subr.mxu0 0.0
  %326 = vmatpush1.msra.mxu0 0.0
  %327 = vmatprep.subr.mxu0 0.0
  %328 = vmatpush1.msra.mxu0 0.0
  %329 = vmatprep.subr.mxu0 0.0
  %330 = vmatpush1.msra.mxu0 0.0
  %331 = vmatprep.subr.mxu0 0.0
  %332 = vmatpush1.msra.mxu0 0.0
  %333 = vmatprep.subr.mxu0 0.0
  %334 = vmatpush1.msra.mxu0 0.0
  %335 = vmatprep.subr.mxu0 0.0
  %336 = vmatpush1.msra.mxu0 0.0
  %337 = vmatprep.subr.mxu0 0.0
  %338 = vmatpush1.msra.mxu0 0.0
  %339 = vmatprep.subr.mxu0 0.0
  %340 = vmatpush1.msra.mxu0 0.0
  %341 = vmatprep.subr.mxu0 0.0
  %342 = vmatpush1.msra.mxu0 0.0
  %343 = vmatprep.subr.mxu0 0.0
  %344 = vmatpush1.msra.mxu0 0.0
  %345 = vmatprep.subr.mxu0 0.0
  %346 = vmatpush1.msra.mxu0 0.0
  %347 = vmatprep.subr.mxu0 0.0
  %348 = vmatpush1.msra.mxu0 0.0
  %349 = vmatprep.subr.mxu0 0.0
  %350 = vmatpush1.msra.mxu0 0.0
  %351 = vmatprep.subr.mxu0 0.0
  %352 = vmatpush1.msra.mxu0 0.0
  %353 = vmatprep.subr.mxu0 0.0
  %354 = vmatpush1.msra.mxu0 0.0
  %355 = vmatprep.subr.mxu0 0.0
  %356 = vmatpush1.msra.mxu0 0.0
  %357 = vmatprep.mubr.f32.mxu0 0.0
  %358 = vmatmul.mubr.f32.gmra.mrb[0].mxu0 %v148
  %v359 = vpop.f32.mrb[0].mxu0
  %v360 = vadd.f32 %v241, %v359
  %v361 = vpop.f32.mrb[0].mxu0
  %v362 = vadd.f32 %v243, %v361
  %363 = vmatprep.mubr.f32.mxu0 0.0
  %364 = vmatmul.mubr.f32.gmra.mrb[0].mxu0 %v151
  %v365 = vpop.f32.mrb[0].mxu0
  %v366 = vadd.f32 %v247, %v365
  %v367 = vpop.f32.mrb[0].mxu0
  %v368 = vadd.f32 %v249, %v367
  %369 = vmatprep.mubr.f32.mxu0 0.0
  %370 = vmatmul.mubr.f32.gmra.mrb[0].mxu0 %v154
  %v371 = vpop.f32.mrb[0].mxu0
  %v372 = vadd.f32 %v253, %v371
  %v373 = vpop.f32.mrb[0].mxu0
  %v374 = vadd.f32 %v255, %v373
  %375 = vmatprep.mubr.f32.mxu0 0.0
  %376 = vmatmul.mubr.f32.gmra.mrb[0].mxu0 %v157
  %v377 = vpop.f32.mrb[0].mxu0
  %v378 = vadd.f32 %v259, %v377
  %v379 = vpop.f32.mrb[0].mxu0
  %v380 = vadd.f32 %v261, %v379
  %381 = vmatprep.mubr.f32.mxu0 0.0
  %382 = vmatmul.mubr.f32.gmra.mrb[0].mxu0 %v160
  %v383 = vpop.f32.mrb[0].mxu0
  %v384 = vadd.f32 %v265, %v383
  %v385 = vpop.f32.mrb[0].mxu0
  %v386 = vadd.f32 %v267, %v385
  %387 = vmatprep.mubr.f32.mxu0 0.0
  %388 = vmatmul.mubr.f32.gmra.mrb[0].mxu0 %v163
  %v389 = vpop.f32.mrb[0].mxu0
  %v390 = vadd.f32 %v271, %v389
  %v391 = vpop.f32.mrb[0].mxu0
  %v392 = vadd.f32 %v273, %v391
  %393 = vmatprep.mubr.f32.mxu0 0.0
  %394 = vmatmul.mubr.f32.gmra.mrb[0].mxu0 %v166
  %v395 = vpop.f32.mrb[0].mxu0
  %v396 = vadd.f32 %v277, %v395
  %v397 = vpop.f32.mrb[0].mxu0
  %v398 = vadd.f32 %v279, %v397
  %399 = vmatprep.mubr.f32.mxu0 0.0
  %400 = vmatmul.mubr.f32.gmra.mrb[0].mxu0 %v169
  %v401 = vpop.f32.mrb[0].mxu0
  %v402 = vadd.f32 %v283, %v401
  %v403 = vpop.f32.mrb[0].mxu0
  %v404 = vadd.f32 %v285, %v403
  %405 = vmatprep.mubr.f32.mxu0 0.0
  %406 = vmatmul.mubr.f32.gmra.mrb[0].mxu0 %v172
  %v407 = vpop.f32.mrb[0].mxu0
  %v408 = vadd.f32 %v289, %v407
  %v409 = vpop.f32.mrb[0].mxu0
  %v410 = vadd.f32 %v291, %v409
  %411 = vdwg.mxu0
  %v412 = vld [vmem:[%s2] sm:$0x3]
  %v413 = vld [vmem:[%s3] sm:$0x3]
  %v414 = vadd.f32 %v360, %v366
  %v415 = vadd.f32 %v414, %v372
  %v416 = vadd.f32 %v415, %v378
  %v417 = vadd.f32 %v416, %v384
  %v418 = vadd.f32 %v417, %v390
  %v419 = vadd.f32 %v418, %v396
  %v420 = vadd.f32 %v419, %v402
  %v421 = vadd.f32 %v420, %v408
  %v422 = vrot.slane %v421, 4
  %v423 = vadd.f32 %v421, %v422
  %v424 = vrot.slane %v423, 2
  %v425 = vadd.f32 %v423, %v424
  %v426 = vrot.slane %v425, 1
  %v427 = vadd.f32 %v425, %v426
  %v428 = vadd.f32 %v362, %v368
  %v429 = vadd.f32 %v428, %v374
  %v430 = vadd.f32 %v429, %v380
  %v431 = vadd.f32 %v430, %v386
  %v432 = vadd.f32 %v431, %v392
  %v433 = vadd.f32 %v432, %v398
  %v434 = vadd.f32 %v433, %v404
  %v435 = vadd.f32 %v434, %v410
  %v436 = vrot.slane %v435, 4
  %v437 = vadd.f32 %v435, %v436
  %v438 = vrot.slane %v437, 2
  %v439 = vadd.f32 %v437, %v438
  %v440 = vrot.slane %v439, 1
  %v441 = vadd.f32 %v439, %v440
  %v442 = vmul.f32 %v360, %v360
  %v443 = vmul.f32 %v362, %v362
  %v444 = vmul.f32 %v366, %v366
  %v445 = vmul.f32 %v368, %v368
  %v446 = vmul.f32 %v372, %v372
  %v447 = vmul.f32 %v374, %v374
  %v448 = vmul.f32 %v378, %v378
  %v449 = vmul.f32 %v380, %v380
  %v450 = vmul.f32 %v384, %v384
  %v451 = vmul.f32 %v386, %v386
  %v452 = vmul.f32 %v390, %v390
  %v453 = vmul.f32 %v392, %v392
  %v454 = vmul.f32 %v396, %v396
  %v455 = vmul.f32 %v398, %v398
  %v456 = vmul.f32 %v402, %v402
  %v457 = vmul.f32 %v404, %v404
  %v458 = vmul.f32 %v408, %v408
  %v459 = vmul.f32 %v410, %v410
  %v460 = vadd.f32 %v442, %v444
  %v461 = vadd.f32 %v460, %v446
  %v462 = vadd.f32 %v461, %v448
  %v463 = vadd.f32 %v462, %v450
  %v464 = vadd.f32 %v463, %v452
  %v465 = vadd.f32 %v464, %v454
  %v466 = vadd.f32 %v465, %v456
  %v467 = vadd.f32 %v466, %v458
  %v468 = vrot.slane %v467, 4
  %v469 = vadd.f32 %v467, %v468
  %v470 = vrot.slane %v469, 2
  %v471 = vadd.f32 %v469, %v470
  %v472 = vrot.slane %v471, 1
  %v473 = vadd.f32 %v471, %v472
  %v474 = vadd.f32 %v443, %v445
  %v475 = vadd.f32 %v474, %v447
  %v476 = vadd.f32 %v475, %v449
  %v477 = vadd.f32 %v476, %v451
  %v478 = vadd.f32 %v477, %v453
  %v479 = vadd.f32 %v478, %v455
  %v480 = vadd.f32 %v479, %v457
  %v481 = vadd.f32 %v480, %v459
  %v482 = vrot.slane %v481, 4
  %v483 = vadd.f32 %v481, %v482
  %v484 = vrot.slane %v483, 2
  %v485 = vadd.f32 %v483, %v484
  %v486 = vrot.slane %v485, 1
  %v487 = vadd.f32 %v485, %v486
  %v488 = vmul.f32 %v427, 0.013888889
  %v489 = vmul.f32 %v441, 0.013888889
  %v490 = vmul.f32 %v473, 0.013888889
  %v491 = vmul.f32 %v487, 0.013888889
  %v492 = vmul.f32 %v488, %v488
  %v493 = vmul.f32 %v489, %v489
  %v494 = vsub.f32 %v490, %v492
  %v495 = vsub.f32 %v491, %v493
  %v496 = vadd.f32 %v494, 1e-05
  %v497 = vadd.f32 %v495, 1e-05
  %v498 = vrsqrt.pop %v496
  %v499 = vrsqrt.pop %v497
  %v502 = vcombine.low %v498, %v499
  %v504 = vunpack.c.l.s4 1966171168
  %v505 = vunpack.c.0.s8 %v504
  %v506 = vlaneseq
  %v507 = vshrl.u32 %v506, 7
  %v508 = vsub.s32 %v505, %v507
  %v509 = vrot.slane %v502, %v508
  %v511 = vunpack.c.l.s4 1966171168
  %v512 = vunpack.c.0.s8 %v511
  %v513 = vlaneseq
  %v514 = vshrl.u32 %v513, 7
  %v515 = vsub.s32 %v512, %v514
  %v516 = vrot.slane %v509, %v515
  %v518 = vmul.f32 %v412, %v516
  %v520 = vlaneseq
  %v521 = vshrl.u32 %v520, 7
  %v522 = vsub.s32 0, %v521
  %v523 = vrot.slane %v518, %v522
  %v524 = vlaneseq
  %v525 = vshrl.u32 %v524, 7
  %v526 = vsub.s32 1, %v525
  %v527 = vrot.slane %v518, %v526
  %v530 = vmul.f32 %v488, %v523
  %v531 = vmul.f32 %v489, %v527
  %v534 = vcombine.low %v530, %v531
  %v536 = vunpack.c.l.s4 1966171168
  %v537 = vunpack.c.0.s8 %v536
  %v538 = vlaneseq
  %v539 = vshrl.u32 %v538, 7
  %v540 = vsub.s32 %v537, %v539
  %v541 = vrot.slane %v534, %v540
  %v543 = vunpack.c.l.s4 1966171168
  %v544 = vunpack.c.0.s8 %v543
  %v545 = vlaneseq
  %v546 = vshrl.u32 %v545, 7
  %v547 = vsub.s32 %v544, %v546
  %v548 = vrot.slane %v541, %v547
  %v550 = vsub.f32 %v413, %v548
  %v551 = vmul.f32 %v360, %v523
  %v552 = vmul.f32 %v362, %v527
  %v553 = vmul.f32 %v366, %v523
  %v554 = vmul.f32 %v368, %v527
  %v555 = vmul.f32 %v372, %v523
  %v556 = vmul.f32 %v374, %v527
  %v557 = vmul.f32 %v378, %v523
  %v558 = vmul.f32 %v380, %v527
  %v559 = vmul.f32 %v384, %v523
  %v560 = vmul.f32 %v386, %v527
  %v561 = vmul.f32 %v390, %v523
  %v562 = vmul.f32 %v392, %v527
  %v563 = vmul.f32 %v396, %v523
  %v564 = vmul.f32 %v398, %v527
  %v565 = vmul.f32 %v402, %v523
  %v566 = vmul.f32 %v404, %v527
  %v567 = vmul.f32 %v408, %v523
  %v568 = vmul.f32 %v410, %v527
  %v570 = vlaneseq
  %v571 = vshrl.u32 %v570, 7
  %v572 = vsub.s32 0, %v571
  %v573 = vrot.slane %v550, %v572
  %v574 = vlaneseq
  %v575 = vshrl.u32 %v574, 7
  %v576 = vsub.s32 1, %v575
  %v577 = vrot.slane %v550, %v576
  %v580 = vadd.f32 %v551, %v573
  %v581 = vadd.f32 %v552, %v577
  %v582 = vadd.f32 %v553, %v573
  %v583 = vadd.f32 %v554, %v577
  %v584 = vadd.f32 %v555, %v573
  %v585 = vadd.f32 %v556, %v577
  %v586 = vadd.f32 %v557, %v573
  %v587 = vadd.f32 %v558, %v577
  %v588 = vadd.f32 %v559, %v573
  %v589 = vadd.f32 %v560, %v577
  %v590 = vadd.f32 %v561, %v573
  %v591 = vadd.f32 %v562, %v577
  %v592 = vadd.f32 %v563, %v573
  %v593 = vadd.f32 %v564, %v577
  %v594 = vadd.f32 %v565, %v573
  %v595 = vadd.f32 %v566, %v577
  %v596 = vadd.f32 %v567, %v573
  %v597 = vadd.f32 %v568, %v577
  %v598 = vmax.f32 %v580, 0.0
  %v599 = vmax.f32 %v581, 0.0
  %v600 = vmax.f32 %v582, 0.0
  %v601 = vmax.f32 %v583, 0.0
  %v602 = vmax.f32 %v584, 0.0
  %v603 = vmax.f32 %v585, 0.0
  %v604 = vmax.f32 %v586, 0.0
  %v605 = vmax.f32 %v587, 0.0
  %v606 = vmax.f32 %v588, 0.0
  %v607 = vmax.f32 %v589, 0.0
  %v608 = vmax.f32 %v590, 0.0
  %v609 = vmax.f32 %v591, 0.0
  %v610 = vmax.f32 %v592, 0.0
  %v611 = vmax.f32 %v593, 0.0
  %v612 = vmax.f32 %v594, 0.0
  %v613 = vmax.f32 %v595, 0.0
  %v614 = vmax.f32 %v596, 0.0
  %v615 = vmax.f32 %v597, 0.0
  %v616 = vld [vmem:[%s5] sm:$0xff]
  %v617 = vld [vmem:[%s5 + $0x8] sm:$0xff]
  %v618 = vld [vmem:[%s5 + $0x10] sm:$0xff]
  %v619 = vld [vmem:[%s5 + $0x18] sm:$0xff]
  %v620 = vld [vmem:[%s5 + $0x20] sm:$0xff]
  %v621 = vld [vmem:[%s5 + $0x28] sm:$0xff]
  %v622 = vld [vmem:[%s5 + $0x30] sm:$0xff]
  %v623 = vld [vmem:[%s5 + $0x38] sm:$0xff]
  %v624 = vld [vmem:[%s5 + $0x40] sm:$0xff]
  %v625 = vld [vmem:[%s5 + $0x48] sm:$0xff]
  %v626 = vld [vmem:[%s5 + $0x50] sm:$0xff]
  %v627 = vld [vmem:[%s5 + $0x58] sm:$0xff]
  %v628 = vld [vmem:[%s5 + $0x60] sm:$0xff]
  %v629 = vld [vmem:[%s5 + $0x68] sm:$0xff]
  %v630 = vld [vmem:[%s5 + $0x70] sm:$0xff]
  %v631 = vld [vmem:[%s5 + $0x78] sm:$0xff]
  %v632 = vld [vmem:[%s5 + $0x80] sm:$0xff]
  %v633 = vld [vmem:[%s5 + $0x88] sm:$0xff]
  %v634 = vld [vmem:[%s5 + $0x90] sm:$0xff]
  %v635 = vld [vmem:[%s5 + $0x98] sm:$0xff]
  %v636 = vld [vmem:[%s5 + $0xa0] sm:$0xff]
  %v637 = vld [vmem:[%s5 + $0xa8] sm:$0xff]
  %v638 = vld [vmem:[%s5 + $0xb0] sm:$0xff]
  %v639 = vld [vmem:[%s5 + $0xb8] sm:$0xff]
  %v640 = vld [vmem:[%s5 + $0xc0] sm:$0xff]
  %v641 = vld [vmem:[%s5 + $0xc8] sm:$0xff]
  %v642 = vld [vmem:[%s5 + $0xd0] sm:$0xff]
  %v643 = vld [vmem:[%s5 + $0xd8] sm:$0xff]
  %v644 = vld [vmem:[%s5 + $0xe0] sm:$0xff]
  %v645 = vld [vmem:[%s5 + $0xe8] sm:$0xff]
  %v646 = vld [vmem:[%s5 + $0xf0] sm:$0xff]
  %v647 = vld [vmem:[%s5 + $0xf8] sm:$0xff]
  %648 = vmatprep.subr.mxu0 0.0
  %649 = vmatpush1.msra.mxu0 %v616
  %650 = vmatprep.subr.mxu0 0.0
  %651 = vmatpush1.msra.mxu0 %v617
  %652 = vmatprep.subr.mxu0 0.0
  %653 = vmatpush1.msra.mxu0 %v618
  %654 = vmatprep.subr.mxu0 0.0
  %655 = vmatpush1.msra.mxu0 %v619
  %656 = vmatprep.subr.mxu0 0.0
  %657 = vmatpush1.msra.mxu0 %v620
  %658 = vmatprep.subr.mxu0 0.0
  %659 = vmatpush1.msra.mxu0 %v621
  %660 = vmatprep.subr.mxu0 0.0
  %661 = vmatpush1.msra.mxu0 %v622
  %662 = vmatprep.subr.mxu0 0.0
  %663 = vmatpush1.msra.mxu0 %v623
  %664 = vmatprep.subr.mxu0 0.0
  %665 = vmatpush1.msra.mxu0 %v624
  %666 = vmatprep.subr.mxu0 0.0
  %667 = vmatpush1.msra.mxu0 %v625
  %668 = vmatprep.subr.mxu0 0.0
  %669 = vmatpush1.msra.mxu0 %v626
  %670 = vmatprep.subr.mxu0 0.0
  %671 = vmatpush1.msra.mxu0 %v627
  %672 = vmatprep.subr.mxu0 0.0
  %673 = vmatpush1.msra.mxu0 %v628
  %674 = vmatprep.subr.mxu0 0.0
  %675 = vmatpush1.msra.mxu0 %v629
  %676 = vmatprep.subr.mxu0 0.0
  %677 = vmatpush1.msra.mxu0 %v630
  %678 = vmatprep.subr.mxu0 0.0
  %679 = vmatpush1.msra.mxu0 %v631
  %680 = vmatprep.subr.mxu0 0.0
  %681 = vmatpush1.msra.mxu0 %v632
  %682 = vmatprep.subr.mxu0 0.0
  %683 = vmatpush1.msra.mxu0 %v633
  %684 = vmatprep.subr.mxu0 0.0
  %685 = vmatpush1.msra.mxu0 %v634
  %686 = vmatprep.subr.mxu0 0.0
  %687 = vmatpush1.msra.mxu0 %v635
  %688 = vmatprep.subr.mxu0 0.0
  %689 = vmatpush1.msra.mxu0 %v636
  %690 = vmatprep.subr.mxu0 0.0
  %691 = vmatpush1.msra.mxu0 %v637
  %692 = vmatprep.subr.mxu0 0.0
  %693 = vmatpush1.msra.mxu0 %v638
  %694 = vmatprep.subr.mxu0 0.0
  %695 = vmatpush1.msra.mxu0 %v639
  %696 = vmatprep.subr.mxu0 0.0
  %697 = vmatpush1.msra.mxu0 %v640
  %698 = vmatprep.subr.mxu0 0.0
  %699 = vmatpush1.msra.mxu0 %v641
  %700 = vmatprep.subr.mxu0 0.0
  %701 = vmatpush1.msra.mxu0 %v642
  %702 = vmatprep.subr.mxu0 0.0
  %703 = vmatpush1.msra.mxu0 %v643
  %704 = vmatprep.subr.mxu0 0.0
  %705 = vmatpush1.msra.mxu0 %v644
  %706 = vmatprep.subr.mxu0 0.0
  %707 = vmatpush1.msra.mxu0 %v645
  %708 = vmatprep.subr.mxu0 0.0
  %709 = vmatpush1.msra.mxu0 %v646
  %710 = vmatprep.subr.mxu0 0.0
  %711 = vmatpush1.msra.mxu0 %v647
  %712 = vmatprep.mubr.f32.mxu0 %v599
  %713 = vmatmul.mubr.f32.gmra.mrb[0].mxu0 %v598
  %v714 = vpop.f32.mrb[0].mxu0
  %v715 = vadd.f32 0.0, %v714
  %v716 = vpop.f32.mrb[0].mxu0
  %717 = vmatprep.mubr.f32.mxu0 %v601
  %718 = vmatmul.mubr.f32.gmra.mrb[0].mxu0 %v600
  %v719 = vpop.f32.mrb[0].mxu0
  %v720 = vadd.f32 0.0, %v719
  %v721 = vpop.f32.mrb[0].mxu0
  %722 = vmatprep.mubr.f32.mxu0 %v603
  %723 = vmatmul.mubr.f32.gmra.mrb[0].mxu0 %v602
  %v724 = vpop.f32.mrb[0].mxu0
  %v725 = vadd.f32 0.0, %v724
  %v726 = vpop.f32.mrb[0].mxu0
  %727 = vmatprep.mubr.f32.mxu0 %v605
  %728 = vmatmul.mubr.f32.gmra.mrb[0].mxu0 %v604
  %v729 = vpop.f32.mrb[0].mxu0
  %v730 = vadd.f32 0.0, %v729
  %v731 = vpop.f32.mrb[0].mxu0
  %732 = vmatprep.mubr.f32.mxu0 %v607
  %733 = vmatmul.mubr.f32.gmra.mrb[0].mxu0 %v606
  %v734 = vpop.f32.mrb[0].mxu0
  %v735 = vadd.f32 0.0, %v734
  %v736 = vpop.f32.mrb[0].mxu0
  %737 = vmatprep.mubr.f32.mxu0 %v609
  %738 = vmatmul.mubr.f32.gmra.mrb[0].mxu0 %v608
  %v739 = vpop.f32.mrb[0].mxu0
  %v740 = vadd.f32 0.0, %v739
  %v741 = vpop.f32.mrb[0].mxu0
  %742 = vmatprep.mubr.f32.mxu0 %v611
  %743 = vmatmul.mubr.f32.gmra.mrb[0].mxu0 %v610
  %v744 = vpop.f32.mrb[0].mxu0
  %v745 = vadd.f32 0.0, %v744
  %v746 = vpop.f32.mrb[0].mxu0
  %747 = vmatprep.mubr.f32.mxu0 %v613
  %748 = vmatmul.mubr.f32.gmra.mrb[0].mxu0 %v612
  %v749 = vpop.f32.mrb[0].mxu0
  %v750 = vadd.f32 0.0, %v749
  %v751 = vpop.f32.mrb[0].mxu0
  %752 = vmatprep.mubr.f32.mxu0 %v615
  %753 = vmatmul.mubr.f32.gmra.mrb[0].mxu0 %v614
  %v754 = vpop.f32.mrb[0].mxu0
  %v755 = vadd.f32 0.0, %v754
  %v756 = vpop.f32.mrb[0].mxu0
  %757 = vdwg.mxu0
  %v758 = vld [vmem:[%s4] sm:$0xff]
  %v759 = vld [vmem:[%s4 + $0x8] sm:$0xff]
  %v760 = vld [vmem:[%s4 + $0x10] sm:$0xff]
  %v761 = vld [vmem:[%s4 + $0x18] sm:$0xff]
  %v762 = vld [vmem:[%s4 + $0x20] sm:$0xff]
  %v763 = vld [vmem:[%s4 + $0x28] sm:$0xff]
  %v764 = vld [vmem:[%s4 + $0x30] sm:$0xff]
  %v765 = vld [vmem:[%s4 + $0x38] sm:$0xff]
  %v766 = vld [vmem:[%s4 + $0x40] sm:$0xff]
  %v767 = vld [vmem:[%s4 + $0x48] sm:$0xff]
  %v768 = vld [vmem:[%s4 + $0x50] sm:$0xff]
  %v769 = vld [vmem:[%s4 + $0x58] sm:$0xff]
  %v770 = vld [vmem:[%s4 + $0x60] sm:$0x3]
  %s771 = scalar_lea.vmem %s5, 256
  %v772 = vld [vmem:[%s771] sm:$0xff]
  %v773 = vld [vmem:[%s771 + $0x8] sm:$0xff]
  %v774 = vld [vmem:[%s771 + $0x10] sm:$0xff]
  %v775 = vld [vmem:[%s771 + $0x18] sm:$0xff]
  %v776 = vld [vmem:[%s771 + $0x20] sm:$0xff]
  %v777 = vld [vmem:[%s771 + $0x28] sm:$0xff]
  %v778 = vld [vmem:[%s771 + $0x30] sm:$0xff]
  %v779 = vld [vmem:[%s771 + $0x38] sm:$0xff]
  %v780 = vld [vmem:[%s771 + $0x40] sm:$0xff]
  %v781 = vld [vmem:[%s771 + $0x48] sm:$0xff]
  %v782 = vld [vmem:[%s771 + $0x50] sm:$0xff]
  %v783 = vld [vmem:[%s771 + $0x58] sm:$0xff]
  %v784 = vld [vmem:[%s771 + $0x60] sm:$0xff]
  %v785 = vld [vmem:[%s771 + $0x68] sm:$0xff]
  %v786 = vld [vmem:[%s771 + $0x70] sm:$0xff]
  %v787 = vld [vmem:[%s771 + $0x78] sm:$0xff]
  %v788 = vld [vmem:[%s771 + $0x80] sm:$0xff]
  %v789 = vld [vmem:[%s771 + $0x88] sm:$0xff]
  %v790 = vld [vmem:[%s771 + $0x90] sm:$0xff]
  %v791 = vld [vmem:[%s771 + $0x98] sm:$0xff]
  %v792 = vld [vmem:[%s771 + $0xa0] sm:$0xff]
  %v793 = vld [vmem:[%s771 + $0xa8] sm:$0xff]
  %v794 = vld [vmem:[%s771 + $0xb0] sm:$0xff]
  %v795 = vld [vmem:[%s771 + $0xb8] sm:$0xff]
  %v796 = vld [vmem:[%s771 + $0xc0] sm:$0xff]
  %v797 = vld [vmem:[%s771 + $0xc8] sm:$0xff]
  %v798 = vld [vmem:[%s771 + $0xd0] sm:$0xff]
  %v799 = vld [vmem:[%s771 + $0xd8] sm:$0xff]
  %v800 = vld [vmem:[%s771 + $0xe0] sm:$0xff]
  %v801 = vld [vmem:[%s771 + $0xe8] sm:$0xff]
  %v802 = vld [vmem:[%s771 + $0xf0] sm:$0xff]
  %v803 = vld [vmem:[%s771 + $0xf8] sm:$0xff]
  %804 = vmatprep.subr.mxu0 0.0
  %805 = vmatpush1.msra.mxu0 %v772
  %806 = vmatprep.subr.mxu0 0.0
  %807 = vmatpush1.msra.mxu0 %v773
  %808 = vmatprep.subr.mxu0 0.0
  %809 = vmatpush1.msra.mxu0 %v774
  %810 = vmatprep.subr.mxu0 0.0
  %811 = vmatpush1.msra.mxu0 %v775
  %812 = vmatprep.subr.mxu0 0.0
  %813 = vmatpush1.msra.mxu0 %v776
  %814 = vmatprep.subr.mxu0 0.0
  %815 = vmatpush1.msra.mxu0 %v777
  %816 = vmatprep.subr.mxu0 0.0
  %817 = vmatpush1.msra.mxu0 %v778
  %818 = vmatprep.subr.mxu0 0.0
  %819 = vmatpush1.msra.mxu0 %v779
  %820 = vmatprep.subr.mxu0 0.0
  %821 = vmatpush1.msra.mxu0 %v780
  %822 = vmatprep.subr.mxu0 0.0
  %823 = vmatpush1.msra.mxu0 %v781
  %824 = vmatprep.subr.mxu0 0.0
  %825 = vmatpush1.msra.mxu0 %v782
  %826 = vmatprep.subr.mxu0 0.0
  %827 = vmatpush1.msra.mxu0 %v783
  %828 = vmatprep.subr.mxu0 0.0
  %829 = vmatpush1.msra.mxu0 %v784
  %830 = vmatprep.subr.mxu0 0.0
  %831 = vmatpush1.msra.mxu0 %v785
  %832 = vmatprep.subr.mxu0 0.0
  %833 = vmatpush1.msra.mxu0 %v786
  %834 = vmatprep.subr.mxu0 0.0
  %835 = vmatpush1.msra.mxu0 %v787
  %836 = vmatprep.subr.mxu0 0.0
  %837 = vmatpush1.msra.mxu0 %v788
  %838 = vmatprep.subr.mxu0 0.0
  %839 = vmatpush1.msra.mxu0 %v789
  %840 = vmatprep.subr.mxu0 0.0
  %841 = vmatpush1.msra.mxu0 %v790
  %842 = vmatprep.subr.mxu0 0.0
  %843 = vmatpush1.msra.mxu0 %v791
  %844 = vmatprep.subr.mxu0 0.0
  %845 = vmatpush1.msra.mxu0 %v792
  %846 = vmatprep.subr.mxu0 0.0
  %847 = vmatpush1.msra.mxu0 %v793
  %848 = vmatprep.subr.mxu0 0.0
  %849 = vmatpush1.msra.mxu0 %v794
  %850 = vmatprep.subr.mxu0 0.0
  %851 = vmatpush1.msra.mxu0 %v795
  %852 = vmatprep.subr.mxu0 0.0
  %853 = vmatpush1.msra.mxu0 %v796
  %854 = vmatprep.subr.mxu0 0.0
  %855 = vmatpush1.msra.mxu0 %v797
  %856 = vmatprep.subr.mxu0 0.0
  %857 = vmatpush1.msra.mxu0 %v798
  %858 = vmatprep.subr.mxu0 0.0
  %859 = vmatpush1.msra.mxu0 %v799
  %860 = vmatprep.subr.mxu0 0.0
  %861 = vmatpush1.msra.mxu0 %v800
  %862 = vmatprep.subr.mxu0 0.0
  %863 = vmatpush1.msra.mxu0 %v801
  %864 = vmatprep.subr.mxu0 0.0
  %865 = vmatpush1.msra.mxu0 %v802
  %866 = vmatprep.subr.mxu0 0.0
  %867 = vmatpush1.msra.mxu0 %v803
  %868 = vmatprep.mubr.f32.mxu0 %v599
  %869 = vmatmul.mubr.f32.gmra.mrb[0].mxu0 %v598
  %v870 = vpop.f32.mrb[0].mxu0
  %v871 = vadd.f32 0.0, %v870
  %v872 = vpop.f32.mrb[0].mxu0
  %873 = vmatprep.mubr.f32.mxu0 %v601
  %874 = vmatmul.mubr.f32.gmra.mrb[0].mxu0 %v600
  %v875 = vpop.f32.mrb[0].mxu0
  %v876 = vadd.f32 0.0, %v875
  %v877 = vpop.f32.mrb[0].mxu0
  %878 = vmatprep.mubr.f32.mxu0 %v603
  %879 = vmatmul.mubr.f32.gmra.mrb[0].mxu0 %v602
  %v880 = vpop.f32.mrb[0].mxu0
  %v881 = vadd.f32 0.0, %v880
  %v882 = vpop.f32.mrb[0].mxu0
  %883 = vmatprep.mubr.f32.mxu0 %v605
  %884 = vmatmul.mubr.f32.gmra.mrb[0].mxu0 %v604
  %v885 = vpop.f32.mrb[0].mxu0
  %v886 = vadd.f32 0.0, %v885
  %v887 = vpop.f32.mrb[0].mxu0
  %888 = vmatprep.mubr.f32.mxu0 %v607
  %889 = vmatmul.mubr.f32.gmra.mrb[0].mxu0 %v606
  %v890 = vpop.f32.mrb[0].mxu0
  %v891 = vadd.f32 0.0, %v890
  %v892 = vpop.f32.mrb[0].mxu0
  %893 = vmatprep.mubr.f32.mxu0 %v609
  %894 = vmatmul.mubr.f32.gmra.mrb[0].mxu0 %v608
  %v895 = vpop.f32.mrb[0].mxu0
  %v896 = vadd.f32 0.0, %v895
  %v897 = vpop.f32.mrb[0].mxu0
  %898 = vmatprep.mubr.f32.mxu0 %v611
  %899 = vmatmul.mubr.f32.gmra.mrb[0].mxu0 %v610
  %v900 = vpop.f32.mrb[0].mxu0
  %v901 = vadd.f32 0.0, %v900
  %v902 = vpop.f32.mrb[0].mxu0
  %903 = vmatprep.mubr.f32.mxu0 %v613
  %904 = vmatmul.mubr.f32.gmra.mrb[0].mxu0 %v612
  %v905 = vpop.f32.mrb[0].mxu0
  %v906 = vadd.f32 0.0, %v905
  %v907 = vpop.f32.mrb[0].mxu0
  %908 = vmatprep.mubr.f32.mxu0 %v615
  %909 = vmatmul.mubr.f32.gmra.mrb[0].mxu0 %v614
  %v910 = vpop.f32.mrb[0].mxu0
  %v911 = vadd.f32 0.0, %v910
  %v912 = vpop.f32.mrb[0].mxu0
  %913 = vdwg.mxu0
  %s914 = scalar_lea.vmem %s4, 104
  %v915 = vld [vmem:[%s914] sm:$0xff]
  %v916 = vld [vmem:[%s914 + $0x8] sm:$0xff]
  %v917 = vld [vmem:[%s914 + $0x10] sm:$0xff]
  %v918 = vld [vmem:[%s914 + $0x18] sm:$0xff]
  %v919 = vld [vmem:[%s914 + $0x20] sm:$0xff]
  %v920 = vld [vmem:[%s914 + $0x28] sm:$0xff]
  %v921 = vld [vmem:[%s914 + $0x30] sm:$0xff]
  %v922 = vld [vmem:[%s914 + $0x38] sm:$0xff]
  %v923 = vld [vmem:[%s914 + $0x40] sm:$0xff]
  %v924 = vld [vmem:[%s914 + $0x48] sm:$0xff]
  %v925 = vld [vmem:[%s914 + $0x50] sm:$0xff]
  %v926 = vld [vmem:[%s914 + $0x58] sm:$0xff]
  %v927 = vld [vmem:[%s914 + $0x60] sm:$0x3]
  %vm928 = vcmask 588800
  %v930 = vsel %vm928, %v915, 0
  %v933 = vsel %vm928, %v916, 0
  %v936 = vsel %vm928, %v917, 0
  %v939 = vsel %vm928, %v918, 0
  %v942 = vsel %vm928, %v919, 0
  %v945 = vsel %vm928, %v920, 0
  %v948 = vsel %vm928, %v921, 0
  %v951 = vsel %vm928, %v922, 0
  %v954 = vsel %vm928, %v923, 0
  %v957 = vsel %vm928, %v924, 0
  %v960 = vsel %vm928, %v925, 0
  %v963 = vsel %vm928, %v926, 0
  %v966 = vsel %vm928, %v927, 0
  %968 = vmatprep.subr.mxu0 0.0
  %969 = vmatpush1.msra.mxu0 %v871
  %970 = vmatprep.subr.mxu0 0.0
  %971 = vmatpush1.msra.mxu0 %v876
  %972 = vmatprep.subr.mxu0 0.0
  %973 = vmatpush1.msra.mxu0 %v881
  %974 = vmatprep.subr.mxu0 0.0
  %975 = vmatpush1.msra.mxu0 %v886
  %976 = vmatprep.subr.mxu0 0.0
  %977 = vmatpush1.msra.mxu0 %v891
  %978 = vmatprep.subr.mxu0 0.0
  %979 = vmatpush1.msra.mxu0 %v896
  %980 = vmatprep.subr.mxu0 0.0
  %981 = vmatpush1.msra.mxu0 %v901
  %982 = vmatprep.subr.mxu0 0.0
  %983 = vmatpush1.msra.mxu0 %v906
  %984 = vmatprep.subr.mxu0 0.0
  %985 = vmatpush1.msra.mxu0 %v911
  %986 = vmatprep.subr.mxu0 0.0
  %987 = vmatpush1.msra.mxu0 0.0
  %988 = vmatprep.subr.mxu0 0.0
  %989 = vmatpush1.msra.mxu0 0.0
  %990 = vmatprep.subr.mxu0 0.0
  %991 = vmatpush1.msra.mxu0 0.0
  %992 = vmatprep.subr.mxu0 0.0
  %993 = vmatpush1.msra.mxu0 0.0
  %994 = vmatprep.subr.mxu0 0.0
  %995 = vmatpush1.msra.mxu0 0.0
  %996 = vmatprep.subr.mxu0 0.0
  %997 = vmatpush1.msra.mxu0 0.0
  %998 = vmatprep.subr.mxu0 0.0
  %999 = vmatpush1.msra.mxu0 0.0
  %1000 = vmatprep.subr.mxu0 0.0
  %1001 = vmatpush1.msra.mxu0 0.0
  %1002 = vmatprep.subr.mxu0 0.0
  %1003 = vmatpush1.msra.mxu0 0.0
  %1004 = vmatprep.subr.mxu0 0.0
  %1005 = vmatpush1.msra.mxu0 0.0
  %1006 = vmatprep.subr.mxu0 0.0
  %1007 = vmatpush1.msra.mxu0 0.0
  %1008 = vmatprep.subr.mxu0 0.0
  %1009 = vmatpush1.msra.mxu0 0.0
  %1010 = vmatprep.subr.mxu0 0.0
  %1011 = vmatpush1.msra.mxu0 0.0
  %1012 = vmatprep.subr.mxu0 0.0
  %1013 = vmatpush1.msra.mxu0 0.0
  %1014 = vmatprep.subr.mxu0 0.0
  %1015 = vmatpush1.msra.mxu0 0.0
  %1016 = vmatprep.subr.mxu0 0.0
  %1017 = vmatpush1.msra.mxu0 0.0
  %1018 = vmatprep.subr.mxu0 0.0
  %1019 = vmatpush1.msra.mxu0 0.0
  %1020 = vmatprep.subr.mxu0 0.0
  %1021 = vmatpush1.msra.mxu0 0.0
  %1022 = vmatprep.subr.mxu0 0.0
  %1023 = vmatpush1.msra.mxu0 0.0
  %1024 = vmatprep.subr.mxu0 0.0
  %1025 = vmatpush1.msra.mxu0 0.0
  %1026 = vmatprep.subr.mxu0 0.0
  %1027 = vmatpush1.msra.mxu0 0.0
  %1028 = vmatprep.subr.mxu0 0.0
  %1029 = vmatpush1.msra.mxu0 0.0
  %1030 = vmatprep.subr.mxu0 0.0
  %1031 = vmatpush1.msra.mxu0 0.0
  %1032 = vmatprep.mubr.f32.mxu0 0.0
  %1033 = vmatmul.mubr.f32.gmra.mrb[0].mxu0 %v930
  %v1034 = vpop.f32.mrb[0].mxu0
  %v1035 = vadd.f32 0.0, %v1034
  %v1036 = vpop.f32.mrb[0].mxu0
  %1037 = vmatprep.mubr.f32.mxu0 0.0
  %1038 = vmatmul.mubr.f32.gmra.mrb[0].mxu0 %v933
  %v1039 = vpop.f32.mrb[0].mxu0
  %v1040 = vadd.f32 0.0, %v1039
  %v1041 = vpop.f32.mrb[0].mxu0
  %1042 = vmatprep.mubr.f32.mxu0 0.0
  %1043 = vmatmul.mubr.f32.gmra.mrb[0].mxu0 %v936
  %v1044 = vpop.f32.mrb[0].mxu0
  %v1045 = vadd.f32 0.0, %v1044
  %v1046 = vpop.f32.mrb[0].mxu0
  %1047 = vmatprep.mubr.f32.mxu0 0.0
  %1048 = vmatmul.mubr.f32.gmra.mrb[0].mxu0 %v939
  %v1049 = vpop.f32.mrb[0].mxu0
  %v1050 = vadd.f32 0.0, %v1049
  %v1051 = vpop.f32.mrb[0].mxu0
  %1052 = vmatprep.mubr.f32.mxu0 0.0
  %1053 = vmatmul.mubr.f32.gmra.mrb[0].mxu0 %v942
  %v1054 = vpop.f32.mrb[0].mxu0
  %v1055 = vadd.f32 0.0, %v1054
  %v1056 = vpop.f32.mrb[0].mxu0
  %1057 = vmatprep.mubr.f32.mxu0 0.0
  %1058 = vmatmul.mubr.f32.gmra.mrb[0].mxu0 %v945
  %v1059 = vpop.f32.mrb[0].mxu0
  %v1060 = vadd.f32 0.0, %v1059
  %v1061 = vpop.f32.mrb[0].mxu0
  %1062 = vmatprep.mubr.f32.mxu0 0.0
  %1063 = vmatmul.mubr.f32.gmra.mrb[0].mxu0 %v948
  %v1064 = vpop.f32.mrb[0].mxu0
  %v1065 = vadd.f32 0.0, %v1064
  %v1066 = vpop.f32.mrb[0].mxu0
  %1067 = vmatprep.mubr.f32.mxu0 0.0
  %1068 = vmatmul.mubr.f32.gmra.mrb[0].mxu0 %v951
  %v1069 = vpop.f32.mrb[0].mxu0
  %v1070 = vadd.f32 0.0, %v1069
  %v1071 = vpop.f32.mrb[0].mxu0
  %1072 = vmatprep.mubr.f32.mxu0 0.0
  %1073 = vmatmul.mubr.f32.gmra.mrb[0].mxu0 %v954
  %v1074 = vpop.f32.mrb[0].mxu0
  %v1075 = vadd.f32 0.0, %v1074
  %v1076 = vpop.f32.mrb[0].mxu0
  %1077 = vmatprep.mubr.f32.mxu0 0.0
  %1078 = vmatmul.mubr.f32.gmra.mrb[0].mxu0 %v957
  %v1079 = vpop.f32.mrb[0].mxu0
  %v1080 = vadd.f32 0.0, %v1079
  %v1081 = vpop.f32.mrb[0].mxu0
  %1082 = vmatprep.mubr.f32.mxu0 0.0
  %1083 = vmatmul.mubr.f32.gmra.mrb[0].mxu0 %v960
  %v1084 = vpop.f32.mrb[0].mxu0
  %v1085 = vadd.f32 0.0, %v1084
  %v1086 = vpop.f32.mrb[0].mxu0
  %1087 = vmatprep.mubr.f32.mxu0 0.0
  %1088 = vmatmul.mubr.f32.gmra.mrb[0].mxu0 %v963
  %v1089 = vpop.f32.mrb[0].mxu0
  %v1090 = vadd.f32 0.0, %v1089
  %v1091 = vpop.f32.mrb[0].mxu0
  %1092 = vmatprep.mubr.f32.mxu0 0.0
  %1093 = vmatmul.mubr.f32.gmra.mrb[0].mxu0 %v966
  %v1094 = vpop.f32.mrb[0].mxu0
  %v1095 = vadd.f32 0.0, %v1094
  %v1096 = vpop.f32.mrb[0].mxu0
  %1097 = vdwg.mxu0
  %v1099 = vsel %vm928, %v758, 0
  %v1102 = vsel %vm928, %v759, 0
  %v1105 = vsel %vm928, %v760, 0
  %v1108 = vsel %vm928, %v761, 0
  %v1111 = vsel %vm928, %v762, 0
  %v1114 = vsel %vm928, %v763, 0
  %v1117 = vsel %vm928, %v764, 0
  %v1120 = vsel %vm928, %v765, 0
  %v1123 = vsel %vm928, %v766, 0
  %v1126 = vsel %vm928, %v767, 0
  %v1129 = vsel %vm928, %v768, 0
  %v1132 = vsel %vm928, %v769, 0
  %v1135 = vsel %vm928, %v770, 0
  %1137 = vmatprep.subr.mxu0 0.0
  %1138 = vmatpush1.msra.mxu0 %v715
  %1139 = vmatprep.subr.mxu0 0.0
  %1140 = vmatpush1.msra.mxu0 %v720
  %1141 = vmatprep.subr.mxu0 0.0
  %1142 = vmatpush1.msra.mxu0 %v725
  %1143 = vmatprep.subr.mxu0 0.0
  %1144 = vmatpush1.msra.mxu0 %v730
  %1145 = vmatprep.subr.mxu0 0.0
  %1146 = vmatpush1.msra.mxu0 %v735
  %1147 = vmatprep.subr.mxu0 0.0
  %1148 = vmatpush1.msra.mxu0 %v740
  %1149 = vmatprep.subr.mxu0 0.0
  %1150 = vmatpush1.msra.mxu0 %v745
  %1151 = vmatprep.subr.mxu0 0.0
  %1152 = vmatpush1.msra.mxu0 %v750
  %1153 = vmatprep.subr.mxu0 0.0
  %1154 = vmatpush1.msra.mxu0 %v755
  %1155 = vmatprep.subr.mxu0 0.0
  %1156 = vmatpush1.msra.mxu0 0.0
  %1157 = vmatprep.subr.mxu0 0.0
  %1158 = vmatpush1.msra.mxu0 0.0
  %1159 = vmatprep.subr.mxu0 0.0
  %1160 = vmatpush1.msra.mxu0 0.0
  %1161 = vmatprep.subr.mxu0 0.0
  %1162 = vmatpush1.msra.mxu0 0.0
  %1163 = vmatprep.subr.mxu0 0.0
  %1164 = vmatpush1.msra.mxu0 0.0
  %1165 = vmatprep.subr.mxu0 0.0
  %1166 = vmatpush1.msra.mxu0 0.0
  %1167 = vmatprep.subr.mxu0 0.0
  %1168 = vmatpush1.msra.mxu0 0.0
  %1169 = vmatprep.subr.mxu0 0.0
  %1170 = vmatpush1.msra.mxu0 0.0
  %1171 = vmatprep.subr.mxu0 0.0
  %1172 = vmatpush1.msra.mxu0 0.0
  %1173 = vmatprep.subr.mxu0 0.0
  %1174 = vmatpush1.msra.mxu0 0.0
  %1175 = vmatprep.subr.mxu0 0.0
  %1176 = vmatpush1.msra.mxu0 0.0
  %1177 = vmatprep.subr.mxu0 0.0
  %1178 = vmatpush1.msra.mxu0 0.0
  %1179 = vmatprep.subr.mxu0 0.0
  %1180 = vmatpush1.msra.mxu0 0.0
  %1181 = vmatprep.subr.mxu0 0.0
  %1182 = vmatpush1.msra.mxu0 0.0
  %1183 = vmatprep.subr.mxu0 0.0
  %1184 = vmatpush1.msra.mxu0 0.0
  %1185 = vmatprep.subr.mxu0 0.0
  %1186 = vmatpush1.msra.mxu0 0.0
  %1187 = vmatprep.subr.mxu0 0.0
  %1188 = vmatpush1.msra.mxu0 0.0
  %1189 = vmatprep.subr.mxu0 0.0
  %1190 = vmatpush1.msra.mxu0 0.0
  %1191 = vmatprep.subr.mxu0 0.0
  %1192 = vmatpush1.msra.mxu0 0.0
  %1193 = vmatprep.subr.mxu0 0.0
  %1194 = vmatpush1.msra.mxu0 0.0
  %1195 = vmatprep.subr.mxu0 0.0
  %1196 = vmatpush1.msra.mxu0 0.0
  %1197 = vmatprep.subr.mxu0 0.0
  %1198 = vmatpush1.msra.mxu0 0.0
  %1199 = vmatprep.subr.mxu0 0.0
  %1200 = vmatpush1.msra.mxu0 0.0
  %1201 = vmatprep.mubr.f32.mxu0 0.0
  %1202 = vmatmul.mubr.f32.gmra.mrb[0].mxu0 %v1099
  %v1203 = vpop.f32.mrb[0].mxu0
  %v1204 = vadd.f32 %v1035, %v1203
  %v1205 = vpop.f32.mrb[0].mxu0
  %1206 = vmatprep.mubr.f32.mxu0 0.0
  %1207 = vmatmul.mubr.f32.gmra.mrb[0].mxu0 %v1102
  %v1208 = vpop.f32.mrb[0].mxu0
  %v1209 = vadd.f32 %v1040, %v1208
  %v1210 = vpop.f32.mrb[0].mxu0
  %1211 = vmatprep.mubr.f32.mxu0 0.0
  %1212 = vmatmul.mubr.f32.gmra.mrb[0].mxu0 %v1105
  %v1213 = vpop.f32.mrb[0].mxu0
  %v1214 = vadd.f32 %v1045, %v1213
  %v1215 = vpop.f32.mrb[0].mxu0
  %1216 = vmatprep.mubr.f32.mxu0 0.0
  %1217 = vmatmul.mubr.f32.gmra.mrb[0].mxu0 %v1108
  %v1218 = vpop.f32.mrb[0].mxu0
  %v1219 = vadd.f32 %v1050, %v1218
  %v1220 = vpop.f32.mrb[0].mxu0
  %1221 = vmatprep.mubr.f32.mxu0 0.0
  %1222 = vmatmul.mubr.f32.gmra.mrb[0].mxu0 %v1111
  %v1223 = vpop.f32.mrb[0].mxu0
  %v1224 = vadd.f32 %v1055, %v1223
  %v1225 = vpop.f32.mrb[0].mxu0
  %1226 = vmatprep.mubr.f32.mxu0 0.0
  %1227 = vmatmul.mubr.f32.gmra.mrb[0].mxu0 %v1114
  %v1228 = vpop.f32.mrb[0].mxu0
  %v1229 = vadd.f32 %v1060, %v1228
  %v1230 = vpop.f32.mrb[0].mxu0
  %1231 = vmatprep.mubr.f32.mxu0 0.0
  %1232 = vmatmul.mubr.f32.gmra.mrb[0].mxu0 %v1117
  %v1233 = vpop.f32.mrb[0].mxu0
  %v1234 = vadd.f32 %v1065, %v1233
  %v1235 = vpop.f32.mrb[0].mxu0
  %1236 = vmatprep.mubr.f32.mxu0 0.0
  %1237 = vmatmul.mubr.f32.gmra.mrb[0].mxu0 %v1120
  %v1238 = vpop.f32.mrb[0].mxu0
  %v1239 = vadd.f32 %v1070, %v1238
  %v1240 = vpop.f32.mrb[0].mxu0
  %1241 = vmatprep.mubr.f32.mxu0 0.0
  %1242 = vmatmul.mubr.f32.gmra.mrb[0].mxu0 %v1123
  %v1243 = vpop.f32.mrb[0].mxu0
  %v1244 = vadd.f32 %v1075, %v1243
  %v1245 = vpop.f32.mrb[0].mxu0
  %1246 = vmatprep.mubr.f32.mxu0 0.0
  %1247 = vmatmul.mubr.f32.gmra.mrb[0].mxu0 %v1126
  %v1248 = vpop.f32.mrb[0].mxu0
  %v1249 = vadd.f32 %v1080, %v1248
  %v1250 = vpop.f32.mrb[0].mxu0
  %1251 = vmatprep.mubr.f32.mxu0 0.0
  %1252 = vmatmul.mubr.f32.gmra.mrb[0].mxu0 %v1129
  %v1253 = vpop.f32.mrb[0].mxu0
  %v1254 = vadd.f32 %v1085, %v1253
  %v1255 = vpop.f32.mrb[0].mxu0
  %1256 = vmatprep.mubr.f32.mxu0 0.0
  %1257 = vmatmul.mubr.f32.gmra.mrb[0].mxu0 %v1132
  %v1258 = vpop.f32.mrb[0].mxu0
  %v1259 = vadd.f32 %v1090, %v1258
  %v1260 = vpop.f32.mrb[0].mxu0
  %1261 = vmatprep.mubr.f32.mxu0 0.0
  %1262 = vmatmul.mubr.f32.gmra.mrb[0].mxu0 %v1135
  %v1263 = vpop.f32.mrb[0].mxu0
  %v1264 = vadd.f32 %v1095, %v1263
  %v1265 = vpop.f32.mrb[0].mxu0
  %1266 = vdwg.mxu0
  %s1267 = scalar_lea.vmem %s5, 512
  %v1268 = vld [vmem:[%s1267] sm:$0xff]
  %v1269 = vld [vmem:[%s1267 + $0x8] sm:$0xff]
  %v1270 = vld [vmem:[%s1267 + $0x10] sm:$0xff]
  %v1271 = vld [vmem:[%s1267 + $0x18] sm:$0xff]
  %v1272 = vld [vmem:[%s1267 + $0x20] sm:$0xff]
  %v1273 = vld [vmem:[%s1267 + $0x28] sm:$0xff]
  %v1274 = vld [vmem:[%s1267 + $0x30] sm:$0xff]
  %v1275 = vld [vmem:[%s1267 + $0x38] sm:$0xff]
  %v1276 = vld [vmem:[%s1267 + $0x40] sm:$0xff]
  %v1277 = vld [vmem:[%s1267 + $0x48] sm:$0xff]
  %v1278 = vld [vmem:[%s1267 + $0x50] sm:$0xff]
  %v1279 = vld [vmem:[%s1267 + $0x58] sm:$0xff]
  %v1280 = vld [vmem:[%s1267 + $0x60] sm:$0xff]
  %v1281 = vld [vmem:[%s1267 + $0x68] sm:$0xff]
  %v1282 = vld [vmem:[%s1267 + $0x70] sm:$0xff]
  %v1283 = vld [vmem:[%s1267 + $0x78] sm:$0xff]
  %v1284 = vld [vmem:[%s1267 + $0x80] sm:$0xff]
  %v1285 = vld [vmem:[%s1267 + $0x88] sm:$0xff]
  %v1286 = vld [vmem:[%s1267 + $0x90] sm:$0xff]
  %v1287 = vld [vmem:[%s1267 + $0x98] sm:$0xff]
  %v1288 = vld [vmem:[%s1267 + $0xa0] sm:$0xff]
  %v1289 = vld [vmem:[%s1267 + $0xa8] sm:$0xff]
  %v1290 = vld [vmem:[%s1267 + $0xb0] sm:$0xff]
  %v1291 = vld [vmem:[%s1267 + $0xb8] sm:$0xff]
  %v1292 = vld [vmem:[%s1267 + $0xc0] sm:$0xff]
  %v1293 = vld [vmem:[%s1267 + $0xc8] sm:$0xff]
  %v1294 = vld [vmem:[%s1267 + $0xd0] sm:$0xff]
  %v1295 = vld [vmem:[%s1267 + $0xd8] sm:$0xff]
  %v1296 = vld [vmem:[%s1267 + $0xe0] sm:$0xff]
  %v1297 = vld [vmem:[%s1267 + $0xe8] sm:$0xff]
  %v1298 = vld [vmem:[%s1267 + $0xf0] sm:$0xff]
  %v1299 = vld [vmem:[%s1267 + $0xf8] sm:$0xff]
  %1300 = vmatprep.subr.mxu0 0.0
  %1301 = vmatpush1.msra.mxu0 %v1268
  %1302 = vmatprep.subr.mxu0 0.0
  %1303 = vmatpush1.msra.mxu0 %v1269
  %1304 = vmatprep.subr.mxu0 0.0
  %1305 = vmatpush1.msra.mxu0 %v1270
  %1306 = vmatprep.subr.mxu0 0.0
  %1307 = vmatpush1.msra.mxu0 %v1271
  %1308 = vmatprep.subr.mxu0 0.0
  %1309 = vmatpush1.msra.mxu0 %v1272
  %1310 = vmatprep.subr.mxu0 0.0
  %1311 = vmatpush1.msra.mxu0 %v1273
  %1312 = vmatprep.subr.mxu0 0.0
  %1313 = vmatpush1.msra.mxu0 %v1274
  %1314 = vmatprep.subr.mxu0 0.0
  %1315 = vmatpush1.msra.mxu0 %v1275
  %1316 = vmatprep.subr.mxu0 0.0
  %1317 = vmatpush1.msra.mxu0 %v1276
  %1318 = vmatprep.subr.mxu0 0.0
  %1319 = vmatpush1.msra.mxu0 %v1277
  %1320 = vmatprep.subr.mxu0 0.0
  %1321 = vmatpush1.msra.mxu0 %v1278
  %1322 = vmatprep.subr.mxu0 0.0
  %1323 = vmatpush1.msra.mxu0 %v1279
  %1324 = vmatprep.subr.mxu0 0.0
  %1325 = vmatpush1.msra.mxu0 %v1280
  %1326 = vmatprep.subr.mxu0 0.0
  %1327 = vmatpush1.msra.mxu0 %v1281
  %1328 = vmatprep.subr.mxu0 0.0
  %1329 = vmatpush1.msra.mxu0 %v1282
  %1330 = vmatprep.subr.mxu0 0.0
  %1331 = vmatpush1.msra.mxu0 %v1283
  %1332 = vmatprep.subr.mxu0 0.0
  %1333 = vmatpush1.msra.mxu0 %v1284
  %1334 = vmatprep.subr.mxu0 0.0
  %1335 = vmatpush1.msra.mxu0 %v1285
  %1336 = vmatprep.subr.mxu0 0.0
  %1337 = vmatpush1.msra.mxu0 %v1286
  %1338 = vmatprep.subr.mxu0 0.0
  %1339 = vmatpush1.msra.mxu0 %v1287
  %1340 = vmatprep.subr.mxu0 0.0
  %1341 = vmatpush1.msra.mxu0 %v1288
  %1342 = vmatprep.subr.mxu0 0.0
  %1343 = vmatpush1.msra.mxu0 %v1289
  %1344 = vmatprep.subr.mxu0 0.0
  %1345 = vmatpush1.msra.mxu0 %v1290
  %1346 = vmatprep.subr.mxu0 0.0
  %1347 = vmatpush1.msra.mxu0 %v1291
  %1348 = vmatprep.subr.mxu0 0.0
  %1349 = vmatpush1.msra.mxu0 %v1292
  %1350 = vmatprep.subr.mxu0 0.0
  %1351 = vmatpush1.msra.mxu0 %v1293
  %1352 = vmatprep.subr.mxu0 0.0
  %1353 = vmatpush1.msra.mxu0 %v1294
  %1354 = vmatprep.subr.mxu0 0.0
  %1355 = vmatpush1.msra.mxu0 %v1295
  %1356 = vmatprep.subr.mxu0 0.0
  %1357 = vmatpush1.msra.mxu0 %v1296
  %1358 = vmatprep.subr.mxu0 0.0
  %1359 = vmatpush1.msra.mxu0 %v1297
  %1360 = vmatprep.subr.mxu0 0.0
  %1361 = vmatpush1.msra.mxu0 %v1298
  %1362 = vmatprep.subr.mxu0 0.0
  %1363 = vmatpush1.msra.mxu0 %v1299
  %1364 = vmatprep.mubr.f32.mxu0 %v599
  %1365 = vmatmul.mubr.f32.gmra.mrb[0].mxu0 %v598
  %v1366 = vpop.f32.mrb[0].mxu0
  %v1367 = vadd.f32 0.0, %v1366
  %v1368 = vpop.f32.mrb[0].mxu0
  %1369 = vmatprep.mubr.f32.mxu0 %v601
  %1370 = vmatmul.mubr.f32.gmra.mrb[0].mxu0 %v600
  %v1371 = vpop.f32.mrb[0].mxu0
  %v1372 = vadd.f32 0.0, %v1371
  %v1373 = vpop.f32.mrb[0].mxu0
  %1374 = vmatprep.mubr.f32.mxu0 %v603
  %1375 = vmatmul.mubr.f32.gmra.mrb[0].mxu0 %v602
  %v1376 = vpop.f32.mrb[0].mxu0
  %v1377 = vadd.f32 0.0, %v1376
  %v1378 = vpop.f32.mrb[0].mxu0
  %1379 = vmatprep.mubr.f32.mxu0 %v605
  %1380 = vmatmul.mubr.f32.gmra.mrb[0].mxu0 %v604
  %v1381 = vpop.f32.mrb[0].mxu0
  %v1382 = vadd.f32 0.0, %v1381
  %v1383 = vpop.f32.mrb[0].mxu0
  %1384 = vmatprep.mubr.f32.mxu0 %v607
  %1385 = vmatmul.mubr.f32.gmra.mrb[0].mxu0 %v606
  %v1386 = vpop.f32.mrb[0].mxu0
  %v1387 = vadd.f32 0.0, %v1386
  %v1388 = vpop.f32.mrb[0].mxu0
  %1389 = vmatprep.mubr.f32.mxu0 %v609
  %1390 = vmatmul.mubr.f32.gmra.mrb[0].mxu0 %v608
  %v1391 = vpop.f32.mrb[0].mxu0
  %v1392 = vadd.f32 0.0, %v1391
  %v1393 = vpop.f32.mrb[0].mxu0
  %1394 = vmatprep.mubr.f32.mxu0 %v611
  %1395 = vmatmul.mubr.f32.gmra.mrb[0].mxu0 %v610
  %v1396 = vpop.f32.mrb[0].mxu0
  %v1397 = vadd.f32 0.0, %v1396
  %v1398 = vpop.f32.mrb[0].mxu0
  %1399 = vmatprep.mubr.f32.mxu0 %v613
  %1400 = vmatmul.mubr.f32.gmra.mrb[0].mxu0 %v612
  %v1401 = vpop.f32.mrb[0].mxu0
  %v1402 = vadd.f32 0.0, %v1401
  %v1403 = vpop.f32.mrb[0].mxu0
  %1404 = vmatprep.mubr.f32.mxu0 %v615
  %1405 = vmatmul.mubr.f32.gmra.mrb[0].mxu0 %v614
  %v1406 = vpop.f32.mrb[0].mxu0
  %v1407 = vadd.f32 0.0, %v1406
  %v1408 = vpop.f32.mrb[0].mxu0
  %1409 = vdwg.mxu0
  %s1410 = scalar_lea.vmem %s4, 208
  %v1411 = vld [vmem:[%s1410] sm:$0xff]
  %v1412 = vld [vmem:[%s1410 + $0x8] sm:$0xff]
  %v1413 = vld [vmem:[%s1410 + $0x10] sm:$0xff]
  %v1414 = vld [vmem:[%s1410 + $0x18] sm:$0xff]
  %v1415 = vld [vmem:[%s1410 + $0x20] sm:$0xff]
  %v1416 = vld [vmem:[%s1410 + $0x28] sm:$0xff]
  %v1417 = vld [vmem:[%s1410 + $0x30] sm:$0xff]
  %v1418 = vld [vmem:[%s1410 + $0x38] sm:$0xff]
  %v1419 = vld [vmem:[%s1410 + $0x40] sm:$0xff]
  %v1420 = vld [vmem:[%s1410 + $0x48] sm:$0xff]
  %v1421 = vld [vmem:[%s1410 + $0x50] sm:$0xff]
  %v1422 = vld [vmem:[%s1410 + $0x58] sm:$0xff]
  %v1423 = vld [vmem:[%s1410 + $0x60] sm:$0x3]
  %v1425 = vsel %vm928, %v1411, 0
  %v1428 = vsel %vm928, %v1412, 0
  %v1431 = vsel %vm928, %v1413, 0
  %v1434 = vsel %vm928, %v1414, 0
  %v1437 = vsel %vm928, %v1415, 0
  %v1440 = vsel %vm928, %v1416, 0
  %v1443 = vsel %vm928, %v1417, 0
  %v1446 = vsel %vm928, %v1418, 0
  %v1449 = vsel %vm928, %v1419, 0
  %v1452 = vsel %vm928, %v1420, 0
  %v1455 = vsel %vm928, %v1421, 0
  %v1458 = vsel %vm928, %v1422, 0
  %v1461 = vsel %vm928, %v1423, 0
  %1463 = vmatprep.subr.mxu0 0.0
  %1464 = vmatpush1.msra.mxu0 %v1367
  %1465 = vmatprep.subr.mxu0 0.0
  %1466 = vmatpush1.msra.mxu0 %v1372
  %1467 = vmatprep.subr.mxu0 0.0
  %1468 = vmatpush1.msra.mxu0 %v1377
  %1469 = vmatprep.subr.mxu0 0.0
  %1470 = vmatpush1.msra.mxu0 %v1382
  %1471 = vmatprep.subr.mxu0 0.0
  %1472 = vmatpush1.msra.mxu0 %v1387
  %1473 = vmatprep.subr.mxu0 0.0
  %1474 = vmatpush1.msra.mxu0 %v1392
  %1475 = vmatprep.subr.mxu0 0.0
  %1476 = vmatpush1.msra.mxu0 %v1397
  %1477 = vmatprep.subr.mxu0 0.0
  %1478 = vmatpush1.msra.mxu0 %v1402
  %1479 = vmatprep.subr.mxu0 0.0
  %1480 = vmatpush1.msra.mxu0 %v1407
  %1481 = vmatprep.subr.mxu0 0.0
  %1482 = vmatpush1.msra.mxu0 0.0
  %1483 = vmatprep.subr.mxu0 0.0
  %1484 = vmatpush1.msra.mxu0 0.0
  %1485 = vmatprep.subr.mxu0 0.0
  %1486 = vmatpush1.msra.mxu0 0.0
  %1487 = vmatprep.subr.mxu0 0.0
  %1488 = vmatpush1.msra.mxu0 0.0
  %1489 = vmatprep.subr.mxu0 0.0
  %1490 = vmatpush1.msra.mxu0 0.0
  %1491 = vmatprep.subr.mxu0 0.0
  %1492 = vmatpush1.msra.mxu0 0.0
  %1493 = vmatprep.subr.mxu0 0.0
  %1494 = vmatpush1.msra.mxu0 0.0
  %1495 = vmatprep.subr.mxu0 0.0
  %1496 = vmatpush1.msra.mxu0 0.0
  %1497 = vmatprep.subr.mxu0 0.0
  %1498 = vmatpush1.msra.mxu0 0.0
  %1499 = vmatprep.subr.mxu0 0.0
  %1500 = vmatpush1.msra.mxu0 0.0
  %1501 = vmatprep.subr.mxu0 0.0
  %1502 = vmatpush1.msra.mxu0 0.0
  %1503 = vmatprep.subr.mxu0 0.0
  %1504 = vmatpush1.msra.mxu0 0.0
  %1505 = vmatprep.subr.mxu0 0.0
  %1506 = vmatpush1.msra.mxu0 0.0
  %1507 = vmatprep.subr.mxu0 0.0
  %1508 = vmatpush1.msra.mxu0 0.0
  %1509 = vmatprep.subr.mxu0 0.0
  %1510 = vmatpush1.msra.mxu0 0.0
  %1511 = vmatprep.subr.mxu0 0.0
  %1512 = vmatpush1.msra.mxu0 0.0
  %1513 = vmatprep.subr.mxu0 0.0
  %1514 = vmatpush1.msra.mxu0 0.0
  %1515 = vmatprep.subr.mxu0 0.0
  %1516 = vmatpush1.msra.mxu0 0.0
  %1517 = vmatprep.subr.mxu0 0.0
  %1518 = vmatpush1.msra.mxu0 0.0
  %1519 = vmatprep.subr.mxu0 0.0
  %1520 = vmatpush1.msra.mxu0 0.0
  %1521 = vmatprep.subr.mxu0 0.0
  %1522 = vmatpush1.msra.mxu0 0.0
  %1523 = vmatprep.subr.mxu0 0.0
  %1524 = vmatpush1.msra.mxu0 0.0
  %1525 = vmatprep.subr.mxu0 0.0
  %1526 = vmatpush1.msra.mxu0 0.0
  %1527 = vmatprep.mubr.f32.mxu0 0.0
  %1528 = vmatmul.mubr.f32.gmra.mrb[0].mxu0 %v1425
  %v1529 = vpop.f32.mrb[0].mxu0
  %v1530 = vadd.f32 0.0, %v1529
  %v1531 = vpop.f32.mrb[0].mxu0
  %1532 = vmatprep.mubr.f32.mxu0 0.0
  %1533 = vmatmul.mubr.f32.gmra.mrb[0].mxu0 %v1428
  %v1534 = vpop.f32.mrb[0].mxu0
  %v1535 = vadd.f32 0.0, %v1534
  %v1536 = vpop.f32.mrb[0].mxu0
  %1537 = vmatprep.mubr.f32.mxu0 0.0
  %1538 = vmatmul.mubr.f32.gmra.mrb[0].mxu0 %v1431
  %v1539 = vpop.f32.mrb[0].mxu0
  %v1540 = vadd.f32 0.0, %v1539
  %v1541 = vpop.f32.mrb[0].mxu0
  %1542 = vmatprep.mubr.f32.mxu0 0.0
  %1543 = vmatmul.mubr.f32.gmra.mrb[0].mxu0 %v1434
  %v1544 = vpop.f32.mrb[0].mxu0
  %v1545 = vadd.f32 0.0, %v1544
  %v1546 = vpop.f32.mrb[0].mxu0
  %1547 = vmatprep.mubr.f32.mxu0 0.0
  %1548 = vmatmul.mubr.f32.gmra.mrb[0].mxu0 %v1437
  %v1549 = vpop.f32.mrb[0].mxu0
  %v1550 = vadd.f32 0.0, %v1549
  %v1551 = vpop.f32.mrb[0].mxu0
  %1552 = vmatprep.mubr.f32.mxu0 0.0
  %1553 = vmatmul.mubr.f32.gmra.mrb[0].mxu0 %v1440
  %v1554 = vpop.f32.mrb[0].mxu0
  %v1555 = vadd.f32 0.0, %v1554
  %v1556 = vpop.f32.mrb[0].mxu0
  %1557 = vmatprep.mubr.f32.mxu0 0.0
  %1558 = vmatmul.mubr.f32.gmra.mrb[0].mxu0 %v1443
  %v1559 = vpop.f32.mrb[0].mxu0
  %v1560 = vadd.f32 0.0, %v1559
  %v1561 = vpop.f32.mrb[0].mxu0
  %1562 = vmatprep.mubr.f32.mxu0 0.0
  %1563 = vmatmul.mubr.f32.gmra.mrb[0].mxu0 %v1446
  %v1564 = vpop.f32.mrb[0].mxu0
  %v1565 = vadd.f32 0.0, %v1564
  %v1566 = vpop.f32.mrb[0].mxu0
  %1567 = vmatprep.mubr.f32.mxu0 0.0
  %1568 = vmatmul.mubr.f32.gmra.mrb[0].mxu0 %v1449
  %v1569 = vpop.f32.mrb[0].mxu0
  %v1570 = vadd.f32 0.0, %v1569
  %v1571 = vpop.f32.mrb[0].mxu0
  %1572 = vmatprep.mubr.f32.mxu0 0.0
  %1573 = vmatmul.mubr.f32.gmra.mrb[0].mxu0 %v1452
  %v1574 = vpop.f32.mrb[0].mxu0
  %v1575 = vadd.f32 0.0, %v1574
  %v1576 = vpop.f32.mrb[0].mxu0
  %1577 = vmatprep.mubr.f32.mxu0 0.0
  %1578 = vmatmul.mubr.f32.gmra.mrb[0].mxu0 %v1455
  %v1579 = vpop.f32.mrb[0].mxu0
  %v1580 = vadd.f32 0.0, %v1579
  %v1581 = vpop.f32.mrb[0].mxu0
  %1582 = vmatprep.mubr.f32.mxu0 0.0
  %1583 = vmatmul.mubr.f32.gmra.mrb[0].mxu0 %v1458
  %v1584 = vpop.f32.mrb[0].mxu0
  %v1585 = vadd.f32 0.0, %v1584
  %v1586 = vpop.f32.mrb[0].mxu0
  %1587 = vmatprep.mubr.f32.mxu0 0.0
  %1588 = vmatmul.mubr.f32.gmra.mrb[0].mxu0 %v1461
  %v1589 = vpop.f32.mrb[0].mxu0
  %v1590 = vadd.f32 0.0, %v1589
  %v1591 = vpop.f32.mrb[0].mxu0
  %1592 = vdwg.mxu0
  %v1593 = vadd.f32 %v1204, %v1530
  %v1594 = vadd.f32 %v1209, %v1535
  %v1595 = vadd.f32 %v1214, %v1540
  %v1596 = vadd.f32 %v1219, %v1545
  %v1597 = vadd.f32 %v1224, %v1550
  %v1598 = vadd.f32 %v1229, %v1555
  %v1599 = vadd.f32 %v1234, %v1560
  %v1600 = vadd.f32 %v1239, %v1565
  %v1601 = vadd.f32 %v1244, %v1570
  %v1602 = vadd.f32 %v1249, %v1575
  %v1603 = vadd.f32 %v1254, %v1580
  %v1604 = vadd.f32 %v1259, %v1585
  %v1605 = vadd.f32 %v1264, %v1590
  %s1606 = scalar_lea.vmem %s5, 768
  %v1607 = vld [vmem:[%s1606] sm:$0xff]
  %v1608 = vld [vmem:[%s1606 + $0x8] sm:$0xff]
  %v1609 = vld [vmem:[%s1606 + $0x10] sm:$0xff]
  %v1610 = vld [vmem:[%s1606 + $0x18] sm:$0xff]
  %v1611 = vld [vmem:[%s1606 + $0x20] sm:$0xff]
  %v1612 = vld [vmem:[%s1606 + $0x28] sm:$0xff]
  %v1613 = vld [vmem:[%s1606 + $0x30] sm:$0xff]
  %v1614 = vld [vmem:[%s1606 + $0x38] sm:$0xff]
  %v1615 = vld [vmem:[%s1606 + $0x40] sm:$0xff]
  %v1616 = vld [vmem:[%s1606 + $0x48] sm:$0xff]
  %v1617 = vld [vmem:[%s1606 + $0x50] sm:$0xff]
  %v1618 = vld [vmem:[%s1606 + $0x58] sm:$0xff]
  %v1619 = vld [vmem:[%s1606 + $0x60] sm:$0xff]
  %v1620 = vld [vmem:[%s1606 + $0x68] sm:$0xff]
  %v1621 = vld [vmem:[%s1606 + $0x70] sm:$0xff]
  %v1622 = vld [vmem:[%s1606 + $0x78] sm:$0xff]
  %v1623 = vld [vmem:[%s1606 + $0x80] sm:$0xff]
  %v1624 = vld [vmem:[%s1606 + $0x88] sm:$0xff]
  %v1625 = vld [vmem:[%s1606 + $0x90] sm:$0xff]
  %v1626 = vld [vmem:[%s1606 + $0x98] sm:$0xff]
  %v1627 = vld [vmem:[%s1606 + $0xa0] sm:$0xff]
  %v1628 = vld [vmem:[%s1606 + $0xa8] sm:$0xff]
  %v1629 = vld [vmem:[%s1606 + $0xb0] sm:$0xff]
  %v1630 = vld [vmem:[%s1606 + $0xb8] sm:$0xff]
  %v1631 = vld [vmem:[%s1606 + $0xc0] sm:$0xff]
  %v1632 = vld [vmem:[%s1606 + $0xc8] sm:$0xff]
  %v1633 = vld [vmem:[%s1606 + $0xd0] sm:$0xff]
  %v1634 = vld [vmem:[%s1606 + $0xd8] sm:$0xff]
  %v1635 = vld [vmem:[%s1606 + $0xe0] sm:$0xff]
  %v1636 = vld [vmem:[%s1606 + $0xe8] sm:$0xff]
  %v1637 = vld [vmem:[%s1606 + $0xf0] sm:$0xff]
  %v1638 = vld [vmem:[%s1606 + $0xf8] sm:$0xff]
  %1639 = vmatprep.subr.mxu0 0.0
  %1640 = vmatpush1.msra.mxu0 %v1607
  %1641 = vmatprep.subr.mxu0 0.0
  %1642 = vmatpush1.msra.mxu0 %v1608
  %1643 = vmatprep.subr.mxu0 0.0
  %1644 = vmatpush1.msra.mxu0 %v1609
  %1645 = vmatprep.subr.mxu0 0.0
  %1646 = vmatpush1.msra.mxu0 %v1610
  %1647 = vmatprep.subr.mxu0 0.0
  %1648 = vmatpush1.msra.mxu0 %v1611
  %1649 = vmatprep.subr.mxu0 0.0
  %1650 = vmatpush1.msra.mxu0 %v1612
  %1651 = vmatprep.subr.mxu0 0.0
  %1652 = vmatpush1.msra.mxu0 %v1613
  %1653 = vmatprep.subr.mxu0 0.0
  %1654 = vmatpush1.msra.mxu0 %v1614
  %1655 = vmatprep.subr.mxu0 0.0
  %1656 = vmatpush1.msra.mxu0 %v1615
  %1657 = vmatprep.subr.mxu0 0.0
  %1658 = vmatpush1.msra.mxu0 %v1616
  %1659 = vmatprep.subr.mxu0 0.0
  %1660 = vmatpush1.msra.mxu0 %v1617
  %1661 = vmatprep.subr.mxu0 0.0
  %1662 = vmatpush1.msra.mxu0 %v1618
  %1663 = vmatprep.subr.mxu0 0.0
  %1664 = vmatpush1.msra.mxu0 %v1619
  %1665 = vmatprep.subr.mxu0 0.0
  %1666 = vmatpush1.msra.mxu0 %v1620
  %1667 = vmatprep.subr.mxu0 0.0
  %1668 = vmatpush1.msra.mxu0 %v1621
  %1669 = vmatprep.subr.mxu0 0.0
  %1670 = vmatpush1.msra.mxu0 %v1622
  %1671 = vmatprep.subr.mxu0 0.0
  %1672 = vmatpush1.msra.mxu0 %v1623
  %1673 = vmatprep.subr.mxu0 0.0
  %1674 = vmatpush1.msra.mxu0 %v1624
  %1675 = vmatprep.subr.mxu0 0.0
  %1676 = vmatpush1.msra.mxu0 %v1625
  %1677 = vmatprep.subr.mxu0 0.0
  %1678 = vmatpush1.msra.mxu0 %v1626
  %1679 = vmatprep.subr.mxu0 0.0
  %1680 = vmatpush1.msra.mxu0 %v1627
  %1681 = vmatprep.subr.mxu0 0.0
  %1682 = vmatpush1.msra.mxu0 %v1628
  %1683 = vmatprep.subr.mxu0 0.0
  %1684 = vmatpush1.msra.mxu0 %v1629
  %1685 = vmatprep.subr.mxu0 0.0
  %1686 = vmatpush1.msra.mxu0 %v1630
  %1687 = vmatprep.subr.mxu0 0.0
  %1688 = vmatpush1.msra.mxu0 %v1631
  %1689 = vmatprep.subr.mxu0 0.0
  %1690 = vmatpush1.msra.mxu0 %v1632
  %1691 = vmatprep.subr.mxu0 0.0
  %1692 = vmatpush1.msra.mxu0 %v1633
  %1693 = vmatprep.subr.mxu0 0.0
  %1694 = vmatpush1.msra.mxu0 %v1634
  %1695 = vmatprep.subr.mxu0 0.0
  %1696 = vmatpush1.msra.mxu0 %v1635
  %1697 = vmatprep.subr.mxu0 0.0
  %1698 = vmatpush1.msra.mxu0 %v1636
  %1699 = vmatprep.subr.mxu0 0.0
  %1700 = vmatpush1.msra.mxu0 %v1637
  %1701 = vmatprep.subr.mxu0 0.0
  %1702 = vmatpush1.msra.mxu0 %v1638
  %1703 = vmatprep.mubr.f32.mxu0 %v599
  %1704 = vmatmul.mubr.f32.gmra.mrb[0].mxu0 %v598
  %v1705 = vpop.f32.mrb[0].mxu0
  %v1706 = vadd.f32 0.0, %v1705
  %v1707 = vpop.f32.mrb[0].mxu0
  %1708 = vmatprep.mubr.f32.mxu0 %v601
  %1709 = vmatmul.mubr.f32.gmra.mrb[0].mxu0 %v600
  %v1710 = vpop.f32.mrb[0].mxu0
  %v1711 = vadd.f32 0.0, %v1710
  %v1712 = vpop.f32.mrb[0].mxu0
  %1713 = vmatprep.mubr.f32.mxu0 %v603
  %1714 = vmatmul.mubr.f32.gmra.mrb[0].mxu0 %v602
  %v1715 = vpop.f32.mrb[0].mxu0
  %v1716 = vadd.f32 0.0, %v1715
  %v1717 = vpop.f32.mrb[0].mxu0
  %1718 = vmatprep.mubr.f32.mxu0 %v605
  %1719 = vmatmul.mubr.f32.gmra.mrb[0].mxu0 %v604
  %v1720 = vpop.f32.mrb[0].mxu0
  %v1721 = vadd.f32 0.0, %v1720
  %v1722 = vpop.f32.mrb[0].mxu0
  %1723 = vmatprep.mubr.f32.mxu0 %v607
  %1724 = vmatmul.mubr.f32.gmra.mrb[0].mxu0 %v606
  %v1725 = vpop.f32.mrb[0].mxu0
  %v1726 = vadd.f32 0.0, %v1725
  %v1727 = vpop.f32.mrb[0].mxu0
  %1728 = vmatprep.mubr.f32.mxu0 %v609
  %1729 = vmatmul.mubr.f32.gmra.mrb[0].mxu0 %v608
  %v1730 = vpop.f32.mrb[0].mxu0
  %v1731 = vadd.f32 0.0, %v1730
  %v1732 = vpop.f32.mrb[0].mxu0
  %1733 = vmatprep.mubr.f32.mxu0 %v611
  %1734 = vmatmul.mubr.f32.gmra.mrb[0].mxu0 %v610
  %v1735 = vpop.f32.mrb[0].mxu0
  %v1736 = vadd.f32 0.0, %v1735
  %v1737 = vpop.f32.mrb[0].mxu0
  %1738 = vmatprep.mubr.f32.mxu0 %v613
  %1739 = vmatmul.mubr.f32.gmra.mrb[0].mxu0 %v612
  %v1740 = vpop.f32.mrb[0].mxu0
  %v1741 = vadd.f32 0.0, %v1740
  %v1742 = vpop.f32.mrb[0].mxu0
  %1743 = vmatprep.mubr.f32.mxu0 %v615
  %1744 = vmatmul.mubr.f32.gmra.mrb[0].mxu0 %v614
  %v1745 = vpop.f32.mrb[0].mxu0
  %v1746 = vadd.f32 0.0, %v1745
  %v1747 = vpop.f32.mrb[0].mxu0
  %1748 = vdwg.mxu0
  %s1749 = scalar_lea.vmem %s4, 312
  %v1750 = vld [vmem:[%s1749] sm:$0xff]
  %v1751 = vld [vmem:[%s1749 + $0x8] sm:$0xff]
  %v1752 = vld [vmem:[%s1749 + $0x10] sm:$0xff]
  %v1753 = vld [vmem:[%s1749 + $0x18] sm:$0xff]
  %v1754 = vld [vmem:[%s1749 + $0x20] sm:$0xff]
  %v1755 = vld [vmem:[%s1749 + $0x28] sm:$0xff]
  %v1756 = vld [vmem:[%s1749 + $0x30] sm:$0xff]
  %v1757 = vld [vmem:[%s1749 + $0x38] sm:$0xff]
  %v1758 = vld [vmem:[%s1749 + $0x40] sm:$0xff]
  %v1759 = vld [vmem:[%s1749 + $0x48] sm:$0xff]
  %v1760 = vld [vmem:[%s1749 + $0x50] sm:$0xff]
  %v1761 = vld [vmem:[%s1749 + $0x58] sm:$0xff]
  %v1762 = vld [vmem:[%s1749 + $0x60] sm:$0x3]
  %v1764 = vsel %vm928, %v1750, 0
  %v1767 = vsel %vm928, %v1751, 0
  %v1770 = vsel %vm928, %v1752, 0
  %v1773 = vsel %vm928, %v1753, 0
  %v1776 = vsel %vm928, %v1754, 0
  %v1779 = vsel %vm928, %v1755, 0
  %v1782 = vsel %vm928, %v1756, 0
  %v1785 = vsel %vm928, %v1757, 0
  %v1788 = vsel %vm928, %v1758, 0
  %v1791 = vsel %vm928, %v1759, 0
  %v1794 = vsel %vm928, %v1760, 0
  %v1797 = vsel %vm928, %v1761, 0
  %v1800 = vsel %vm928, %v1762, 0
  %1802 = vmatprep.subr.mxu0 0.0
  %1803 = vmatpush1.msra.mxu0 %v1706
  %1804 = vmatprep.subr.mxu0 0.0
  %1805 = vmatpush1.msra.mxu0 %v1711
  %1806 = vmatprep.subr.mxu0 0.0
  %1807 = vmatpush1.msra.mxu0 %v1716
  %1808 = vmatprep.subr.mxu0 0.0
  %1809 = vmatpush1.msra.mxu0 %v1721
  %1810 = vmatprep.subr.mxu0 0.0
  %1811 = vmatpush1.msra.mxu0 %v1726
  %1812 = vmatprep.subr.mxu0 0.0
  %1813 = vmatpush1.msra.mxu0 %v1731
  %1814 = vmatprep.subr.mxu0 0.0
  %1815 = vmatpush1.msra.mxu0 %v1736
  %1816 = vmatprep.subr.mxu0 0.0
  %1817 = vmatpush1.msra.mxu0 %v1741
  %1818 = vmatprep.subr.mxu0 0.0
  %1819 = vmatpush1.msra.mxu0 %v1746
  %1820 = vmatprep.subr.mxu0 0.0
  %1821 = vmatpush1.msra.mxu0 0.0
  %1822 = vmatprep.subr.mxu0 0.0
  %1823 = vmatpush1.msra.mxu0 0.0
  %1824 = vmatprep.subr.mxu0 0.0
  %1825 = vmatpush1.msra.mxu0 0.0
  %1826 = vmatprep.subr.mxu0 0.0
  %1827 = vmatpush1.msra.mxu0 0.0
  %1828 = vmatprep.subr.mxu0 0.0
  %1829 = vmatpush1.msra.mxu0 0.0
  %1830 = vmatprep.subr.mxu0 0.0
  %1831 = vmatpush1.msra.mxu0 0.0
  %1832 = vmatprep.subr.mxu0 0.0
  %1833 = vmatpush1.msra.mxu0 0.0
  %1834 = vmatprep.subr.mxu0 0.0
  %1835 = vmatpush1.msra.mxu0 0.0
  %1836 = vmatprep.subr.mxu0 0.0
  %1837 = vmatpush1.msra.mxu0 0.0
  %1838 = vmatprep.subr.mxu0 0.0
  %1839 = vmatpush1.msra.mxu0 0.0
  %1840 = vmatprep.subr.mxu0 0.0
  %1841 = vmatpush1.msra.mxu0 0.0
  %1842 = vmatprep.subr.mxu0 0.0
  %1843 = vmatpush1.msra.mxu0 0.0
  %1844 = vmatprep.subr.mxu0 0.0
  %1845 = vmatpush1.msra.mxu0 0.0
  %1846 = vmatprep.subr.mxu0 0.0
  %1847 = vmatpush1.msra.mxu0 0.0
  %1848 = vmatprep.subr.mxu0 0.0
  %1849 = vmatpush1.msra.mxu0 0.0
  %1850 = vmatprep.subr.mxu0 0.0
  %1851 = vmatpush1.msra.mxu0 0.0
  %1852 = vmatprep.subr.mxu0 0.0
  %1853 = vmatpush1.msra.mxu0 0.0
  %1854 = vmatprep.subr.mxu0 0.0
  %1855 = vmatpush1.msra.mxu0 0.0
  %1856 = vmatprep.subr.mxu0 0.0
  %1857 = vmatpush1.msra.mxu0 0.0
  %1858 = vmatprep.subr.mxu0 0.0
  %1859 = vmatpush1.msra.mxu0 0.0
  %1860 = vmatprep.subr.mxu0 0.0
  %1861 = vmatpush1.msra.mxu0 0.0
  %1862 = vmatprep.subr.mxu0 0.0
  %1863 = vmatpush1.msra.mxu0 0.0
  %1864 = vmatprep.subr.mxu0 0.0
  %1865 = vmatpush1.msra.mxu0 0.0
  %1866 = vmatprep.mubr.f32.mxu0 0.0
  %1867 = vmatmul.mubr.f32.gmra.mrb[0].mxu0 %v1764
  %v1868 = vpop.f32.mrb[0].mxu0
  %v1869 = vadd.f32 0.0, %v1868
  %v1870 = vpop.f32.mrb[0].mxu0
  %1871 = vmatprep.mubr.f32.mxu0 0.0
  %1872 = vmatmul.mubr.f32.gmra.mrb[0].mxu0 %v1767
  %v1873 = vpop.f32.mrb[0].mxu0
  %v1874 = vadd.f32 0.0, %v1873
  %v1875 = vpop.f32.mrb[0].mxu0
  %1876 = vmatprep.mubr.f32.mxu0 0.0
  %1877 = vmatmul.mubr.f32.gmra.mrb[0].mxu0 %v1770
  %v1878 = vpop.f32.mrb[0].mxu0
  %v1879 = vadd.f32 0.0, %v1878
  %v1880 = vpop.f32.mrb[0].mxu0
  %1881 = vmatprep.mubr.f32.mxu0 0.0
  %1882 = vmatmul.mubr.f32.gmra.mrb[0].mxu0 %v1773
  %v1883 = vpop.f32.mrb[0].mxu0
  %v1884 = vadd.f32 0.0, %v1883
  %v1885 = vpop.f32.mrb[0].mxu0
  %1886 = vmatprep.mubr.f32.mxu0 0.0
  %1887 = vmatmul.mubr.f32.gmra.mrb[0].mxu0 %v1776
  %v1888 = vpop.f32.mrb[0].mxu0
  %v1889 = vadd.f32 0.0, %v1888
  %v1890 = vpop.f32.mrb[0].mxu0
  %1891 = vmatprep.mubr.f32.mxu0 0.0
  %1892 = vmatmul.mubr.f32.gmra.mrb[0].mxu0 %v1779
  %v1893 = vpop.f32.mrb[0].mxu0
  %v1894 = vadd.f32 0.0, %v1893
  %v1895 = vpop.f32.mrb[0].mxu0
  %1896 = vmatprep.mubr.f32.mxu0 0.0
  %1897 = vmatmul.mubr.f32.gmra.mrb[0].mxu0 %v1782
  %v1898 = vpop.f32.mrb[0].mxu0
  %v1899 = vadd.f32 0.0, %v1898
  %v1900 = vpop.f32.mrb[0].mxu0
  %1901 = vmatprep.mubr.f32.mxu0 0.0
  %1902 = vmatmul.mubr.f32.gmra.mrb[0].mxu0 %v1785
  %v1903 = vpop.f32.mrb[0].mxu0
  %v1904 = vadd.f32 0.0, %v1903
  %v1905 = vpop.f32.mrb[0].mxu0
  %1906 = vmatprep.mubr.f32.mxu0 0.0
  %1907 = vmatmul.mubr.f32.gmra.mrb[0].mxu0 %v1788
  %v1908 = vpop.f32.mrb[0].mxu0
  %v1909 = vadd.f32 0.0, %v1908
  %v1910 = vpop.f32.mrb[0].mxu0
  %1911 = vmatprep.mubr.f32.mxu0 0.0
  %1912 = vmatmul.mubr.f32.gmra.mrb[0].mxu0 %v1791
  %v1913 = vpop.f32.mrb[0].mxu0
  %v1914 = vadd.f32 0.0, %v1913
  %v1915 = vpop.f32.mrb[0].mxu0
  %1916 = vmatprep.mubr.f32.mxu0 0.0
  %1917 = vmatmul.mubr.f32.gmra.mrb[0].mxu0 %v1794
  %v1918 = vpop.f32.mrb[0].mxu0
  %v1919 = vadd.f32 0.0, %v1918
  %v1920 = vpop.f32.mrb[0].mxu0
  %1921 = vmatprep.mubr.f32.mxu0 0.0
  %1922 = vmatmul.mubr.f32.gmra.mrb[0].mxu0 %v1797
  %v1923 = vpop.f32.mrb[0].mxu0
  %v1924 = vadd.f32 0.0, %v1923
  %v1925 = vpop.f32.mrb[0].mxu0
  %1926 = vmatprep.mubr.f32.mxu0 0.0
  %1927 = vmatmul.mubr.f32.gmra.mrb[0].mxu0 %v1800
  %v1928 = vpop.f32.mrb[0].mxu0
  %v1929 = vadd.f32 0.0, %v1928
  %v1930 = vpop.f32.mrb[0].mxu0
  %1931 = vdwg.mxu0
  %v1932 = vadd.f32 %v1593, %v1869
  %v1933 = vadd.f32 %v1594, %v1874
  %v1934 = vadd.f32 %v1595, %v1879
  %v1935 = vadd.f32 %v1596, %v1884
  %v1936 = vadd.f32 %v1597, %v1889
  %v1937 = vadd.f32 %v1598, %v1894
  %v1938 = vadd.f32 %v1599, %v1899
  %v1939 = vadd.f32 %v1600, %v1904
  %v1940 = vadd.f32 %v1601, %v1909
  %v1941 = vadd.f32 %v1602, %v1914
  %v1942 = vadd.f32 %v1603, %v1919
  %v1943 = vadd.f32 %v1604, %v1924
  %v1944 = vadd.f32 %v1605, %v1929
  %v1945 = vld [vmem:[%s6] sm:$0x1]
  %v1946 = vld [vmem:[%s7] sm:$0x1]
  %v1947 = vadd.f32 %v1932, %v1933
  %v1948 = vadd.f32 %v1947, %v1934
  %v1949 = vadd.f32 %v1948, %v1935
  %v1950 = vadd.f32 %v1949, %v1936
  %v1951 = vadd.f32 %v1950, %v1937
  %v1952 = vadd.f32 %v1951, %v1938
  %v1953 = vadd.f32 %v1952, %v1939
  %v1954 = vadd.f32 %v1953, %v1940
  %v1955 = vadd.f32 %v1954, %v1941
  %v1956 = vadd.f32 %v1955, %v1942
  %v1957 = vadd.f32 %v1956, %v1943
  %vm1958 = vcmask 1041408
  %v1959 = vsel %vm1958, %v1944, 0.0
  %v1960 = vadd.f32 %v1957, %v1959
  %v1961 = vrot.slane %v1960, 4
  %v1962 = vadd.f32 %v1960, %v1961
  %v1963 = vrot.slane %v1962, 2
  %v1964 = vadd.f32 %v1962, %v1963
  %v1965 = vrot.slane %v1964, 1
  %v1966 = vadd.f32 %v1964, %v1965
  %v1967 = vmul.f32 %v1932, %v1932
  %v1968 = vmul.f32 %v1933, %v1933
  %v1969 = vmul.f32 %v1934, %v1934
  %v1970 = vmul.f32 %v1935, %v1935
  %v1971 = vmul.f32 %v1936, %v1936
  %v1972 = vmul.f32 %v1937, %v1937
  %v1973 = vmul.f32 %v1938, %v1938
  %v1974 = vmul.f32 %v1939, %v1939
  %v1975 = vmul.f32 %v1940, %v1940
  %v1976 = vmul.f32 %v1941, %v1941
  %v1977 = vmul.f32 %v1942, %v1942
  %v1978 = vmul.f32 %v1943, %v1943
  %v1979 = vmul.f32 %v1944, %v1944
  %v1980 = vadd.f32 %v1967, %v1968
  %v1981 = vadd.f32 %v1980, %v1969
  %v1982 = vadd.f32 %v1981, %v1970
  %v1983 = vadd.f32 %v1982, %v1971
  %v1984 = vadd.f32 %v1983, %v1972
  %v1985 = vadd.f32 %v1984, %v1973
  %v1986 = vadd.f32 %v1985, %v1974
  %v1987 = vadd.f32 %v1986, %v1975
  %v1988 = vadd.f32 %v1987, %v1976
  %v1989 = vadd.f32 %v1988, %v1977
  %v1990 = vadd.f32 %v1989, %v1978
  %v1991 = vsel %vm1958, %v1979, 0.0
  %v1992 = vadd.f32 %v1990, %v1991
  %v1993 = vrot.slane %v1992, 4
  %v1994 = vadd.f32 %v1992, %v1993
  %v1995 = vrot.slane %v1994, 2
  %v1996 = vadd.f32 %v1994, %v1995
  %v1997 = vrot.slane %v1996, 1
  %v1998 = vadd.f32 %v1996, %v1997
  %v1999 = vmul.f32 %v1966, 0.010204081
  %v2000 = vmul.f32 %v1998, 0.010204081
  %v2001 = vmul.f32 %v1999, %v1999
  %v2002 = vsub.f32 %v2000, %v2001
  %v2003 = vadd.f32 %v2002, 1e-05
  %v2004 = vrsqrt.pop %v2003
  %v2005 = vmul.f32 %v1945, %v2004
  %v2006 = vmul.f32 %v1999, %v2005
  %v2007 = vsub.f32 %v1946, %v2006
  %v2009 = vlaneseq
  %v2010 = vshrl.u32 %v2009, 7
  %v2011 = vsub.s32 0, %v2010
  %v2012 = vrot.slane %v2005, %v2011
  %v2014 = vmul.f32 %v1932, %v2012
  %v2015 = vmul.f32 %v1933, %v2012
  %v2016 = vmul.f32 %v1934, %v2012
  %v2017 = vmul.f32 %v1935, %v2012
  %v2018 = vmul.f32 %v1936, %v2012
  %v2019 = vmul.f32 %v1937, %v2012
  %v2020 = vmul.f32 %v1938, %v2012
  %v2021 = vmul.f32 %v1939, %v2012
  %v2022 = vmul.f32 %v1940, %v2012
  %v2023 = vmul.f32 %v1941, %v2012
  %v2024 = vmul.f32 %v1942, %v2012
  %v2025 = vmul.f32 %v1943, %v2012
  %v2026 = vmul.f32 %v1944, %v2012
  %v2028 = vlaneseq
  %v2029 = vshrl.u32 %v2028, 7
  %v2030 = vsub.s32 0, %v2029
  %v2031 = vrot.slane %v2007, %v2030
  %v2033 = vadd.f32 %v2014, %v2031
  %v2034 = vadd.f32 %v2015, %v2031
  %v2035 = vadd.f32 %v2016, %v2031
  %v2036 = vadd.f32 %v2017, %v2031
  %v2037 = vadd.f32 %v2018, %v2031
  %v2038 = vadd.f32 %v2019, %v2031
  %v2039 = vadd.f32 %v2020, %v2031
  %v2040 = vadd.f32 %v2021, %v2031
  %v2041 = vadd.f32 %v2022, %v2031
  %v2042 = vadd.f32 %v2023, %v2031
  %v2043 = vadd.f32 %v2024, %v2031
  %v2044 = vadd.f32 %v2025, %v2031
  %v2045 = vadd.f32 %v2026, %v2031
  %v2046 = vmax.f32 %v2033, 0.0
  %v2047 = vmax.f32 %v2034, 0.0
  %v2048 = vmax.f32 %v2035, 0.0
  %v2049 = vmax.f32 %v2036, 0.0
  %v2050 = vmax.f32 %v2037, 0.0
  %v2051 = vmax.f32 %v2038, 0.0
  %v2052 = vmax.f32 %v2039, 0.0
  %v2053 = vmax.f32 %v2040, 0.0
  %v2054 = vmax.f32 %v2041, 0.0
  %v2055 = vmax.f32 %v2042, 0.0
  %v2056 = vmax.f32 %v2043, 0.0
  %v2057 = vmax.f32 %v2044, 0.0
  %v2058 = vmax.f32 %v2045, 0.0
  %v2059 = vld [vmem:[%s8] sm:$0xff]
  %v2060 = vld [vmem:[%s8 + $0x8] sm:$0xff]
  %v2061 = vld [vmem:[%s8 + $0x10] sm:$0xff]
  %v2062 = vld [vmem:[%s8 + $0x18] sm:$0xff]
  %v2063 = vld [vmem:[%s8 + $0x20] sm:$0xff]
  %v2064 = vld [vmem:[%s8 + $0x28] sm:$0xff]
  %v2065 = vld [vmem:[%s8 + $0x30] sm:$0xff]
  %v2066 = vld [vmem:[%s8 + $0x38] sm:$0xff]
  %v2067 = vld [vmem:[%s8 + $0x40] sm:$0xff]
  %v2068 = vld [vmem:[%s8 + $0x48] sm:$0xff]
  %v2069 = vld [vmem:[%s8 + $0x50] sm:$0xff]
  %v2070 = vld [vmem:[%s8 + $0x58] sm:$0xff]
  %v2071 = vld [vmem:[%s8 + $0x60] sm:$0xff]
  %v2072 = vld [vmem:[%s8 + $0x68] sm:$0xff]
  %v2073 = vld [vmem:[%s8 + $0x70] sm:$0xff]
  %v2074 = vld [vmem:[%s8 + $0x78] sm:$0xff]
  %v2075 = vld [vmem:[%s8 + $0x80] sm:$0xff]
  %v2076 = vld [vmem:[%s8 + $0x88] sm:$0xff]
  %v2077 = vld [vmem:[%s8 + $0x90] sm:$0xff]
  %v2078 = vld [vmem:[%s8 + $0x98] sm:$0xff]
  %v2079 = vld [vmem:[%s8 + $0xa0] sm:$0xff]
  %v2080 = vld [vmem:[%s8 + $0xa8] sm:$0xff]
  %v2081 = vld [vmem:[%s8 + $0xb0] sm:$0xff]
  %v2082 = vld [vmem:[%s8 + $0xb8] sm:$0xff]
  %v2083 = vld [vmem:[%s8 + $0xc0] sm:$0xff]
  %v2084 = vld [vmem:[%s8 + $0xc8] sm:$0xff]
  %v2085 = vld [vmem:[%s8 + $0xd0] sm:$0xff]
  %v2086 = vld [vmem:[%s8 + $0xd8] sm:$0xff]
  %v2087 = vld [vmem:[%s8 + $0xe0] sm:$0xff]
  %v2088 = vld [vmem:[%s8 + $0xe8] sm:$0xff]
  %v2089 = vld [vmem:[%s8 + $0xf0] sm:$0xff]
  %v2090 = vld [vmem:[%s8 + $0xf8] sm:$0xff]
  %2091 = vmatprep.subr.mxu0 %v2060
  %2092 = vmatpush1.msra.mxu0 %v2059
  %2093 = vmatprep.subr.mxu0 %v2062
  %2094 = vmatpush1.msra.mxu0 %v2061
  %2095 = vmatprep.subr.mxu0 %v2064
  %2096 = vmatpush1.msra.mxu0 %v2063
  %2097 = vmatprep.subr.mxu0 %v2066
  %2098 = vmatpush1.msra.mxu0 %v2065
  %2099 = vmatprep.subr.mxu0 %v2068
  %2100 = vmatpush1.msra.mxu0 %v2067
  %2101 = vmatprep.subr.mxu0 %v2070
  %2102 = vmatpush1.msra.mxu0 %v2069
  %2103 = vmatprep.subr.mxu0 %v2072
  %2104 = vmatpush1.msra.mxu0 %v2071
  %2105 = vmatprep.subr.mxu0 %v2074
  %2106 = vmatpush1.msra.mxu0 %v2073
  %2107 = vmatprep.subr.mxu0 %v2076
  %2108 = vmatpush1.msra.mxu0 %v2075
  %2109 = vmatprep.subr.mxu0 %v2078
  %2110 = vmatpush1.msra.mxu0 %v2077
  %2111 = vmatprep.subr.mxu0 %v2080
  %2112 = vmatpush1.msra.mxu0 %v2079
  %2113 = vmatprep.subr.mxu0 %v2082
  %2114 = vmatpush1.msra.mxu0 %v2081
  %2115 = vmatprep.subr.mxu0 %v2084
  %2116 = vmatpush1.msra.mxu0 %v2083
  %2117 = vmatprep.subr.mxu0 %v2086
  %2118 = vmatpush1.msra.mxu0 %v2085
  %2119 = vmatprep.subr.mxu0 %v2088
  %2120 = vmatpush1.msra.mxu0 %v2087
  %2121 = vmatprep.subr.mxu0 %v2090
  %2122 = vmatpush1.msra.mxu0 %v2089
  %2123 = vmatprep.subr.mxu0 0.0
  %2124 = vmatpush1.msra.mxu0 0.0
  %2125 = vmatprep.subr.mxu0 0.0
  %2126 = vmatpush1.msra.mxu0 0.0
  %2127 = vmatprep.subr.mxu0 0.0
  %2128 = vmatpush1.msra.mxu0 0.0
  %2129 = vmatprep.subr.mxu0 0.0
  %2130 = vmatpush1.msra.mxu0 0.0
  %2131 = vmatprep.subr.mxu0 0.0
  %2132 = vmatpush1.msra.mxu0 0.0
  %2133 = vmatprep.subr.mxu0 0.0
  %2134 = vmatpush1.msra.mxu0 0.0
  %2135 = vmatprep.subr.mxu0 0.0
  %2136 = vmatpush1.msra.mxu0 0.0
  %2137 = vmatprep.subr.mxu0 0.0
  %2138 = vmatpush1.msra.mxu0 0.0
  %2139 = vmatprep.subr.mxu0 0.0
  %2140 = vmatpush1.msra.mxu0 0.0
  %2141 = vmatprep.subr.mxu0 0.0
  %2142 = vmatpush1.msra.mxu0 0.0
  %2143 = vmatprep.subr.mxu0 0.0
  %2144 = vmatpush1.msra.mxu0 0.0
  %2145 = vmatprep.subr.mxu0 0.0
  %2146 = vmatpush1.msra.mxu0 0.0
  %2147 = vmatprep.subr.mxu0 0.0
  %2148 = vmatpush1.msra.mxu0 0.0
  %2149 = vmatprep.subr.mxu0 0.0
  %2150 = vmatpush1.msra.mxu0 0.0
  %2151 = vmatprep.subr.mxu0 0.0
  %2152 = vmatpush1.msra.mxu0 0.0
  %2153 = vmatprep.subr.mxu0 0.0
  %2154 = vmatpush1.msra.mxu0 0.0
  %2155 = vmatprep.mubr.f32.mxu0 0.0
  %2156 = vmatmul.mubr.f32.gmra.mrb[0].mxu0 %v2046
  %v2157 = vpop.f32.mrb[0].mxu0
  %v2158 = vadd.f32 0.0, %v2157
  %v2159 = vpop.f32.mrb[0].mxu0
  %v2160 = vadd.f32 0.0, %v2159
  %2161 = vmatprep.mubr.f32.mxu0 0.0
  %2162 = vmatmul.mubr.f32.gmra.mrb[0].mxu0 %v2047
  %v2163 = vpop.f32.mrb[0].mxu0
  %v2164 = vadd.f32 0.0, %v2163
  %v2165 = vpop.f32.mrb[0].mxu0
  %v2166 = vadd.f32 0.0, %v2165
  %2167 = vmatprep.mubr.f32.mxu0 0.0
  %2168 = vmatmul.mubr.f32.gmra.mrb[0].mxu0 %v2048
  %v2169 = vpop.f32.mrb[0].mxu0
  %v2170 = vadd.f32 0.0, %v2169
  %v2171 = vpop.f32.mrb[0].mxu0
  %v2172 = vadd.f32 0.0, %v2171
  %2173 = vmatprep.mubr.f32.mxu0 0.0
  %2174 = vmatmul.mubr.f32.gmra.mrb[0].mxu0 %v2049
  %v2175 = vpop.f32.mrb[0].mxu0
  %v2176 = vadd.f32 0.0, %v2175
  %v2177 = vpop.f32.mrb[0].mxu0
  %v2178 = vadd.f32 0.0, %v2177
  %2179 = vmatprep.mubr.f32.mxu0 0.0
  %2180 = vmatmul.mubr.f32.gmra.mrb[0].mxu0 %v2050
  %v2181 = vpop.f32.mrb[0].mxu0
  %v2182 = vadd.f32 0.0, %v2181
  %v2183 = vpop.f32.mrb[0].mxu0
  %v2184 = vadd.f32 0.0, %v2183
  %2185 = vmatprep.mubr.f32.mxu0 0.0
  %2186 = vmatmul.mubr.f32.gmra.mrb[0].mxu0 %v2051
  %v2187 = vpop.f32.mrb[0].mxu0
  %v2188 = vadd.f32 0.0, %v2187
  %v2189 = vpop.f32.mrb[0].mxu0
  %v2190 = vadd.f32 0.0, %v2189
  %2191 = vmatprep.mubr.f32.mxu0 0.0
  %2192 = vmatmul.mubr.f32.gmra.mrb[0].mxu0 %v2052
  %v2193 = vpop.f32.mrb[0].mxu0
  %v2194 = vadd.f32 0.0, %v2193
  %v2195 = vpop.f32.mrb[0].mxu0
  %v2196 = vadd.f32 0.0, %v2195
  %2197 = vmatprep.mubr.f32.mxu0 0.0
  %2198 = vmatmul.mubr.f32.gmra.mrb[0].mxu0 %v2053
  %v2199 = vpop.f32.mrb[0].mxu0
  %v2200 = vadd.f32 0.0, %v2199
  %v2201 = vpop.f32.mrb[0].mxu0
  %v2202 = vadd.f32 0.0, %v2201
  %2203 = vmatprep.mubr.f32.mxu0 0.0
  %2204 = vmatmul.mubr.f32.gmra.mrb[0].mxu0 %v2054
  %v2205 = vpop.f32.mrb[0].mxu0
  %v2206 = vadd.f32 0.0, %v2205
  %v2207 = vpop.f32.mrb[0].mxu0
  %v2208 = vadd.f32 0.0, %v2207
  %2209 = vmatprep.mubr.f32.mxu0 0.0
  %2210 = vmatmul.mubr.f32.gmra.mrb[0].mxu0 %v2055
  %v2211 = vpop.f32.mrb[0].mxu0
  %v2212 = vadd.f32 0.0, %v2211
  %v2213 = vpop.f32.mrb[0].mxu0
  %v2214 = vadd.f32 0.0, %v2213
  %2215 = vmatprep.mubr.f32.mxu0 0.0
  %2216 = vmatmul.mubr.f32.gmra.mrb[0].mxu0 %v2056
  %v2217 = vpop.f32.mrb[0].mxu0
  %v2218 = vadd.f32 0.0, %v2217
  %v2219 = vpop.f32.mrb[0].mxu0
  %v2220 = vadd.f32 0.0, %v2219
  %2221 = vmatprep.mubr.f32.mxu0 0.0
  %2222 = vmatmul.mubr.f32.gmra.mrb[0].mxu0 %v2057
  %v2223 = vpop.f32.mrb[0].mxu0
  %v2224 = vadd.f32 0.0, %v2223
  %v2225 = vpop.f32.mrb[0].mxu0
  %v2226 = vadd.f32 0.0, %v2225
  %2227 = vmatprep.mubr.f32.mxu0 0.0
  %2228 = vmatmul.mubr.f32.gmra.mrb[0].mxu0 %v2058
  %v2229 = vpop.f32.mrb[0].mxu0
  %v2230 = vadd.f32 0.0, %v2229
  %v2231 = vpop.f32.mrb[0].mxu0
  %v2232 = vadd.f32 0.0, %v2231
  %2233 = vdwg.mxu0
  %v2234 = vadd.f32 %v2158, %v2164
  %v2235 = vadd.f32 %v2234, %v2170
  %v2236 = vadd.f32 %v2235, %v2176
  %v2237 = vadd.f32 %v2236, %v2182
  %v2238 = vadd.f32 %v2237, %v2188
  %v2239 = vadd.f32 %v2238, %v2194
  %v2240 = vadd.f32 %v2239, %v2200
  %v2241 = vadd.f32 %v2240, %v2206
  %v2242 = vadd.f32 %v2241, %v2212
  %v2243 = vadd.f32 %v2242, %v2218
  %v2244 = vadd.f32 %v2243, %v2224
  %v2245 = vsel %vm1958, %v2230, 0.0
  %v2246 = vadd.f32 %v2244, %v2245
  %v2247 = vrot.slane %v2246, 4
  %v2248 = vadd.f32 %v2246, %v2247
  %v2249 = vrot.slane %v2248, 2
  %v2250 = vadd.f32 %v2248, %v2249
  %v2251 = vrot.slane %v2250, 1
  %v2252 = vadd.f32 %v2250, %v2251
  %v2253 = vadd.f32 %v2160, %v2166
  %v2254 = vadd.f32 %v2253, %v2172
  %v2255 = vadd.f32 %v2254, %v2178
  %v2256 = vadd.f32 %v2255, %v2184
  %v2257 = vadd.f32 %v2256, %v2190
  %v2258 = vadd.f32 %v2257, %v2196
  %v2259 = vadd.f32 %v2258, %v2202
  %v2260 = vadd.f32 %v2259, %v2208
  %v2261 = vadd.f32 %v2260, %v2214
  %v2262 = vadd.f32 %v2261, %v2220
  %v2263 = vadd.f32 %v2262, %v2226
  %v2264 = vsel %vm1958, %v2232, 0.0
  %v2265 = vadd.f32 %v2263, %v2264
  %v2266 = vrot.slane %v2265, 4
  %v2267 = vadd.f32 %v2265, %v2266
  %v2268 = vrot.slane %v2267, 2
  %v2269 = vadd.f32 %v2267, %v2268
  %v2270 = vrot.slane %v2269, 1
  %v2271 = vadd.f32 %v2269, %v2270
  %v2272 = vld [vmem:[%s11] sm:$0xff]
  %v2273 = vld [vmem:[%s11 + $0x8] sm:$0xff]
  %v2274 = vld [vmem:[%s11 + $0x10] sm:$0xff]
  %v2275 = vld [vmem:[%s11 + $0x18] sm:$0xff]
  %v2276 = vld [vmem:[%s11 + $0x20] sm:$0xff]
  %v2277 = vld [vmem:[%s11 + $0x28] sm:$0xff]
  %v2278 = vld [vmem:[%s11 + $0x30] sm:$0xff]
  %v2279 = vld [vmem:[%s11 + $0x38] sm:$0xff]
  %v2280 = vld [vmem:[%s11 + $0x40] sm:$0xff]
  %v2281 = vld [vmem:[%s11 + $0x48] sm:$0xff]
  %v2282 = vld [vmem:[%s11 + $0x50] sm:$0xff]
  %v2283 = vld [vmem:[%s11 + $0x58] sm:$0xff]
  %v2284 = vld [vmem:[%s11 + $0x60] sm:$0xff]
  %v2285 = vld [vmem:[%s11 + $0x68] sm:$0xff]
  %v2286 = vld [vmem:[%s11 + $0x70] sm:$0xff]
  %v2287 = vld [vmem:[%s11 + $0x78] sm:$0xff]
  %v2288 = vld [vmem:[%s11 + $0x80] sm:$0xff]
  %v2289 = vld [vmem:[%s11 + $0x88] sm:$0xff]
  %v2290 = vld [vmem:[%s11 + $0x90] sm:$0xff]
  %v2291 = vld [vmem:[%s11 + $0x98] sm:$0xff]
  %v2292 = vld [vmem:[%s11 + $0xa0] sm:$0xff]
  %v2293 = vld [vmem:[%s11 + $0xa8] sm:$0xff]
  %v2294 = vld [vmem:[%s11 + $0xb0] sm:$0xff]
  %v2295 = vld [vmem:[%s11 + $0xb8] sm:$0xff]
  %v2296 = vld [vmem:[%s11 + $0xc0] sm:$0xff]
  %v2297 = vld [vmem:[%s11 + $0xc8] sm:$0xff]
  %v2298 = vld [vmem:[%s11 + $0xd0] sm:$0xff]
  %v2299 = vld [vmem:[%s11 + $0xd8] sm:$0xff]
  %v2300 = vld [vmem:[%s11 + $0xe0] sm:$0xff]
  %v2301 = vld [vmem:[%s11 + $0xe8] sm:$0xff]
  %v2302 = vld [vmem:[%s11 + $0xf0] sm:$0xff]
  %v2303 = vld [vmem:[%s11 + $0xf8] sm:$0xff]
  %2304 = vmatprep.subr.mxu0 0.0
  %2305 = vmatpush1.msra.mxu0 %v2272
  %2306 = vmatprep.subr.mxu0 0.0
  %2307 = vmatpush1.msra.mxu0 %v2273
  %2308 = vmatprep.subr.mxu0 0.0
  %2309 = vmatpush1.msra.mxu0 %v2274
  %2310 = vmatprep.subr.mxu0 0.0
  %2311 = vmatpush1.msra.mxu0 %v2275
  %2312 = vmatprep.subr.mxu0 0.0
  %2313 = vmatpush1.msra.mxu0 %v2276
  %2314 = vmatprep.subr.mxu0 0.0
  %2315 = vmatpush1.msra.mxu0 %v2277
  %2316 = vmatprep.subr.mxu0 0.0
  %2317 = vmatpush1.msra.mxu0 %v2278
  %2318 = vmatprep.subr.mxu0 0.0
  %2319 = vmatpush1.msra.mxu0 %v2279
  %2320 = vmatprep.subr.mxu0 0.0
  %2321 = vmatpush1.msra.mxu0 %v2280
  %2322 = vmatprep.subr.mxu0 0.0
  %2323 = vmatpush1.msra.mxu0 %v2281
  %2324 = vmatprep.subr.mxu0 0.0
  %2325 = vmatpush1.msra.mxu0 %v2282
  %2326 = vmatprep.subr.mxu0 0.0
  %2327 = vmatpush1.msra.mxu0 %v2283
  %2328 = vmatprep.subr.mxu0 0.0
  %2329 = vmatpush1.msra.mxu0 %v2284
  %2330 = vmatprep.subr.mxu0 0.0
  %2331 = vmatpush1.msra.mxu0 %v2285
  %2332 = vmatprep.subr.mxu0 0.0
  %2333 = vmatpush1.msra.mxu0 %v2286
  %2334 = vmatprep.subr.mxu0 0.0
  %2335 = vmatpush1.msra.mxu0 %v2287
  %2336 = vmatprep.subr.mxu0 0.0
  %2337 = vmatpush1.msra.mxu0 %v2288
  %2338 = vmatprep.subr.mxu0 0.0
  %2339 = vmatpush1.msra.mxu0 %v2289
  %2340 = vmatprep.subr.mxu0 0.0
  %2341 = vmatpush1.msra.mxu0 %v2290
  %2342 = vmatprep.subr.mxu0 0.0
  %2343 = vmatpush1.msra.mxu0 %v2291
  %2344 = vmatprep.subr.mxu0 0.0
  %2345 = vmatpush1.msra.mxu0 %v2292
  %2346 = vmatprep.subr.mxu0 0.0
  %2347 = vmatpush1.msra.mxu0 %v2293
  %2348 = vmatprep.subr.mxu0 0.0
  %2349 = vmatpush1.msra.mxu0 %v2294
  %2350 = vmatprep.subr.mxu0 0.0
  %2351 = vmatpush1.msra.mxu0 %v2295
  %2352 = vmatprep.subr.mxu0 0.0
  %2353 = vmatpush1.msra.mxu0 %v2296
  %2354 = vmatprep.subr.mxu0 0.0
  %2355 = vmatpush1.msra.mxu0 %v2297
  %2356 = vmatprep.subr.mxu0 0.0
  %2357 = vmatpush1.msra.mxu0 %v2298
  %2358 = vmatprep.subr.mxu0 0.0
  %2359 = vmatpush1.msra.mxu0 %v2299
  %2360 = vmatprep.subr.mxu0 0.0
  %2361 = vmatpush1.msra.mxu0 %v2300
  %2362 = vmatprep.subr.mxu0 0.0
  %2363 = vmatpush1.msra.mxu0 %v2301
  %2364 = vmatprep.subr.mxu0 0.0
  %2365 = vmatpush1.msra.mxu0 %v2302
  %2366 = vmatprep.subr.mxu0 0.0
  %2367 = vmatpush1.msra.mxu0 %v2303
  %2368 = vmatprep.mubr.f32.mxu0 %v2271
  %2369 = vmatmul.mubr.f32.gmra.mrb[0].mxu0 %v2252
  %v2370 = vpop.f32.mrb[0].mxu0
  %v2371 = vadd.f32 0.0, %v2370
  %v2372 = vpop.f32.mrb[0].mxu0
  %2373 = vdwg.mxu0
  %v2374 = vmul.f32 %v2158, %v2158
  %v2375 = vmul.f32 %v2160, %v2160
  %v2376 = vmul.f32 %v2164, %v2164
  %v2377 = vmul.f32 %v2166, %v2166
  %v2378 = vmul.f32 %v2170, %v2170
  %v2379 = vmul.f32 %v2172, %v2172
  %v2380 = vmul.f32 %v2176, %v2176
  %v2381 = vmul.f32 %v2178, %v2178
  %v2382 = vmul.f32 %v2182, %v2182
  %v2383 = vmul.f32 %v2184, %v2184
  %v2384 = vmul.f32 %v2188, %v2188
  %v2385 = vmul.f32 %v2190, %v2190
  %v2386 = vmul.f32 %v2194, %v2194
  %v2387 = vmul.f32 %v2196, %v2196
  %v2388 = vmul.f32 %v2200, %v2200
  %v2389 = vmul.f32 %v2202, %v2202
  %v2390 = vmul.f32 %v2206, %v2206
  %v2391 = vmul.f32 %v2208, %v2208
  %v2392 = vmul.f32 %v2212, %v2212
  %v2393 = vmul.f32 %v2214, %v2214
  %v2394 = vmul.f32 %v2218, %v2218
  %v2395 = vmul.f32 %v2220, %v2220
  %v2396 = vmul.f32 %v2224, %v2224
  %v2397 = vmul.f32 %v2226, %v2226
  %v2398 = vmul.f32 %v2230, %v2230
  %v2399 = vmul.f32 %v2232, %v2232
  %v2400 = vadd.f32 %v2374, %v2376
  %v2401 = vadd.f32 %v2400, %v2378
  %v2402 = vadd.f32 %v2401, %v2380
  %v2403 = vadd.f32 %v2402, %v2382
  %v2404 = vadd.f32 %v2403, %v2384
  %v2405 = vadd.f32 %v2404, %v2386
  %v2406 = vadd.f32 %v2405, %v2388
  %v2407 = vadd.f32 %v2406, %v2390
  %v2408 = vadd.f32 %v2407, %v2392
  %v2409 = vadd.f32 %v2408, %v2394
  %v2410 = vadd.f32 %v2409, %v2396
  %v2411 = vsel %vm1958, %v2398, 0.0
  %v2412 = vadd.f32 %v2410, %v2411
  %v2413 = vrot.slane %v2412, 4
  %v2414 = vadd.f32 %v2412, %v2413
  %v2415 = vrot.slane %v2414, 2
  %v2416 = vadd.f32 %v2414, %v2415
  %v2417 = vrot.slane %v2416, 1
  %v2418 = vadd.f32 %v2416, %v2417
  %v2419 = vadd.f32 %v2375, %v2377
  %v2420 = vadd.f32 %v2419, %v2379
  %v2421 = vadd.f32 %v2420, %v2381
  %v2422 = vadd.f32 %v2421, %v2383
  %v2423 = vadd.f32 %v2422, %v2385
  %v2424 = vadd.f32 %v2423, %v2387
  %v2425 = vadd.f32 %v2424, %v2389
  %v2426 = vadd.f32 %v2425, %v2391
  %v2427 = vadd.f32 %v2426, %v2393
  %v2428 = vadd.f32 %v2427, %v2395
  %v2429 = vadd.f32 %v2428, %v2397
  %v2430 = vsel %vm1958, %v2399, 0.0
  %v2431 = vadd.f32 %v2429, %v2430
  %v2432 = vrot.slane %v2431, 4
  %v2433 = vadd.f32 %v2431, %v2432
  %v2434 = vrot.slane %v2433, 2
  %v2435 = vadd.f32 %v2433, %v2434
  %v2436 = vrot.slane %v2435, 1
  %v2437 = vadd.f32 %v2435, %v2436
  %2438 = vmatprep.subr.mxu0 0.0
  %2439 = vmatpush1.msra.mxu0 %v2272
  %2440 = vmatprep.subr.mxu0 0.0
  %2441 = vmatpush1.msra.mxu0 %v2273
  %2442 = vmatprep.subr.mxu0 0.0
  %2443 = vmatpush1.msra.mxu0 %v2274
  %2444 = vmatprep.subr.mxu0 0.0
  %2445 = vmatpush1.msra.mxu0 %v2275
  %2446 = vmatprep.subr.mxu0 0.0
  %2447 = vmatpush1.msra.mxu0 %v2276
  %2448 = vmatprep.subr.mxu0 0.0
  %2449 = vmatpush1.msra.mxu0 %v2277
  %2450 = vmatprep.subr.mxu0 0.0
  %2451 = vmatpush1.msra.mxu0 %v2278
  %2452 = vmatprep.subr.mxu0 0.0
  %2453 = vmatpush1.msra.mxu0 %v2279
  %2454 = vmatprep.subr.mxu0 0.0
  %2455 = vmatpush1.msra.mxu0 %v2280
  %2456 = vmatprep.subr.mxu0 0.0
  %2457 = vmatpush1.msra.mxu0 %v2281
  %2458 = vmatprep.subr.mxu0 0.0
  %2459 = vmatpush1.msra.mxu0 %v2282
  %2460 = vmatprep.subr.mxu0 0.0
  %2461 = vmatpush1.msra.mxu0 %v2283
  %2462 = vmatprep.subr.mxu0 0.0
  %2463 = vmatpush1.msra.mxu0 %v2284
  %2464 = vmatprep.subr.mxu0 0.0
  %2465 = vmatpush1.msra.mxu0 %v2285
  %2466 = vmatprep.subr.mxu0 0.0
  %2467 = vmatpush1.msra.mxu0 %v2286
  %2468 = vmatprep.subr.mxu0 0.0
  %2469 = vmatpush1.msra.mxu0 %v2287
  %2470 = vmatprep.subr.mxu0 0.0
  %2471 = vmatpush1.msra.mxu0 %v2288
  %2472 = vmatprep.subr.mxu0 0.0
  %2473 = vmatpush1.msra.mxu0 %v2289
  %2474 = vmatprep.subr.mxu0 0.0
  %2475 = vmatpush1.msra.mxu0 %v2290
  %2476 = vmatprep.subr.mxu0 0.0
  %2477 = vmatpush1.msra.mxu0 %v2291
  %2478 = vmatprep.subr.mxu0 0.0
  %2479 = vmatpush1.msra.mxu0 %v2292
  %2480 = vmatprep.subr.mxu0 0.0
  %2481 = vmatpush1.msra.mxu0 %v2293
  %2482 = vmatprep.subr.mxu0 0.0
  %2483 = vmatpush1.msra.mxu0 %v2294
  %2484 = vmatprep.subr.mxu0 0.0
  %2485 = vmatpush1.msra.mxu0 %v2295
  %2486 = vmatprep.subr.mxu0 0.0
  %2487 = vmatpush1.msra.mxu0 %v2296
  %2488 = vmatprep.subr.mxu0 0.0
  %2489 = vmatpush1.msra.mxu0 %v2297
  %2490 = vmatprep.subr.mxu0 0.0
  %2491 = vmatpush1.msra.mxu0 %v2298
  %2492 = vmatprep.subr.mxu0 0.0
  %2493 = vmatpush1.msra.mxu0 %v2299
  %2494 = vmatprep.subr.mxu0 0.0
  %2495 = vmatpush1.msra.mxu0 %v2300
  %2496 = vmatprep.subr.mxu0 0.0
  %2497 = vmatpush1.msra.mxu0 %v2301
  %2498 = vmatprep.subr.mxu0 0.0
  %2499 = vmatpush1.msra.mxu0 %v2302
  %2500 = vmatprep.subr.mxu0 0.0
  %2501 = vmatpush1.msra.mxu0 %v2303
  %2502 = vmatprep.mubr.f32.mxu0 %v2437
  %2503 = vmatmul.mubr.f32.gmra.mrb[0].mxu0 %v2418
  %v2504 = vpop.f32.mrb[0].mxu0
  %v2505 = vadd.f32 0.0, %v2504
  %v2506 = vpop.f32.mrb[0].mxu0
  %2507 = vdwg.mxu0
  %v2508 = vmul.f32 %v2371, 0.0025510204
  %v2509 = vmul.f32 %v2505, 0.0025510204
  %v2510 = vmul.f32 %v2508, %v2508
  %v2511 = vsub.f32 %v2509, %v2510
  %v2512 = vld [vmem:[%s9] sm:$0x1]
  %v2513 = vadd.f32 %v2511, 1e-05
  %v2514 = vrsqrt.pop %v2513
  %v2515 = vmul.f32 %v2512, %v2514
  %v2516 = vld [vmem:[%s10] sm:$0x1]
  %v2517 = vmul.f32 %v2508, %v2515
  %v2518 = vsub.f32 %v2516, %v2517
  %v2519 = vld [vmem:[%s12] sm:$0xff]
  %v2520 = vld [vmem:[%s12 + $0x8] sm:$0xff]
  %v2521 = vld [vmem:[%s12 + $0x10] sm:$0xff]
  %v2522 = vld [vmem:[%s12 + $0x18] sm:$0xff]
  %v2523 = vld [vmem:[%s12 + $0x20] sm:$0xff]
  %v2524 = vld [vmem:[%s12 + $0x28] sm:$0xff]
  %v2525 = vld [vmem:[%s12 + $0x30] sm:$0xff]
  %v2526 = vld [vmem:[%s12 + $0x38] sm:$0xff]
  %v2527 = vld [vmem:[%s12 + $0x40] sm:$0xff]
  %v2528 = vld [vmem:[%s12 + $0x48] sm:$0xff]
  %v2529 = vld [vmem:[%s12 + $0x50] sm:$0xff]
  %v2530 = vld [vmem:[%s12 + $0x58] sm:$0xff]
  %v2531 = vld [vmem:[%s12 + $0x60] sm:$0xff]
  %v2532 = vld [vmem:[%s12 + $0x68] sm:$0xff]
  %v2533 = vld [vmem:[%s12 + $0x70] sm:$0xff]
  %v2534 = vld [vmem:[%s12 + $0x78] sm:$0xff]
  %vm2535 = vcmask 523264
  %v2537 = vsel %vm2535, %v2515, 0
  %2539 = vmatprep.subr.mxu0 %v2520
  %2540 = vmatpush1.msra.mxu0 %v2519
  %2541 = vmatprep.subr.mxu0 %v2522
  %2542 = vmatpush1.msra.mxu0 %v2521
  %2543 = vmatprep.subr.mxu0 %v2524
  %2544 = vmatpush1.msra.mxu0 %v2523
  %2545 = vmatprep.subr.mxu0 %v2526
  %2546 = vmatpush1.msra.mxu0 %v2525
  %2547 = vmatprep.subr.mxu0 %v2528
  %2548 = vmatpush1.msra.mxu0 %v2527
  %2549 = vmatprep.subr.mxu0 %v2530
  %2550 = vmatpush1.msra.mxu0 %v2529
  %2551 = vmatprep.subr.mxu0 %v2532
  %2552 = vmatpush1.msra.mxu0 %v2531
  %2553 = vmatprep.subr.mxu0 %v2534
  %2554 = vmatpush1.msra.mxu0 %v2533
  %2555 = vmatprep.subr.mxu0 0.0
  %2556 = vmatpush1.msra.mxu0 0.0
  %2557 = vmatprep.subr.mxu0 0.0
  %2558 = vmatpush1.msra.mxu0 0.0
  %2559 = vmatprep.subr.mxu0 0.0
  %2560 = vmatpush1.msra.mxu0 0.0
  %2561 = vmatprep.subr.mxu0 0.0
  %2562 = vmatpush1.msra.mxu0 0.0
  %2563 = vmatprep.subr.mxu0 0.0
  %2564 = vmatpush1.msra.mxu0 0.0
  %2565 = vmatprep.subr.mxu0 0.0
  %2566 = vmatpush1.msra.mxu0 0.0
  %2567 = vmatprep.subr.mxu0 0.0
  %2568 = vmatpush1.msra.mxu0 0.0
  %2569 = vmatprep.subr.mxu0 0.0
  %2570 = vmatpush1.msra.mxu0 0.0
  %2571 = vmatprep.subr.mxu0 0.0
  %2572 = vmatpush1.msra.mxu0 0.0
  %2573 = vmatprep.subr.mxu0 0.0
  %2574 = vmatpush1.msra.mxu0 0.0
  %2575 = vmatprep.subr.mxu0 0.0
  %2576 = vmatpush1.msra.mxu0 0.0
  %2577 = vmatprep.subr.mxu0 0.0
  %2578 = vmatpush1.msra.mxu0 0.0
  %2579 = vmatprep.subr.mxu0 0.0
  %2580 = vmatpush1.msra.mxu0 0.0
  %2581 = vmatprep.subr.mxu0 0.0
  %2582 = vmatpush1.msra.mxu0 0.0
  %2583 = vmatprep.subr.mxu0 0.0
  %2584 = vmatpush1.msra.mxu0 0.0
  %2585 = vmatprep.subr.mxu0 0.0
  %2586 = vmatpush1.msra.mxu0 0.0
  %2587 = vmatprep.subr.mxu0 0.0
  %2588 = vmatpush1.msra.mxu0 0.0
  %2589 = vmatprep.subr.mxu0 0.0
  %2590 = vmatpush1.msra.mxu0 0.0
  %2591 = vmatprep.subr.mxu0 0.0
  %2592 = vmatpush1.msra.mxu0 0.0
  %2593 = vmatprep.subr.mxu0 0.0
  %2594 = vmatpush1.msra.mxu0 0.0
  %2595 = vmatprep.subr.mxu0 0.0
  %2596 = vmatpush1.msra.mxu0 0.0
  %2597 = vmatprep.subr.mxu0 0.0
  %2598 = vmatpush1.msra.mxu0 0.0
  %2599 = vmatprep.subr.mxu0 0.0
  %2600 = vmatpush1.msra.mxu0 0.0
  %2601 = vmatprep.subr.mxu0 0.0
  %2602 = vmatpush1.msra.mxu0 0.0
  %2603 = vmatprep.mubr.f32.mxu0 0.0
  %2604 = vmatmul.mubr.f32.gmra.mrb[0].mxu0 %v2537
  %v2605 = vpop.f32.mrb[0].mxu0
  %v2606 = vadd.f32 0.0, %v2605
  %v2607 = vpop.f32.mrb[0].mxu0
  %v2608 = vadd.f32 0.0, %v2607
  %2609 = vdwg.mxu0
  %v2611 = vsel %vm2535, %v2518, 0
  %2613 = vmatprep.subr.mxu0 %v2520
  %2614 = vmatpush1.msra.mxu0 %v2519
  %2615 = vmatprep.subr.mxu0 %v2522
  %2616 = vmatpush1.msra.mxu0 %v2521
  %2617 = vmatprep.subr.mxu0 %v2524
  %2618 = vmatpush1.msra.mxu0 %v2523
  %2619 = vmatprep.subr.mxu0 %v2526
  %2620 = vmatpush1.msra.mxu0 %v2525
  %2621 = vmatprep.subr.mxu0 %v2528
  %2622 = vmatpush1.msra.mxu0 %v2527
  %2623 = vmatprep.subr.mxu0 %v2530
  %2624 = vmatpush1.msra.mxu0 %v2529
  %2625 = vmatprep.subr.mxu0 %v2532
  %2626 = vmatpush1.msra.mxu0 %v2531
  %2627 = vmatprep.subr.mxu0 %v2534
  %2628 = vmatpush1.msra.mxu0 %v2533
  %2629 = vmatprep.subr.mxu0 0.0
  %2630 = vmatpush1.msra.mxu0 0.0
  %2631 = vmatprep.subr.mxu0 0.0
  %2632 = vmatpush1.msra.mxu0 0.0
  %2633 = vmatprep.subr.mxu0 0.0
  %2634 = vmatpush1.msra.mxu0 0.0
  %2635 = vmatprep.subr.mxu0 0.0
  %2636 = vmatpush1.msra.mxu0 0.0
  %2637 = vmatprep.subr.mxu0 0.0
  %2638 = vmatpush1.msra.mxu0 0.0
  %2639 = vmatprep.subr.mxu0 0.0
  %2640 = vmatpush1.msra.mxu0 0.0
  %2641 = vmatprep.subr.mxu0 0.0
  %2642 = vmatpush1.msra.mxu0 0.0
  %2643 = vmatprep.subr.mxu0 0.0
  %2644 = vmatpush1.msra.mxu0 0.0
  %2645 = vmatprep.subr.mxu0 0.0
  %2646 = vmatpush1.msra.mxu0 0.0
  %2647 = vmatprep.subr.mxu0 0.0
  %2648 = vmatpush1.msra.mxu0 0.0
  %2649 = vmatprep.subr.mxu0 0.0
  %2650 = vmatpush1.msra.mxu0 0.0
  %2651 = vmatprep.subr.mxu0 0.0
  %2652 = vmatpush1.msra.mxu0 0.0
  %2653 = vmatprep.subr.mxu0 0.0
  %2654 = vmatpush1.msra.mxu0 0.0
  %2655 = vmatprep.subr.mxu0 0.0
  %2656 = vmatpush1.msra.mxu0 0.0
  %2657 = vmatprep.subr.mxu0 0.0
  %2658 = vmatpush1.msra.mxu0 0.0
  %2659 = vmatprep.subr.mxu0 0.0
  %2660 = vmatpush1.msra.mxu0 0.0
  %2661 = vmatprep.subr.mxu0 0.0
  %2662 = vmatpush1.msra.mxu0 0.0
  %2663 = vmatprep.subr.mxu0 0.0
  %2664 = vmatpush1.msra.mxu0 0.0
  %2665 = vmatprep.subr.mxu0 0.0
  %2666 = vmatpush1.msra.mxu0 0.0
  %2667 = vmatprep.subr.mxu0 0.0
  %2668 = vmatpush1.msra.mxu0 0.0
  %2669 = vmatprep.subr.mxu0 0.0
  %2670 = vmatpush1.msra.mxu0 0.0
  %2671 = vmatprep.subr.mxu0 0.0
  %2672 = vmatpush1.msra.mxu0 0.0
  %2673 = vmatprep.subr.mxu0 0.0
  %2674 = vmatpush1.msra.mxu0 0.0
  %2675 = vmatprep.subr.mxu0 0.0
  %2676 = vmatpush1.msra.mxu0 0.0
  %2677 = vmatprep.mubr.f32.mxu0 0.0
  %2678 = vmatmul.mubr.f32.gmra.mrb[0].mxu0 %v2611
  %v2679 = vpop.f32.mrb[0].mxu0
  %v2680 = vadd.f32 0.0, %v2679
  %v2681 = vpop.f32.mrb[0].mxu0
  %v2682 = vadd.f32 0.0, %v2681
  %2683 = vdwg.mxu0
  %v2684 = vlaneseq
  %v2685 = vshrl.u32 %v2684, 7
  %v2686 = vsub.s32 0, %v2685
  %v2687 = vrot.slane %v2606, %v2686
  %v2688 = vlaneseq
  %v2689 = vshrl.u32 %v2688, 7
  %v2690 = vsub.s32 0, %v2689
  %v2691 = vrot.slane %v2608, %v2690
  %v2692 = vmul.f32 %v2158, %v2687
  %v2693 = vmul.f32 %v2160, %v2691
  %v2694 = vmul.f32 %v2164, %v2687
  %v2695 = vmul.f32 %v2166, %v2691
  %v2696 = vmul.f32 %v2170, %v2687
  %v2697 = vmul.f32 %v2172, %v2691
  %v2698 = vmul.f32 %v2176, %v2687
  %v2699 = vmul.f32 %v2178, %v2691
  %v2700 = vmul.f32 %v2182, %v2687
  %v2701 = vmul.f32 %v2184, %v2691
  %v2702 = vmul.f32 %v2188, %v2687
  %v2703 = vmul.f32 %v2190, %v2691
  %v2704 = vmul.f32 %v2194, %v2687
  %v2705 = vmul.f32 %v2196, %v2691
  %v2706 = vmul.f32 %v2200, %v2687
  %v2707 = vmul.f32 %v2202, %v2691
  %v2708 = vmul.f32 %v2206, %v2687
  %v2709 = vmul.f32 %v2208, %v2691
  %v2710 = vmul.f32 %v2212, %v2687
  %v2711 = vmul.f32 %v2214, %v2691
  %v2712 = vmul.f32 %v2218, %v2687
  %v2713 = vmul.f32 %v2220, %v2691
  %v2714 = vmul.f32 %v2224, %v2687
  %v2715 = vmul.f32 %v2226, %v2691
  %v2716 = vmul.f32 %v2230, %v2687
  %v2717 = vmul.f32 %v2232, %v2691
  %v2718 = vlaneseq
  %v2719 = vshrl.u32 %v2718, 7
  %v2720 = vsub.s32 0, %v2719
  %v2721 = vrot.slane %v2680, %v2720
  %v2722 = vlaneseq
  %v2723 = vshrl.u32 %v2722, 7
  %v2724 = vsub.s32 0, %v2723
  %v2725 = vrot.slane %v2682, %v2724
  %v2726 = vadd.f32 %v2692, %v2721
  %v2727 = vadd.f32 %v2693, %v2725
  %v2728 = vadd.f32 %v2694, %v2721
  %v2729 = vadd.f32 %v2695, %v2725
  %v2730 = vadd.f32 %v2696, %v2721
  %v2731 = vadd.f32 %v2697, %v2725
  %v2732 = vadd.f32 %v2698, %v2721
  %v2733 = vadd.f32 %v2699, %v2725
  %v2734 = vadd.f32 %v2700, %v2721
  %v2735 = vadd.f32 %v2701, %v2725
  %v2736 = vadd.f32 %v2702, %v2721
  %v2737 = vadd.f32 %v2703, %v2725
  %v2738 = vadd.f32 %v2704, %v2721
  %v2739 = vadd.f32 %v2705, %v2725
  %v2740 = vadd.f32 %v2706, %v2721
  %v2741 = vadd.f32 %v2707, %v2725
  %v2742 = vadd.f32 %v2708, %v2721
  %v2743 = vadd.f32 %v2709, %v2725
  %v2744 = vadd.f32 %v2710, %v2721
  %v2745 = vadd.f32 %v2711, %v2725
  %v2746 = vadd.f32 %v2712, %v2721
  %v2747 = vadd.f32 %v2713, %v2725
  %v2748 = vadd.f32 %v2714, %v2721
  %v2749 = vadd.f32 %v2715, %v2725
  %v2750 = vadd.f32 %v2716, %v2721
  %v2751 = vadd.f32 %v2717, %v2725
  %v2752 = vmax.f32 %v2726, 0.0
  %v2753 = vmax.f32 %v2727, 0.0
  %v2754 = vmax.f32 %v2728, 0.0
  %v2755 = vmax.f32 %v2729, 0.0
  %v2756 = vmax.f32 %v2730, 0.0
  %v2757 = vmax.f32 %v2731, 0.0
  %v2758 = vmax.f32 %v2732, 0.0
  %v2759 = vmax.f32 %v2733, 0.0
  %v2760 = vmax.f32 %v2734, 0.0
  %v2761 = vmax.f32 %v2735, 0.0
  %v2762 = vmax.f32 %v2736, 0.0
  %v2763 = vmax.f32 %v2737, 0.0
  %v2764 = vmax.f32 %v2738, 0.0
  %v2765 = vmax.f32 %v2739, 0.0
  %v2766 = vmax.f32 %v2740, 0.0
  %v2767 = vmax.f32 %v2741, 0.0
  %v2768 = vmax.f32 %v2742, 0.0
  %v2769 = vmax.f32 %v2743, 0.0
  %v2770 = vmax.f32 %v2744, 0.0
  %v2771 = vmax.f32 %v2745, 0.0
  %v2772 = vmax.f32 %v2746, 0.0
  %v2773 = vmax.f32 %v2747, 0.0
  %v2774 = vmax.f32 %v2748, 0.0
  %v2775 = vmax.f32 %v2749, 0.0
  %v2776 = vmax.f32 %v2750, 0.0
  %v2777 = vmax.f32 %v2751, 0.0
  %v2778 = vld [vmem:[%s13] sm:$0xff]
  %v2779 = vld [vmem:[%s13 + $0x8] sm:$0xff]
  %v2780 = vld [vmem:[%s13 + $0x10] sm:$0xff]
  %v2781 = vld [vmem:[%s13 + $0x18] sm:$0xff]
  %v2782 = vld [vmem:[%s13 + $0x20] sm:$0xff]
  %v2783 = vld [vmem:[%s13 + $0x28] sm:$0xff]
  %v2784 = vld [vmem:[%s13 + $0x30] sm:$0xff]
  %v2785 = vld [vmem:[%s13 + $0x38] sm:$0xff]
  %v2786 = vld [vmem:[%s13 + $0x40] sm:$0xff]
  %v2787 = vld [vmem:[%s13 + $0x48] sm:$0xff]
  %v2788 = vld [vmem:[%s13 + $0x50] sm:$0xff]
  %v2789 = vld [vmem:[%s13 + $0x58] sm:$0xff]
  %v2790 = vld [vmem:[%s13 + $0x60] sm:$0xff]
  %v2791 = vld [vmem:[%s13 + $0x68] sm:$0xff]
  %v2792 = vld [vmem:[%s13 + $0x70] sm:$0xff]
  %v2793 = vld [vmem:[%s13 + $0x78] sm:$0xff]
  %v2794 = vld [vmem:[%s13 + $0x80] sm:$0xff]
  %v2795 = vld [vmem:[%s13 + $0x88] sm:$0xff]
  %v2796 = vld [vmem:[%s13 + $0x90] sm:$0xff]
  %v2797 = vld [vmem:[%s13 + $0x98] sm:$0xff]
  %v2798 = vld [vmem:[%s13 + $0xa0] sm:$0xff]
  %v2799 = vld [vmem:[%s13 + $0xa8] sm:$0xff]
  %v2800 = vld [vmem:[%s13 + $0xb0] sm:$0xff]
  %v2801 = vld [vmem:[%s13 + $0xb8] sm:$0xff]
  %v2802 = vld [vmem:[%s13 + $0xc0] sm:$0xff]
  %v2803 = vld [vmem:[%s13 + $0xc8] sm:$0xff]
  %v2804 = vld [vmem:[%s13 + $0xd0] sm:$0xff]
  %v2805 = vld [vmem:[%s13 + $0xd8] sm:$0xff]
  %v2806 = vld [vmem:[%s13 + $0xe0] sm:$0xff]
  %v2807 = vld [vmem:[%s13 + $0xe8] sm:$0xff]
  %v2808 = vld [vmem:[%s13 + $0xf0] sm:$0xff]
  %v2809 = vld [vmem:[%s13 + $0xf8] sm:$0xff]
  %v2810 = vld [vmem:[%s13 + $0x100] sm:$0xff]
  %v2811 = vld [vmem:[%s13 + $0x108] sm:$0xff]
  %v2812 = vld [vmem:[%s13 + $0x110] sm:$0xff]
  %v2813 = vld [vmem:[%s13 + $0x118] sm:$0xff]
  %v2814 = vld [vmem:[%s13 + $0x120] sm:$0xff]
  %v2815 = vld [vmem:[%s13 + $0x128] sm:$0xff]
  %v2816 = vld [vmem:[%s13 + $0x130] sm:$0xff]
  %v2817 = vld [vmem:[%s13 + $0x138] sm:$0xff]
  %v2818 = vld [vmem:[%s13 + $0x140] sm:$0xff]
  %v2819 = vld [vmem:[%s13 + $0x148] sm:$0xff]
  %v2820 = vld [vmem:[%s13 + $0x150] sm:$0xff]
  %v2821 = vld [vmem:[%s13 + $0x158] sm:$0xff]
  %v2822 = vld [vmem:[%s13 + $0x160] sm:$0xff]
  %v2823 = vld [vmem:[%s13 + $0x168] sm:$0xff]
  %v2824 = vld [vmem:[%s13 + $0x170] sm:$0xff]
  %v2825 = vld [vmem:[%s13 + $0x178] sm:$0xff]
  %v2826 = vld [vmem:[%s13 + $0x180] sm:$0xff]
  %v2827 = vld [vmem:[%s13 + $0x188] sm:$0xff]
  %v2828 = vld [vmem:[%s13 + $0x190] sm:$0xff]
  %v2829 = vld [vmem:[%s13 + $0x198] sm:$0xff]
  %v2830 = vld [vmem:[%s13 + $0x1a0] sm:$0xff]
  %v2831 = vld [vmem:[%s13 + $0x1a8] sm:$0xff]
  %v2832 = vld [vmem:[%s13 + $0x1b0] sm:$0xff]
  %v2833 = vld [vmem:[%s13 + $0x1b8] sm:$0xff]
  %v2834 = vld [vmem:[%s13 + $0x1c0] sm:$0xff]
  %v2835 = vld [vmem:[%s13 + $0x1c8] sm:$0xff]
  %v2836 = vld [vmem:[%s13 + $0x1d0] sm:$0xff]
  %v2837 = vld [vmem:[%s13 + $0x1d8] sm:$0xff]
  %v2838 = vld [vmem:[%s13 + $0x1e0] sm:$0xff]
  %v2839 = vld [vmem:[%s13 + $0x1e8] sm:$0xff]
  %v2840 = vld [vmem:[%s13 + $0x1f0] sm:$0xff]
  %v2841 = vld [vmem:[%s13 + $0x1f8] sm:$0xff]
  %v2842 = vld [vmem:[%s13 + $0x200] sm:$0xff]
  %v2843 = vld [vmem:[%s13 + $0x208] sm:$0xff]
  %v2844 = vld [vmem:[%s13 + $0x210] sm:$0xff]
  %v2845 = vld [vmem:[%s13 + $0x218] sm:$0xff]
  %v2846 = vld [vmem:[%s13 + $0x220] sm:$0xff]
  %v2847 = vld [vmem:[%s13 + $0x228] sm:$0xff]
  %v2848 = vld [vmem:[%s13 + $0x230] sm:$0xff]
  %v2849 = vld [vmem:[%s13 + $0x238] sm:$0xff]
  %v2850 = vld [vmem:[%s13 + $0x240] sm:$0xff]
  %v2851 = vld [vmem:[%s13 + $0x248] sm:$0xff]
  %v2852 = vld [vmem:[%s13 + $0x250] sm:$0xff]
  %v2853 = vld [vmem:[%s13 + $0x258] sm:$0xff]
  %v2854 = vld [vmem:[%s13 + $0x260] sm:$0xff]
  %v2855 = vld [vmem:[%s13 + $0x268] sm:$0xff]
  %v2856 = vld [vmem:[%s13 + $0x270] sm:$0xff]
  %v2857 = vld [vmem:[%s13 + $0x278] sm:$0xff]
  %v2858 = vld [vmem:[%s13 + $0x280] sm:$0xff]
  %v2859 = vld [vmem:[%s13 + $0x288] sm:$0xff]
  %v2860 = vld [vmem:[%s13 + $0x290] sm:$0xff]
  %v2861 = vld [vmem:[%s13 + $0x298] sm:$0xff]
  %v2862 = vld [vmem:[%s13 + $0x2a0] sm:$0xff]
  %v2863 = vld [vmem:[%s13 + $0x2a8] sm:$0xff]
  %v2864 = vld [vmem:[%s13 + $0x2b0] sm:$0xff]
  %v2865 = vld [vmem:[%s13 + $0x2b8] sm:$0xff]
  %v2866 = vld [vmem:[%s13 + $0x2c0] sm:$0xff]
  %v2867 = vld [vmem:[%s13 + $0x2c8] sm:$0xff]
  %v2868 = vld [vmem:[%s13 + $0x2d0] sm:$0xff]
  %v2869 = vld [vmem:[%s13 + $0x2d8] sm:$0xff]
  %v2870 = vld [vmem:[%s13 + $0x2e0] sm:$0xff]
  %v2871 = vld [vmem:[%s13 + $0x2e8] sm:$0xff]
  %v2872 = vld [vmem:[%s13 + $0x2f0] sm:$0xff]
  %v2873 = vld [vmem:[%s13 + $0x2f8] sm:$0xff]
  %v2874 = vld [vmem:[%s13 + $0x300] sm:$0xff]
  %v2875 = vld [vmem:[%s13 + $0x308] sm:$0xff]
  %v2876 = vld [vmem:[%s13 + $0x310] sm:$0xff]
  %v2877 = vld [vmem:[%s13 + $0x318] sm:$0xff]
  %v2878 = vld [vmem:[%s13 + $0x320] sm:$0xff]
  %v2879 = vld [vmem:[%s13 + $0x328] sm:$0xff]
  %v2880 = vld [vmem:[%s13 + $0x330] sm:$0xff]
  %v2881 = vld [vmem:[%s13 + $0x338] sm:$0xff]
  %v2882 = vld [vmem:[%s13 + $0x340] sm:$0xff]
  %v2883 = vld [vmem:[%s13 + $0x348] sm:$0xff]
  %v2884 = vld [vmem:[%s13 + $0x350] sm:$0xff]
  %v2885 = vld [vmem:[%s13 + $0x358] sm:$0xff]
  %v2886 = vld [vmem:[%s13 + $0x360] sm:$0xff]
  %v2887 = vld [vmem:[%s13 + $0x368] sm:$0xff]
  %v2888 = vld [vmem:[%s13 + $0x370] sm:$0xff]
  %v2889 = vld [vmem:[%s13 + $0x378] sm:$0xff]
  %v2890 = vld [vmem:[%s13 + $0x380] sm:$0xff]
  %v2891 = vld [vmem:[%s13 + $0x388] sm:$0xff]
  %v2892 = vld [vmem:[%s13 + $0x390] sm:$0xff]
  %v2893 = vld [vmem:[%s13 + $0x398] sm:$0xff]
  %v2894 = vld [vmem:[%s13 + $0x3a0] sm:$0xff]
  %v2895 = vld [vmem:[%s13 + $0x3a8] sm:$0xff]
  %v2896 = vld [vmem:[%s13 + $0x3b0] sm:$0xff]
  %v2897 = vld [vmem:[%s13 + $0x3b8] sm:$0xff]
  %v2898 = vld [vmem:[%s13 + $0x3c0] sm:$0xff]
  %v2899 = vld [vmem:[%s13 + $0x3c8] sm:$0xff]
  %v2900 = vld [vmem:[%s13 + $0x3d0] sm:$0xff]
  %v2901 = vld [vmem:[%s13 + $0x3d8] sm:$0xff]
  %v2902 = vld [vmem:[%s13 + $0x3e0] sm:$0xff]
  %v2903 = vld [vmem:[%s13 + $0x3e8] sm:$0xff]
  %v2904 = vld [vmem:[%s13 + $0x3f0] sm:$0xff]
  %v2905 = vld [vmem:[%s13 + $0x3f8] sm:$0xff]
  %2906 = vmatprep.subr.mxu0 %v2779
  %2907 = vmatpush1.msra.mxu0 %v2778
  %2908 = vmatprep.subr.mxu0 %v2783
  %2909 = vmatpush1.msra.mxu0 %v2782
  %2910 = vmatprep.subr.mxu0 %v2787
  %2911 = vmatpush1.msra.mxu0 %v2786
  %2912 = vmatprep.subr.mxu0 %v2791
  %2913 = vmatpush1.msra.mxu0 %v2790
  %2914 = vmatprep.subr.mxu0 %v2795
  %2915 = vmatpush1.msra.mxu0 %v2794
  %2916 = vmatprep.subr.mxu0 %v2799
  %2917 = vmatpush1.msra.mxu0 %v2798
  %2918 = vmatprep.subr.mxu0 %v2803
  %2919 = vmatpush1.msra.mxu0 %v2802
  %2920 = vmatprep.subr.mxu0 %v2807
  %2921 = vmatpush1.msra.mxu0 %v2806
  %2922 = vmatprep.subr.mxu0 %v2811
  %2923 = vmatpush1.msra.mxu0 %v2810
  %2924 = vmatprep.subr.mxu0 %v2815
  %2925 = vmatpush1.msra.mxu0 %v2814
  %2926 = vmatprep.subr.mxu0 %v2819
  %2927 = vmatpush1.msra.mxu0 %v2818
  %2928 = vmatprep.subr.mxu0 %v2823
  %2929 = vmatpush1.msra.mxu0 %v2822
  %2930 = vmatprep.subr.mxu0 %v2827
  %2931 = vmatpush1.msra.mxu0 %v2826
  %2932 = vmatprep.subr.mxu0 %v2831
  %2933 = vmatpush1.msra.mxu0 %v2830
  %2934 = vmatprep.subr.mxu0 %v2835
  %2935 = vmatpush1.msra.mxu0 %v2834
  %2936 = vmatprep.subr.mxu0 %v2839
  %2937 = vmatpush1.msra.mxu0 %v2838
  %2938 = vmatprep.subr.mxu0 %v2843
  %2939 = vmatpush1.msra.mxu0 %v2842
  %2940 = vmatprep.subr.mxu0 %v2847
  %2941 = vmatpush1.msra.mxu0 %v2846
  %2942 = vmatprep.subr.mxu0 %v2851
  %2943 = vmatpush1.msra.mxu0 %v2850
  %2944 = vmatprep.subr.mxu0 %v2855
  %2945 = vmatpush1.msra.mxu0 %v2854
  %2946 = vmatprep.subr.mxu0 %v2859
  %2947 = vmatpush1.msra.mxu0 %v2858
  %2948 = vmatprep.subr.mxu0 %v2863
  %2949 = vmatpush1.msra.mxu0 %v2862
  %2950 = vmatprep.subr.mxu0 %v2867
  %2951 = vmatpush1.msra.mxu0 %v2866
  %2952 = vmatprep.subr.mxu0 %v2871
  %2953 = vmatpush1.msra.mxu0 %v2870
  %2954 = vmatprep.subr.mxu0 %v2875
  %2955 = vmatpush1.msra.mxu0 %v2874
  %2956 = vmatprep.subr.mxu0 %v2879
  %2957 = vmatpush1.msra.mxu0 %v2878
  %2958 = vmatprep.subr.mxu0 %v2883
  %2959 = vmatpush1.msra.mxu0 %v2882
  %2960 = vmatprep.subr.mxu0 %v2887
  %2961 = vmatpush1.msra.mxu0 %v2886
  %2962 = vmatprep.subr.mxu0 %v2891
  %2963 = vmatpush1.msra.mxu0 %v2890
  %2964 = vmatprep.subr.mxu0 %v2895
  %2965 = vmatpush1.msra.mxu0 %v2894
  %2966 = vmatprep.subr.mxu0 %v2899
  %2967 = vmatpush1.msra.mxu0 %v2898
  %2968 = vmatprep.subr.mxu0 %v2903
  %2969 = vmatpush1.msra.mxu0 %v2902
  %2970 = vmatprep.mubr.f32.mxu0 %v2753
  %2971 = vmatmul.mubr.f32.gmra.mrb[0].mxu0 %v2752
  %v2972 = vpop.f32.mrb[0].mxu0
  %v2973 = vadd.f32 0.0, %v2972
  %v2974 = vpop.f32.mrb[0].mxu0
  %v2975 = vadd.f32 0.0, %v2974
  %2976 = vmatprep.mubr.f32.mxu0 %v2755
  %2977 = vmatmul.mubr.f32.gmra.mrb[0].mxu0 %v2754
  %v2978 = vpop.f32.mrb[0].mxu0
  %v2979 = vadd.f32 0.0, %v2978
  %v2980 = vpop.f32.mrb[0].mxu0
  %v2981 = vadd.f32 0.0, %v2980
  %2982 = vmatprep.mubr.f32.mxu0 %v2757
  %2983 = vmatmul.mubr.f32.gmra.mrb[0].mxu0 %v2756
  %v2984 = vpop.f32.mrb[0].mxu0
  %v2985 = vadd.f32 0.0, %v2984
  %v2986 = vpop.f32.mrb[0].mxu0
  %v2987 = vadd.f32 0.0, %v2986
  %2988 = vmatprep.mubr.f32.mxu0 %v2759
  %2989 = vmatmul.mubr.f32.gmra.mrb[0].mxu0 %v2758
  %v2990 = vpop.f32.mrb[0].mxu0
  %v2991 = vadd.f32 0.0, %v2990
  %v2992 = vpop.f32.mrb[0].mxu0
  %v2993 = vadd.f32 0.0, %v2992
  %2994 = vmatprep.mubr.f32.mxu0 %v2761
  %2995 = vmatmul.mubr.f32.gmra.mrb[0].mxu0 %v2760
  %v2996 = vpop.f32.mrb[0].mxu0
  %v2997 = vadd.f32 0.0, %v2996
  %v2998 = vpop.f32.mrb[0].mxu0
  %v2999 = vadd.f32 0.0, %v2998
  %3000 = vmatprep.mubr.f32.mxu0 %v2763
  %3001 = vmatmul.mubr.f32.gmra.mrb[0].mxu0 %v2762
  %v3002 = vpop.f32.mrb[0].mxu0
  %v3003 = vadd.f32 0.0, %v3002
  %v3004 = vpop.f32.mrb[0].mxu0
  %v3005 = vadd.f32 0.0, %v3004
  %3006 = vmatprep.mubr.f32.mxu0 %v2765
  %3007 = vmatmul.mubr.f32.gmra.mrb[0].mxu0 %v2764
  %v3008 = vpop.f32.mrb[0].mxu0
  %v3009 = vadd.f32 0.0, %v3008
  %v3010 = vpop.f32.mrb[0].mxu0
  %v3011 = vadd.f32 0.0, %v3010
  %3012 = vmatprep.mubr.f32.mxu0 %v2767
  %3013 = vmatmul.mubr.f32.gmra.mrb[0].mxu0 %v2766
  %v3014 = vpop.f32.mrb[0].mxu0
  %v3015 = vadd.f32 0.0, %v3014
  %v3016 = vpop.f32.mrb[0].mxu0
  %v3017 = vadd.f32 0.0, %v3016
  %3018 = vmatprep.mubr.f32.mxu0 %v2769
  %3019 = vmatmul.mubr.f32.gmra.mrb[0].mxu0 %v2768
  %v3020 = vpop.f32.mrb[0].mxu0
  %v3021 = vadd.f32 0.0, %v3020
  %v3022 = vpop.f32.mrb[0].mxu0
  %v3023 = vadd.f32 0.0, %v3022
  %3024 = vmatprep.mubr.f32.mxu0 %v2771
  %3025 = vmatmul.mubr.f32.gmra.mrb[0].mxu0 %v2770
  %v3026 = vpop.f32.mrb[0].mxu0
  %v3027 = vadd.f32 0.0, %v3026
  %v3028 = vpop.f32.mrb[0].mxu0
  %v3029 = vadd.f32 0.0, %v3028
  %3030 = vmatprep.mubr.f32.mxu0 %v2773
  %3031 = vmatmul.mubr.f32.gmra.mrb[0].mxu0 %v2772
  %v3032 = vpop.f32.mrb[0].mxu0
  %v3033 = vadd.f32 0.0, %v3032
  %v3034 = vpop.f32.mrb[0].mxu0
  %v3035 = vadd.f32 0.0, %v3034
  %3036 = vmatprep.mubr.f32.mxu0 %v2775
  %3037 = vmatmul.mubr.f32.gmra.mrb[0].mxu0 %v2774
  %v3038 = vpop.f32.mrb[0].mxu0
  %v3039 = vadd.f32 0.0, %v3038
  %v3040 = vpop.f32.mrb[0].mxu0
  %v3041 = vadd.f32 0.0, %v3040
  %3042 = vmatprep.mubr.f32.mxu0 %v2777
  %3043 = vmatmul.mubr.f32.gmra.mrb[0].mxu0 %v2776
  %v3044 = vpop.f32.mrb[0].mxu0
  %v3045 = vadd.f32 0.0, %v3044
  %v3046 = vpop.f32.mrb[0].mxu0
  %v3047 = vadd.f32 0.0, %v3046
  %3048 = vdwg.mxu0
  %3049 = vmatprep.subr.mxu0 %v2781
  %3050 = vmatpush1.msra.mxu0 %v2780
  %3051 = vmatprep.subr.mxu0 %v2785
  %3052 = vmatpush1.msra.mxu0 %v2784
  %3053 = vmatprep.subr.mxu0 %v2789
  %3054 = vmatpush1.msra.mxu0 %v2788
  %3055 = vmatprep.subr.mxu0 %v2793
  %3056 = vmatpush1.msra.mxu0 %v2792
  %3057 = vmatprep.subr.mxu0 %v2797
  %3058 = vmatpush1.msra.mxu0 %v2796
  %3059 = vmatprep.subr.mxu0 %v2801
  %3060 = vmatpush1.msra.mxu0 %v2800
  %3061 = vmatprep.subr.mxu0 %v2805
  %3062 = vmatpush1.msra.mxu0 %v2804
  %3063 = vmatprep.subr.mxu0 %v2809
  %3064 = vmatpush1.msra.mxu0 %v2808
  %3065 = vmatprep.subr.mxu0 %v2813
  %3066 = vmatpush1.msra.mxu0 %v2812
  %3067 = vmatprep.subr.mxu0 %v2817
  %3068 = vmatpush1.msra.mxu0 %v2816
  %3069 = vmatprep.subr.mxu0 %v2821
  %3070 = vmatpush1.msra.mxu0 %v2820
  %3071 = vmatprep.subr.mxu0 %v2825
  %3072 = vmatpush1.msra.mxu0 %v2824
  %3073 = vmatprep.subr.mxu0 %v2829
  %3074 = vmatpush1.msra.mxu0 %v2828
  %3075 = vmatprep.subr.mxu0 %v2833
  %3076 = vmatpush1.msra.mxu0 %v2832
  %3077 = vmatprep.subr.mxu0 %v2837
  %3078 = vmatpush1.msra.mxu0 %v2836
  %3079 = vmatprep.subr.mxu0 %v2841
  %3080 = vmatpush1.msra.mxu0 %v2840
  %3081 = vmatprep.subr.mxu0 %v2845
  %3082 = vmatpush1.msra.mxu0 %v2844
  %3083 = vmatprep.subr.mxu0 %v2849
  %3084 = vmatpush1.msra.mxu0 %v2848
  %3085 = vmatprep.subr.mxu0 %v2853
  %3086 = vmatpush1.msra.mxu0 %v2852
  %3087 = vmatprep.subr.mxu0 %v2857
  %3088 = vmatpush1.msra.mxu0 %v2856
  %3089 = vmatprep.subr.mxu0 %v2861
  %3090 = vmatpush1.msra.mxu0 %v2860
  %3091 = vmatprep.subr.mxu0 %v2865
  %3092 = vmatpush1.msra.mxu0 %v2864
  %3093 = vmatprep.subr.mxu0 %v2869
  %3094 = vmatpush1.msra.mxu0 %v2868
  %3095 = vmatprep.subr.mxu0 %v2873
  %3096 = vmatpush1.msra.mxu0 %v2872
  %3097 = vmatprep.subr.mxu0 %v2877
  %3098 = vmatpush1.msra.mxu0 %v2876
  %3099 = vmatprep.subr.mxu0 %v2881
  %3100 = vmatpush1.msra.mxu0 %v2880
  %3101 = vmatprep.subr.mxu0 %v2885
  %3102 = vmatpush1.msra.mxu0 %v2884
  %3103 = vmatprep.subr.mxu0 %v2889
  %3104 = vmatpush1.msra.mxu0 %v2888
  %3105 = vmatprep.subr.mxu0 %v2893
  %3106 = vmatpush1.msra.mxu0 %v2892
  %3107 = vmatprep.subr.mxu0 %v2897
  %3108 = vmatpush1.msra.mxu0 %v2896
  %3109 = vmatprep.subr.mxu0 %v2901
  %3110 = vmatpush1.msra.mxu0 %v2900
  %3111 = vmatprep.subr.mxu0 %v2905
  %3112 = vmatpush1.msra.mxu0 %v2904
  %3113 = vmatprep.mubr.f32.mxu0 %v2753
  %3114 = vmatmul.mubr.f32.gmra.mrb[0].mxu0 %v2752
  %v3115 = vpop.f32.mrb[0].mxu0
  %v3116 = vadd.f32 0.0, %v3115
  %v3117 = vpop.f32.mrb[0].mxu0
  %v3118 = vadd.f32 0.0, %v3117
  %3119 = vmatprep.mubr.f32.mxu0 %v2755
  %3120 = vmatmul.mubr.f32.gmra.mrb[0].mxu0 %v2754
  %v3121 = vpop.f32.mrb[0].mxu0
  %v3122 = vadd.f32 0.0, %v3121
  %v3123 = vpop.f32.mrb[0].mxu0
  %v3124 = vadd.f32 0.0, %v3123
  %3125 = vmatprep.mubr.f32.mxu0 %v2757
  %3126 = vmatmul.mubr.f32.gmra.mrb[0].mxu0 %v2756
  %v3127 = vpop.f32.mrb[0].mxu0
  %v3128 = vadd.f32 0.0, %v3127
  %v3129 = vpop.f32.mrb[0].mxu0
  %v3130 = vadd.f32 0.0, %v3129
  %3131 = vmatprep.mubr.f32.mxu0 %v2759
  %3132 = vmatmul.mubr.f32.gmra.mrb[0].mxu0 %v2758
  %v3133 = vpop.f32.mrb[0].mxu0
  %v3134 = vadd.f32 0.0, %v3133
  %v3135 = vpop.f32.mrb[0].mxu0
  %v3136 = vadd.f32 0.0, %v3135
  %3137 = vmatprep.mubr.f32.mxu0 %v2761
  %3138 = vmatmul.mubr.f32.gmra.mrb[0].mxu0 %v2760
  %v3139 = vpop.f32.mrb[0].mxu0
  %v3140 = vadd.f32 0.0, %v3139
  %v3141 = vpop.f32.mrb[0].mxu0
  %v3142 = vadd.f32 0.0, %v3141
  %3143 = vmatprep.mubr.f32.mxu0 %v2763
  %3144 = vmatmul.mubr.f32.gmra.mrb[0].mxu0 %v2762
  %v3145 = vpop.f32.mrb[0].mxu0
  %v3146 = vadd.f32 0.0, %v3145
  %v3147 = vpop.f32.mrb[0].mxu0
  %v3148 = vadd.f32 0.0, %v3147
  %3149 = vmatprep.mubr.f32.mxu0 %v2765
  %3150 = vmatmul.mubr.f32.gmra.mrb[0].mxu0 %v2764
  %v3151 = vpop.f32.mrb[0].mxu0
  %v3152 = vadd.f32 0.0, %v3151
  %v3153 = vpop.f32.mrb[0].mxu0
  %v3154 = vadd.f32 0.0, %v3153
  %3155 = vmatprep.mubr.f32.mxu0 %v2767
  %3156 = vmatmul.mubr.f32.gmra.mrb[0].mxu0 %v2766
  %v3157 = vpop.f32.mrb[0].mxu0
  %v3158 = vadd.f32 0.0, %v3157
  %v3159 = vpop.f32.mrb[0].mxu0
  %v3160 = vadd.f32 0.0, %v3159
  %3161 = vmatprep.mubr.f32.mxu0 %v2769
  %3162 = vmatmul.mubr.f32.gmra.mrb[0].mxu0 %v2768
  %v3163 = vpop.f32.mrb[0].mxu0
  %v3164 = vadd.f32 0.0, %v3163
  %v3165 = vpop.f32.mrb[0].mxu0
  %v3166 = vadd.f32 0.0, %v3165
  %3167 = vmatprep.mubr.f32.mxu0 %v2771
  %3168 = vmatmul.mubr.f32.gmra.mrb[0].mxu0 %v2770
  %v3169 = vpop.f32.mrb[0].mxu0
  %v3170 = vadd.f32 0.0, %v3169
  %v3171 = vpop.f32.mrb[0].mxu0
  %v3172 = vadd.f32 0.0, %v3171
  %3173 = vmatprep.mubr.f32.mxu0 %v2773
  %3174 = vmatmul.mubr.f32.gmra.mrb[0].mxu0 %v2772
  %v3175 = vpop.f32.mrb[0].mxu0
  %v3176 = vadd.f32 0.0, %v3175
  %v3177 = vpop.f32.mrb[0].mxu0
  %v3178 = vadd.f32 0.0, %v3177
  %3179 = vmatprep.mubr.f32.mxu0 %v2775
  %3180 = vmatmul.mubr.f32.gmra.mrb[0].mxu0 %v2774
  %v3181 = vpop.f32.mrb[0].mxu0
  %v3182 = vadd.f32 0.0, %v3181
  %v3183 = vpop.f32.mrb[0].mxu0
  %v3184 = vadd.f32 0.0, %v3183
  %3185 = vmatprep.mubr.f32.mxu0 %v2777
  %3186 = vmatmul.mubr.f32.gmra.mrb[0].mxu0 %v2776
  %v3187 = vpop.f32.mrb[0].mxu0
  %v3188 = vadd.f32 0.0, %v3187
  %v3189 = vpop.f32.mrb[0].mxu0
  %v3190 = vadd.f32 0.0, %v3189
  %3191 = vdwg.mxu0
  %v3192 = vtanh.pop %v2973
  %v3193 = vtanh.pop %v2975
  %v3194 = vtanh.pop %v3116
  %v3195 = vtanh.pop %v3118
  %v3196 = vtanh.pop %v2979
  %v3197 = vtanh.pop %v2981
  %v3198 = vtanh.pop %v3122
  %v3199 = vtanh.pop %v3124
  %v3200 = vtanh.pop %v2985
  %v3201 = vtanh.pop %v2987
  %v3202 = vtanh.pop %v3128
  %v3203 = vtanh.pop %v3130
  %v3204 = vtanh.pop %v2991
  %v3205 = vtanh.pop %v2993
  %v3206 = vtanh.pop %v3134
  %v3207 = vtanh.pop %v3136
  %v3208 = vtanh.pop %v2997
  %v3209 = vtanh.pop %v2999
  %v3210 = vtanh.pop %v3140
  %v3211 = vtanh.pop %v3142
  %v3212 = vtanh.pop %v3003
  %v3213 = vtanh.pop %v3005
  %v3214 = vtanh.pop %v3146
  %v3215 = vtanh.pop %v3148
  %v3216 = vtanh.pop %v3009
  %v3217 = vtanh.pop %v3011
  %v3218 = vtanh.pop %v3152
  %v3219 = vtanh.pop %v3154
  %v3220 = vtanh.pop %v3015
  %v3221 = vtanh.pop %v3017
  %v3222 = vtanh.pop %v3158
  %v3223 = vtanh.pop %v3160
  %v3224 = vtanh.pop %v3021
  %v3225 = vtanh.pop %v3023
  %v3226 = vtanh.pop %v3164
  %v3227 = vtanh.pop %v3166
  %v3228 = vtanh.pop %v3027
  %v3229 = vtanh.pop %v3029
  %v3230 = vtanh.pop %v3170
  %v3231 = vtanh.pop %v3172
  %v3232 = vtanh.pop %v3033
  %v3233 = vtanh.pop %v3035
  %v3234 = vtanh.pop %v3176
  %v3235 = vtanh.pop %v3178
  %v3236 = vtanh.pop %v3039
  %v3237 = vtanh.pop %v3041
  %v3238 = vtanh.pop %v3182
  %v3239 = vtanh.pop %v3184
  %v3240 = vtanh.pop %v3045
  %v3241 = vtanh.pop %v3047
  %v3242 = vtanh.pop %v3188
  %v3243 = vtanh.pop %v3190
  %3244 = vst [vmem:[%s14] sm:$0xff] %v3192
  %3245 = vst [vmem:[%s14 + $0x8] sm:$0xff] %v3193
  %3246 = vst [vmem:[%s14 + $0x10] sm:$0xff] %v3194
  %3247 = vst [vmem:[%s14 + $0x18] sm:$0xff] %v3195
  %3248 = vst [vmem:[%s14 + $0x20] sm:$0xff] %v3196
  %3249 = vst [vmem:[%s14 + $0x28] sm:$0xff] %v3197
  %3250 = vst [vmem:[%s14 + $0x30] sm:$0xff] %v3198
  %3251 = vst [vmem:[%s14 + $0x38] sm:$0xff] %v3199
  %3252 = vst [vmem:[%s14 + $0x40] sm:$0xff] %v3200
  %3253 = vst [vmem:[%s14 + $0x48] sm:$0xff] %v3201
  %3254 = vst [vmem:[%s14 + $0x50] sm:$0xff] %v3202
  %3255 = vst [vmem:[%s14 + $0x58] sm:$0xff] %v3203
  %3256 = vst [vmem:[%s14 + $0x60] sm:$0xff] %v3204
  %3257 = vst [vmem:[%s14 + $0x68] sm:$0xff] %v3205
  %3258 = vst [vmem:[%s14 + $0x70] sm:$0xff] %v3206
  %3259 = vst [vmem:[%s14 + $0x78] sm:$0xff] %v3207
  %3260 = vst [vmem:[%s14 + $0x80] sm:$0xff] %v3208
  %3261 = vst [vmem:[%s14 + $0x88] sm:$0xff] %v3209
  %3262 = vst [vmem:[%s14 + $0x90] sm:$0xff] %v3210
  %3263 = vst [vmem:[%s14 + $0x98] sm:$0xff] %v3211
  %3264 = vst [vmem:[%s14 + $0xa0] sm:$0xff] %v3212
  %3265 = vst [vmem:[%s14 + $0xa8] sm:$0xff] %v3213
  %3266 = vst [vmem:[%s14 + $0xb0] sm:$0xff] %v3214
  %3267 = vst [vmem:[%s14 + $0xb8] sm:$0xff] %v3215
  %3268 = vst [vmem:[%s14 + $0xc0] sm:$0xff] %v3216
  %3269 = vst [vmem:[%s14 + $0xc8] sm:$0xff] %v3217
  %3270 = vst [vmem:[%s14 + $0xd0] sm:$0xff] %v3218
  %3271 = vst [vmem:[%s14 + $0xd8] sm:$0xff] %v3219
  %3272 = vst [vmem:[%s14 + $0xe0] sm:$0xff] %v3220
  %3273 = vst [vmem:[%s14 + $0xe8] sm:$0xff] %v3221
  %3274 = vst [vmem:[%s14 + $0xf0] sm:$0xff] %v3222
  %3275 = vst [vmem:[%s14 + $0xf8] sm:$0xff] %v3223
  %3276 = vst [vmem:[%s14 + $0x100] sm:$0xff] %v3224
  %3277 = vst [vmem:[%s14 + $0x108] sm:$0xff] %v3225
  %3278 = vst [vmem:[%s14 + $0x110] sm:$0xff] %v3226
  %3279 = vst [vmem:[%s14 + $0x118] sm:$0xff] %v3227
  %3280 = vst [vmem:[%s14 + $0x120] sm:$0xff] %v3228
  %3281 = vst [vmem:[%s14 + $0x128] sm:$0xff] %v3229
  %3282 = vst [vmem:[%s14 + $0x130] sm:$0xff] %v3230
  %3283 = vst [vmem:[%s14 + $0x138] sm:$0xff] %v3231
  %3284 = vst [vmem:[%s14 + $0x140] sm:$0xff] %v3232
  %3285 = vst [vmem:[%s14 + $0x148] sm:$0xff] %v3233
  %3286 = vst [vmem:[%s14 + $0x150] sm:$0xff] %v3234
  %3287 = vst [vmem:[%s14 + $0x158] sm:$0xff] %v3235
  %3288 = vst [vmem:[%s14 + $0x160] sm:$0xff] %v3236
  %3289 = vst [vmem:[%s14 + $0x168] sm:$0xff] %v3237
  %3290 = vst [vmem:[%s14 + $0x170] sm:$0xff] %v3238
  %3291 = vst [vmem:[%s14 + $0x178] sm:$0xff] %v3239
  %3292 = vst [vmem:[%s14 + $0x180] sm:$0x3] %v3240
  %3293 = vst [vmem:[%s14 + $0x188] sm:$0x3] %v3241
  %3294 = vst [vmem:[%s14 + $0x190] sm:$0x3] %v3242
  %3295 = vst [vmem:[%s14 + $0x198] sm:$0x3] %v3243
  // Predicated region
  $region58: #{gen_simple_forward.1} parent=0 // pred_check
    _
  $region59: #{gen_simple_forward.1} parent=0 // pred_check_branch
    %3297 = sbr.rel (0) target = $region61
  $region60: #{gen_simple_forward.1} parent=0 // pred_region
    _
  $region61: #{gen_simple_forward.1} parent=0 // pred_fallthru
    _
  // Predicated region
  $region62: #{gen_simple_forward.1} parent=0 // pred_check
    _
  $region63: #{gen_simple_forward.1} parent=0 // pred_check_branch
    %3299 = sbr.rel (0) target = $region65
  $region64: #{gen_simple_forward.1} parent=0 // pred_region
    _
  $region65: #{gen_simple_forward.1} parent=0 // pred_fallthru
    _

</llo_original>
